<compile_context>
chip_gen: v7x
topology: tpu7x:2x2x1
jax: 0.10.0
libtpu: 0.0.40
codegen_flags: <defaults>
</compile_context>

<pallas_src>
import functools

import jax
import jax.numpy as jnp
from jax.experimental import pallas as pl
from jax.experimental.pallas import tpu as pltpu


def _lstm_kernel(num_layers, hidden, seq_len, batch, x_ref, *refs):
    """Whole sequence unrolled in one kernel invocation.

    Ref layout after x_ref (S, B, In):
      w_ih_t[0..L-1] : (in_l, 4H)   pre-transposed input weights
      w_hh_t[0..L-1] : (H, 4H)      pre-transposed recurrent weights
      b[0..L-1]      : (1, 4H)      b_ih + b_hh
      w_fc           : (H, Out_pad) pre-transposed, lane-padded
      b_fc           : (1, Out_pad) lane-padded
      out_ref        : (B, Out_pad)
    """
    L, H, S, B = num_layers, hidden, seq_len, batch
    w_ih_refs = refs[0:L]
    w_hh_refs = refs[L:2 * L]
    b_refs = refs[2 * L:3 * L]
    w_fc_ref = refs[3 * L]
    b_fc_ref = refs[3 * L + 1]
    out_ref = refs[3 * L + 2]

    # Hoist weight loads and bias broadcasts above the (unrolled) time loop.
    # NOTE: at large H keep these as refs and re-read per use (vld slots have
    # slack) to avoid vreg spills; at these sizes whole-value hoisting is fine.
    w_ih = [r[...] for r in w_ih_refs]
    w_hh = [r[...] for r in w_hh_refs]
    bias = [jnp.broadcast_to(r[...], (B, 4 * H)) for r in b_refs]

    h = [jnp.zeros((B, H), jnp.float32) for _ in range(L)]
    c = [jnp.zeros((B, H), jnp.float32) for _ in range(L)]

    def gate_update(gates, c_prev):
        # Two full-(B,4H) EUP passes; 32-lane gate pieces are lane slices.
        # PyTorch gate order: input, forget, cell(g), output.
        sig = jax.nn.sigmoid(gates)
        tnh = jnp.tanh(gates)
        i_g = sig[:, 0 * H:1 * H]
        f_g = sig[:, 1 * H:2 * H]
        g_g = tnh[:, 2 * H:3 * H]
        o_g = sig[:, 3 * H:4 * H]
        c_new = f_g * c_prev + i_g * g_g
        h_new = o_g * jnp.tanh(c_new)
        return h_new, c_new

    last = h[L - 1]
    for t in range(S):  # fully unrolled: seq_len is small and static
        layer_in = x_ref[t]  # (B, In) — layer-0 input for this step
        for l in range(L):
            # Split matmuls (no per-step concat). For l == 0 the input dot has
            # no recurrent dependence; for all l the W_hh dot's h[l] operand is
            # from the previous step, so both issue off the critical path.
            gates = (jnp.dot(layer_in, w_ih[l],
                             preferred_element_type=jnp.float32)
                     + jnp.dot(h[l], w_hh[l],
                               preferred_element_type=jnp.float32)
                     + bias[l])
            h[l], c[l] = gate_update(gates, c[l])
            layer_in = h[l]
        last = layer_in

    # Fused fc(out[:, -1, :]); Out_pad is a multiple of 128 -> unmasked vst.
    out_ref[...] = (jnp.dot(last, w_fc_ref[...],
                            preferred_element_type=jnp.float32)
                    + b_fc_ref[...])


def prepare_params(params):
    """One-time weight preprocessing (kept OUT of the per-call hot path)."""
    w_ihs, w_hhs, bs, w_fc, b_fc = params
    Out, H = w_fc.shape
    Out_pad = ((Out + 127) // 128) * 128  # lane-dense output store

    w_ih_t = [jnp.transpose(w).astype(jnp.float32) for w in w_ihs]  # (in_l, 4H)
    w_hh_t = [jnp.transpose(w).astype(jnp.float32) for w in w_hhs]  # (H, 4H)
    b2d = [b.reshape(1, -1).astype(jnp.float32) for b in bs]        # (1, 4H)
    w_fc_pad = jnp.zeros((H, Out_pad), jnp.float32).at[:, :Out].set(
        jnp.transpose(w_fc).astype(jnp.float32))
    b_fc_pad = jnp.zeros((1, Out_pad), jnp.float32).at[:, :Out].set(
        b_fc.reshape(1, Out).astype(jnp.float32))
    return (w_ih_t, w_hh_t, b2d, w_fc_pad, b_fc_pad)


def multilayer_lstm_forward(x, prepped, output_size):
    """x: (batch, input_size, seq_len) f32 -> (batch, output_size) f32."""
    w_ih_t, w_hh_t, b2d, w_fc_pad, b_fc_pad = prepped
    B, _, S = x.shape
    L = len(w_ih_t)
    H = w_hh_t[0].shape[0]
    Out_pad = w_fc_pad.shape[1]

    # x.permute(0, 2, 1) then seq-major for the in-kernel time loop (tiny op;
    # the projection matmul itself happens inside the kernel).
    x_sbi = jnp.transpose(x, (2, 0, 1)).astype(jnp.float32)  # (S, B, In)

    inputs = [x_sbi, *w_ih_t, *w_hh_t, *b2d, w_fc_pad, b_fc_pad]

    # VMEM guardrail: everything is whole-array resident (no grid). Stream x
    # over a time-chunked grid before S/B/H outgrow v7x's 32 MiB scoped VMEM.
    vmem_bytes = sum(int(a.size) * a.dtype.itemsize for a in inputs)
    vmem_bytes += B * Out_pad * 4
    assert vmem_bytes < 24 * 1024 * 1024, "activations/weights too large for whole-array VMEM residency"

    vmem_spec = pl.BlockSpec(memory_space=pltpu.MemorySpace.VMEM)
    kernel = functools.partial(_lstm_kernel, L, H, S, B)
    out_pad = pl.pallas_call(
        kernel,
        out_shape=jax.ShapeDtypeStruct((B, Out_pad), jnp.float32),
        in_specs=[vmem_spec] * len(inputs),
        out_specs=vmem_spec,
    )(*inputs)
    return out_pad[:, :output_size]


def init_params(key, input_size, hidden_size, num_layers, output_size):
    """Deterministic synthetic init mirroring PyTorch parameter shapes.

    LSTM layer l: W_ih (4H, in_l), W_hh (4H, H), b_ih + b_hh folded into (1, 4H).
    Linear: W (Out, H), b (1, Out).
    """
    k = 1.0 / jnp.sqrt(jnp.float32(hidden_size))
    w_ihs, w_hhs, bs = [], [], []
    for l in range(num_layers):
        in_l = input_size if l == 0 else hidden_size
        key, k1, k2, k3, k4 = jax.random.split(key, 5)
        w_ihs.append(jax.random.uniform(k1, (4 * hidden_size, in_l),
                                        jnp.float32, -k, k))
        w_hhs.append(jax.random.uniform(k2, (4 * hidden_size, hidden_size),
                                        jnp.float32, -k, k))
        b_ih = jax.random.uniform(k3, (4 * hidden_size,), jnp.float32, -k, k)
        b_hh = jax.random.uniform(k4, (4 * hidden_size,), jnp.float32, -k, k)
        bs.append((b_ih + b_hh).reshape(1, 4 * hidden_size))
    key, k5, k6 = jax.random.split(key, 3)
    kf = 1.0 / jnp.sqrt(jnp.float32(hidden_size))
    w_fc = jax.random.uniform(k5, (output_size, hidden_size), jnp.float32, -kf, kf)
    b_fc = jax.random.uniform(k6, (output_size,), jnp.float32, -kf, kf).reshape(1, -1)
    return w_ihs, w_hhs, bs, w_fc, b_fc


def ref_forward(x, params):
    """Pure-JAX reference matching PyTorch nn.LSTM + nn.Linear semantics."""
    w_ihs, w_hhs, bs, w_fc, b_fc = params
    B, _, S = x.shape
    L = len(w_ihs)
    H = w_hhs[0].shape[1]
    xt = jnp.transpose(x, (0, 2, 1))  # (B, S, In)
    h = [jnp.zeros((B, H), jnp.float32) for _ in range(L)]
    c = [jnp.zeros((B, H), jnp.float32) for _ in range(L)]
    last = None
    for t in range(S):
        inp = xt[:, t, :]
        for l in range(L):
            gates = inp @ w_ihs[l].T + h[l] @ w_hhs[l].T + bs[l]
            i_g = jax.nn.sigmoid(gates[:, :H])
            f_g = jax.nn.sigmoid(gates[:, H:2 * H])
            g_g = jnp.tanh(gates[:, 2 * H:3 * H])
            o_g = jax.nn.sigmoid(gates[:, 3 * H:])
            c[l] = f_g * c[l] + i_g * g_g
            h[l] = o_g * jnp.tanh(c[l])
            inp = h[l]
        last = inp
    return last @ w_fc.T + b_fc


if __name__ == "__main__":
    batch = 2
    input_size = 8
    seq_len = 8
    hidden_size = 32
    num_layers = 2
    output_size = 10

    key = jax.random.PRNGKey(0)
    key, kx = jax.random.split(key)
    # Same layout as the PyTorch forward input: (batch, input_size, seq_len)
    x = jax.random.normal(kx, (batch, input_size, seq_len), dtype=jnp.float32)
    params = init_params(key, input_size, hidden_size, num_layers, output_size)

    prepped = prepare_params(params)  # once, outside the hot path
    fwd = jax.jit(multilayer_lstm_forward, static_argnums=(2,))

    out = fwd(x, prepped, output_size)
    out = jax.block_until_ready(out)

    expected = ref_forward(x, params)
    assert out.shape == (batch, output_size)
    assert jnp.allclose(out, expected, atol=1e-4, rtol=1e-4), (
        f"mismatch: max abs err = {jnp.max(jnp.abs(out - expected))}")

    print("KERNEL_OK")
</pallas_src>

<mosaic_0001>
module attributes {stable_mosaic.version = 11 : i64} {
  func.func @_lstm_kernel(%arg0: memref<8x2x8xf32, #tpu.memory_space<vmem>>, %arg1: memref<8x128xf32, #tpu.memory_space<vmem>>, %arg2: memref<32x128xf32, #tpu.memory_space<vmem>>, %arg3: memref<32x128xf32, #tpu.memory_space<vmem>>, %arg4: memref<32x128xf32, #tpu.memory_space<vmem>>, %arg5: memref<1x128xf32, #tpu.memory_space<vmem>>, %arg6: memref<1x128xf32, #tpu.memory_space<vmem>>, %arg7: memref<32x128xf32, #tpu.memory_space<vmem>>, %arg8: memref<1x128xf32, #tpu.memory_space<vmem>>, %arg9: memref<2x128xf32, #tpu.memory_space<vmem>>) attributes {dimension_semantics = [], scalar_prefetch = 0 : i64, scratch_operands = 0 : i64, tpu.core_type = #tpu.core_type<tc>} {
    %c0 = arith.constant 0 : index
    %c0_0 = arith.constant 0 : index
    %0 = vector.load %arg1[%c0, %c0_0] : memref<8x128xf32, #tpu.memory_space<vmem>>, vector<8x128xf32>
    %c0_1 = arith.constant 0 : index
    %c0_2 = arith.constant 0 : index
    %1 = vector.load %arg2[%c0_1, %c0_2] : memref<32x128xf32, #tpu.memory_space<vmem>>, vector<32x128xf32>
    %c0_3 = arith.constant 0 : index
    %c0_4 = arith.constant 0 : index
    %2 = vector.load %arg3[%c0_3, %c0_4] : memref<32x128xf32, #tpu.memory_space<vmem>>, vector<32x128xf32>
    %c0_5 = arith.constant 0 : index
    %c0_6 = arith.constant 0 : index
    %3 = vector.load %arg4[%c0_5, %c0_6] : memref<32x128xf32, #tpu.memory_space<vmem>>, vector<32x128xf32>
    %c0_7 = arith.constant 0 : index
    %c0_8 = arith.constant 0 : index
    %4 = vector.load %arg5[%c0_7, %c0_8] : memref<1x128xf32, #tpu.memory_space<vmem>>, vector<1x128xf32>
    %5 = vector.shape_cast %4 : vector<1x128xf32> to vector<1x128xf32>
    %6 = vector.broadcast %5 : vector<1x128xf32> to vector<2x128xf32>
    %c0_9 = arith.constant 0 : index
    %c0_10 = arith.constant 0 : index
    %7 = vector.load %arg6[%c0_9, %c0_10] : memref<1x128xf32, #tpu.memory_space<vmem>>, vector<1x128xf32>
    %8 = vector.shape_cast %7 : vector<1x128xf32> to vector<1x128xf32>
    %9 = vector.broadcast %8 : vector<1x128xf32> to vector<2x128xf32>
    %cst = arith.constant 0.000000e+00 : f32
    %10 = vector.broadcast %cst : f32 to vector<2x32xf32>
    %cst_11 = arith.constant 0.000000e+00 : f32
    %11 = vector.broadcast %cst_11 : f32 to vector<2x32xf32>
    %cst_12 = arith.constant 0.000000e+00 : f32
    %12 = vector.broadcast %cst_12 : f32 to vector<2x32xf32>
    %cst_13 = arith.constant 0.000000e+00 : f32
    %13 = vector.broadcast %cst_13 : f32 to vector<2x32xf32>
    %c0_14 = arith.constant 0 : index
    %c0_15 = arith.constant 0 : index
    %c0_16 = arith.constant 0 : index
    %14 = vector.load %arg0[%c0_14, %c0_15, %c0_16] : memref<8x2x8xf32, #tpu.memory_space<vmem>>, vector<1x2x8xf32>
    %15 = vector.shape_cast %14 : vector<1x2x8xf32> to vector<2x8xf32>
    %cst_17 = arith.constant dense<0.000000e+00> : vector<2x128xf32>
    %16 = tpu.matmul %15, %0, %cst_17 {dimension_numbers = #tpu.dot_dimension_numbers<[1], [0], [0], [1], [0, 0, 1, 1], [], []>} : vector<2x8xf32>, vector<8x128xf32>, vector<2x128xf32> -> vector<2x128xf32>
    %cst_18 = arith.constant dense<0.000000e+00> : vector<2x128xf32>
    %17 = tpu.matmul %10, %2, %cst_18 {dimension_numbers = #tpu.dot_dimension_numbers<[1], [0], [0], [1], [0, 0, 1, 1], [], []>} : vector<2x32xf32>, vector<32x128xf32>, vector<2x128xf32> -> vector<2x128xf32>
    %18 = arith.addf %16, %17 : vector<2x128xf32>
    %19 = arith.addf %18, %6 : vector<2x128xf32>
    %20 = arith.negf %19 : vector<2x128xf32>
    %21 = math.exp %20 : vector<2x128xf32>
    %cst_19 = arith.constant 1.000000e+00 : f32
    %22 = vector.broadcast %cst_19 : f32 to vector<2x128xf32>
    %23 = arith.addf %22, %21 : vector<2x128xf32>
    %24 = arith.divf %22, %23 : vector<2x128xf32>
    %25 = math.tanh %19 : vector<2x128xf32>
    %26 = vector.extract_strided_slice %24 {offsets = [0, 0], sizes = [2, 32], strides = [1, 1]} : vector<2x128xf32> to vector<2x32xf32>
    %27 = vector.extract_strided_slice %24 {offsets = [0, 32], sizes = [2, 32], strides = [1, 1]} : vector<2x128xf32> to vector<2x32xf32>
    %28 = vector.extract_strided_slice %25 {offsets = [0, 64], sizes = [2, 32], strides = [1, 1]} : vector<2x128xf32> to vector<2x32xf32>
    %29 = vector.extract_strided_slice %24 {offsets = [0, 96], sizes = [2, 32], strides = [1, 1]} : vector<2x128xf32> to vector<2x32xf32>
    %30 = arith.mulf %27, %12 : vector<2x32xf32>
    %31 = arith.mulf %26, %28 : vector<2x32xf32>
    %32 = arith.addf %30, %31 : vector<2x32xf32>
    %33 = math.tanh %32 : vector<2x32xf32>
    %34 = arith.mulf %29, %33 : vector<2x32xf32>
    %cst_20 = arith.constant dense<0.000000e+00> : vector<2x128xf32>
    %35 = tpu.matmul %34, %1, %cst_20 {dimension_numbers = #tpu.dot_dimension_numbers<[1], [0], [0], [1], [0, 0, 1, 1], [], []>} : vector<2x32xf32>, vector<32x128xf32>, vector<2x128xf32> -> vector<2x128xf32>
    %cst_21 = arith.constant dense<0.000000e+00> : vector<2x128xf32>
    %36 = tpu.matmul %11, %3, %cst_21 {dimension_numbers = #tpu.dot_dimension_numbers<[1], [0], [0], [1], [0, 0, 1, 1], [], []>} : vector<2x32xf32>, vector<32x128xf32>, vector<2x128xf32> -> vector<2x128xf32>
    %37 = arith.addf %35, %36 : vector<2x128xf32>
    %38 = arith.addf %37, %9 : vector<2x128xf32>
    %39 = arith.negf %38 : vector<2x128xf32>
    %40 = math.exp %39 : vector<2x128xf32>
    %cst_22 = arith.constant 1.000000e+00 : f32
    %41 = vector.broadcast %cst_22 : f32 to vector<2x128xf32>
    %42 = arith.addf %41, %40 : vector<2x128xf32>
    %43 = arith.divf %41, %42 : vector<2x128xf32>
    %44 = math.tanh %38 : vector<2x128xf32>
    %45 = vector.extract_strided_slice %43 {offsets = [0, 0], sizes = [2, 32], strides = [1, 1]} : vector<2x128xf32> to vector<2x32xf32>
    %46 = vector.extract_strided_slice %43 {offsets = [0, 32], sizes = [2, 32], strides = [1, 1]} : vector<2x128xf32> to vector<2x32xf32>
    %47 = vector.extract_strided_slice %44 {offsets = [0, 64], sizes = [2, 32], strides = [1, 1]} : vector<2x128xf32> to vector<2x32xf32>
    %48 = vector.extract_strided_slice %43 {offsets = [0, 96], sizes = [2, 32], strides = [1, 1]} : vector<2x128xf32> to vector<2x32xf32>
    %49 = arith.mulf %46, %13 : vector<2x32xf32>
    %50 = arith.mulf %45, %47 : vector<2x32xf32>
    %51 = arith.addf %49, %50 : vector<2x32xf32>
    %52 = math.tanh %51 : vector<2x32xf32>
    %53 = arith.mulf %48, %52 : vector<2x32xf32>
    %c1 = arith.constant 1 : index
    %c0_23 = arith.constant 0 : index
    %c0_24 = arith.constant 0 : index
    %54 = vector.load %arg0[%c1, %c0_23, %c0_24] : memref<8x2x8xf32, #tpu.memory_space<vmem>>, vector<1x2x8xf32>
    %55 = vector.shape_cast %54 : vector<1x2x8xf32> to vector<2x8xf32>
    %cst_25 = arith.constant dense<0.000000e+00> : vector<2x128xf32>
    %56 = tpu.matmul %55, %0, %cst_25 {dimension_numbers = #tpu.dot_dimension_numbers<[1], [0], [0], [1], [0, 0, 1, 1], [], []>} : vector<2x8xf32>, vector<8x128xf32>, vector<2x128xf32> -> vector<2x128xf32>
    %cst_26 = arith.constant dense<0.000000e+00> : vector<2x128xf32>
    %57 = tpu.matmul %34, %2, %cst_26 {dimension_numbers = #tpu.dot_dimension_numbers<[1], [0], [0], [1], [0, 0, 1, 1], [], []>} : vector<2x32xf32>, vector<32x128xf32>, vector<2x128xf32> -> vector<2x128xf32>
    %58 = arith.addf %56, %57 : vector<2x128xf32>
    %59 = arith.addf %58, %6 : vector<2x128xf32>
    %60 = arith.negf %59 : vector<2x128xf32>
    %61 = math.exp %60 : vector<2x128xf32>
    %cst_27 = arith.constant 1.000000e+00 : f32
    %62 = vector.broadcast %cst_27 : f32 to vector<2x128xf32>
    %63 = arith.addf %62, %61 : vector<2x128xf32>
    %64 = arith.divf %62, %63 : vector<2x128xf32>
    %65 = math.tanh %59 : vector<2x128xf32>
    %66 = vector.extract_strided_slice %64 {offsets = [0, 0], sizes = [2, 32], strides = [1, 1]} : vector<2x128xf32> to vector<2x32xf32>
    %67 = vector.extract_strided_slice %64 {offsets = [0, 32], sizes = [2, 32], strides = [1, 1]} : vector<2x128xf32> to vector<2x32xf32>
    %68 = vector.extract_strided_slice %65 {offsets = [0, 64], sizes = [2, 32], strides = [1, 1]} : vector<2x128xf32> to vector<2x32xf32>
    %69 = vector.extract_strided_slice %64 {offsets = [0, 96], sizes = [2, 32], strides = [1, 1]} : vector<2x128xf32> to vector<2x32xf32>
    %70 = arith.mulf %67, %32 : vector<2x32xf32>
    %71 = arith.mulf %66, %68 : vector<2x32xf32>
    %72 = arith.addf %70, %71 : vector<2x32xf32>
    %73 = math.tanh %72 : vector<2x32xf32>
    %74 = arith.mulf %69, %73 : vector<2x32xf32>
    %cst_28 = arith.constant dense<0.000000e+00> : vector<2x128xf32>
    %75 = tpu.matmul %74, %1, %cst_28 {dimension_numbers = #tpu.dot_dimension_numbers<[1], [0], [0], [1], [0, 0, 1, 1], [], []>} : vector<2x32xf32>, vector<32x128xf32>, vector<2x128xf32> -> vector<2x128xf32>
    %cst_29 = arith.constant dense<0.000000e+00> : vector<2x128xf32>
    %76 = tpu.matmul %53, %3, %cst_29 {dimension_numbers = #tpu.dot_dimension_numbers<[1], [0], [0], [1], [0, 0, 1, 1], [], []>} : vector<2x32xf32>, vector<32x128xf32>, vector<2x128xf32> -> vector<2x128xf32>
    %77 = arith.addf %75, %76 : vector<2x128xf32>
    %78 = arith.addf %77, %9 : vector<2x128xf32>
    %79 = arith.negf %78 : vector<2x128xf32>
    %80 = math.exp %79 : vector<2x128xf32>
    %cst_30 = arith.constant 1.000000e+00 : f32
    %81 = vector.broadcast %cst_30 : f32 to vector<2x128xf32>
    %82 = arith.addf %81, %80 : vector<2x128xf32>
    %83 = arith.divf %81, %82 : vector<2x128xf32>
    %84 = math.tanh %78 : vector<2x128xf32>
    %85 = vector.extract_strided_slice %83 {offsets = [0, 0], sizes = [2, 32], strides = [1, 1]} : vector<2x128xf32> to vector<2x32xf32>
    %86 = vector.extract_strided_slice %83 {offsets = [0, 32], sizes = [2, 32], strides = [1, 1]} : vector<2x128xf32> to vector<2x32xf32>
    %87 = vector.extract_strided_slice %84 {offsets = [0, 64], sizes = [2, 32], strides = [1, 1]} : vector<2x128xf32> to vector<2x32xf32>
    %88 = vector.extract_strided_slice %83 {offsets = [0, 96], sizes = [2, 32], strides = [1, 1]} : vector<2x128xf32> to vector<2x32xf32>
    %89 = arith.mulf %86, %51 : vector<2x32xf32>
    %90 = arith.mulf %85, %87 : vector<2x32xf32>
    %91 = arith.addf %89, %90 : vector<2x32xf32>
    %92 = math.tanh %91 : vector<2x32xf32>
    %93 = arith.mulf %88, %92 : vector<2x32xf32>
    %c2 = arith.constant 2 : index
    %c0_31 = arith.constant 0 : index
    %c0_32 = arith.constant 0 : index
    %94 = vector.load %arg0[%c2, %c0_31, %c0_32] : memref<8x2x8xf32, #tpu.memory_space<vmem>>, vector<1x2x8xf32>
    %95 = vector.shape_cast %94 : vector<1x2x8xf32> to vector<2x8xf32>
    %cst_33 = arith.constant dense<0.000000e+00> : vector<2x128xf32>
    %96 = tpu.matmul %95, %0, %cst_33 {dimension_numbers = #tpu.dot_dimension_numbers<[1], [0], [0], [1], [0, 0, 1, 1], [], []>} : vector<2x8xf32>, vector<8x128xf32>, vector<2x128xf32> -> vector<2x128xf32>
    %cst_34 = arith.constant dense<0.000000e+00> : vector<2x128xf32>
    %97 = tpu.matmul %74, %2, %cst_34 {dimension_numbers = #tpu.dot_dimension_numbers<[1], [0], [0], [1], [0, 0, 1, 1], [], []>} : vector<2x32xf32>, vector<32x128xf32>, vector<2x128xf32> -> vector<2x128xf32>
    %98 = arith.addf %96, %97 : vector<2x128xf32>
    %99 = arith.addf %98, %6 : vector<2x128xf32>
    %100 = arith.negf %99 : vector<2x128xf32>
    %101 = math.exp %100 : vector<2x128xf32>
    %cst_35 = arith.constant 1.000000e+00 : f32
    %102 = vector.broadcast %cst_35 : f32 to vector<2x128xf32>
    %103 = arith.addf %102, %101 : vector<2x128xf32>
    %104 = arith.divf %102, %103 : vector<2x128xf32>
    %105 = math.tanh %99 : vector<2x128xf32>
    %106 = vector.extract_strided_slice %104 {offsets = [0, 0], sizes = [2, 32], strides = [1, 1]} : vector<2x128xf32> to vector<2x32xf32>
    %107 = vector.extract_strided_slice %104 {offsets = [0, 32], sizes = [2, 32], strides = [1, 1]} : vector<2x128xf32> to vector<2x32xf32>
    %108 = vector.extract_strided_slice %105 {offsets = [0, 64], sizes = [2, 32], strides = [1, 1]} : vector<2x128xf32> to vector<2x32xf32>
    %109 = vector.extract_strided_slice %104 {offsets = [0, 96], sizes = [2, 32], strides = [1, 1]} : vector<2x128xf32> to vector<2x32xf32>
    %110 = arith.mulf %107, %72 : vector<2x32xf32>
    %111 = arith.mulf %106, %108 : vector<2x32xf32>
    %112 = arith.addf %110, %111 : vector<2x32xf32>
    %113 = math.tanh %112 : vector<2x32xf32>
    %114 = arith.mulf %109, %113 : vector<2x32xf32>
    %cst_36 = arith.constant dense<0.000000e+00> : vector<2x128xf32>
    %115 = tpu.matmul %114, %1, %cst_36 {dimension_numbers = #tpu.dot_dimension_numbers<[1], [0], [0], [1], [0, 0, 1, 1], [], []>} : vector<2x32xf32>, vector<32x128xf32>, vector<2x128xf32> -> vector<2x128xf32>
    %cst_37 = arith.constant dense<0.000000e+00> : vector<2x128xf32>
    %116 = tpu.matmul %93, %3, %cst_37 {dimension_numbers = #tpu.dot_dimension_numbers<[1], [0], [0], [1], [0, 0, 1, 1], [], []>} : vector<2x32xf32>, vector<32x128xf32>, vector<2x128xf32> -> vector<2x128xf32>
    %117 = arith.addf %115, %116 : vector<2x128xf32>
    %118 = arith.addf %117, %9 : vector<2x128xf32>
    %119 = arith.negf %118 : vector<2x128xf32>
    %120 = math.exp %119 : vector<2x128xf32>
    %cst_38 = arith.constant 1.000000e+00 : f32
    %121 = vector.broadcast %cst_38 : f32 to vector<2x128xf32>
    %122 = arith.addf %121, %120 : vector<2x128xf32>
    %123 = arith.divf %121, %122 : vector<2x128xf32>
    %124 = math.tanh %118 : vector<2x128xf32>
    %125 = vector.extract_strided_slice %123 {offsets = [0, 0], sizes = [2, 32], strides = [1, 1]} : vector<2x128xf32> to vector<2x32xf32>
    %126 = vector.extract_strided_slice %123 {offsets = [0, 32], sizes = [2, 32], strides = [1, 1]} : vector<2x128xf32> to vector<2x32xf32>
    %127 = vector.extract_strided_slice %124 {offsets = [0, 64], sizes = [2, 32], strides = [1, 1]} : vector<2x128xf32> to vector<2x32xf32>
    %128 = vector.extract_strided_slice %123 {offsets = [0, 96], sizes = [2, 32], strides = [1, 1]} : vector<2x128xf32> to vector<2x32xf32>
    %129 = arith.mulf %126, %91 : vector<2x32xf32>
    %130 = arith.mulf %125, %127 : vector<2x32xf32>
    %131 = arith.addf %129, %130 : vector<2x32xf32>
    %132 = math.tanh %131 : vector<2x32xf32>
    %133 = arith.mulf %128, %132 : vector<2x32xf32>
    %c3 = arith.constant 3 : index
    %c0_39 = arith.constant 0 : index
    %c0_40 = arith.constant 0 : index
    %134 = vector.load %arg0[%c3, %c0_39, %c0_40] : memref<8x2x8xf32, #tpu.memory_space<vmem>>, vector<1x2x8xf32>
    %135 = vector.shape_cast %134 : vector<1x2x8xf32> to vector<2x8xf32>
    %cst_41 = arith.constant dense<0.000000e+00> : vector<2x128xf32>
    %136 = tpu.matmul %135, %0, %cst_41 {dimension_numbers = #tpu.dot_dimension_numbers<[1], [0], [0], [1], [0, 0, 1, 1], [], []>} : vector<2x8xf32>, vector<8x128xf32>, vector<2x128xf32> -> vector<2x128xf32>
    %cst_42 = arith.constant dense<0.000000e+00> : vector<2x128xf32>
    %137 = tpu.matmul %114, %2, %cst_42 {dimension_numbers = #tpu.dot_dimension_numbers<[1], [0], [0], [1], [0, 0, 1, 1], [], []>} : vector<2x32xf32>, vector<32x128xf32>, vector<2x128xf32> -> vector<2x128xf32>
    %138 = arith.addf %136, %137 : vector<2x128xf32>
    %139 = arith.addf %138, %6 : vector<2x128xf32>
    %140 = arith.negf %139 : vector<2x128xf32>
    %141 = math.exp %140 : vector<2x128xf32>
    %cst_43 = arith.constant 1.000000e+00 : f32
    %142 = vector.broadcast %cst_43 : f32 to vector<2x128xf32>
    %143 = arith.addf %142, %141 : vector<2x128xf32>
    %144 = arith.divf %142, %143 : vector<2x128xf32>
    %145 = math.tanh %139 : vector<2x128xf32>
    %146 = vector.extract_strided_slice %144 {offsets = [0, 0], sizes = [2, 32], strides = [1, 1]} : vector<2x128xf32> to vector<2x32xf32>
    %147 = vector.extract_strided_slice %144 {offsets = [0, 32], sizes = [2, 32], strides = [1, 1]} : vector<2x128xf32> to vector<2x32xf32>
    %148 = vector.extract_strided_slice %145 {offsets = [0, 64], sizes = [2, 32], strides = [1, 1]} : vector<2x128xf32> to vector<2x32xf32>
    %149 = vector.extract_strided_slice %144 {offsets = [0, 96], sizes = [2, 32], strides = [1, 1]} : vector<2x128xf32> to vector<2x32xf32>
    %150 = arith.mulf %147, %112 : vector<2x32xf32>
    %151 = arith.mulf %146, %148 : vector<2x32xf32>
    %152 = arith.addf %150, %151 : vector<2x32xf32>
    %153 = math.tanh %152 : vector<2x32xf32>
    %154 = arith.mulf %149, %153 : vector<2x32xf32>
    %cst_44 = arith.constant dense<0.000000e+00> : vector<2x128xf32>
    %155 = tpu.matmul %154, %1, %cst_44 {dimension_numbers = #tpu.dot_dimension_numbers<[1], [0], [0], [1], [0, 0, 1, 1], [], []>} : vector<2x32xf32>, vector<32x128xf32>, vector<2x128xf32> -> vector<2x128xf32>
    %cst_45 = arith.constant dense<0.000000e+00> : vector<2x128xf32>
    %156 = tpu.matmul %133, %3, %cst_45 {dimension_numbers = #tpu.dot_dimension_numbers<[1], [0], [0], [1], [0, 0, 1, 1], [], []>} : vector<2x32xf32>, vector<32x128xf32>, vector<2x128xf32> -> vector<2x128xf32>
    %157 = arith.addf %155, %156 : vector<2x128xf32>
    %158 = arith.addf %157, %9 : vector<2x128xf32>
    %159 = arith.negf %158 : vector<2x128xf32>
    %160 = math.exp %159 : vector<2x128xf32>
    %cst_46 = arith.constant 1.000000e+00 : f32
    %161 = vector.broadcast %cst_46 : f32 to vector<2x128xf32>
    %162 = arith.addf %161, %160 : vector<2x128xf32>
    %163 = arith.divf %161, %162 : vector<2x128xf32>
    %164 = math.tanh %158 : vector<2x128xf32>
    %165 = vector.extract_strided_slice %163 {offsets = [0, 0], sizes = [2, 32], strides = [1, 1]} : vector<2x128xf32> to vector<2x32xf32>
    %166 = vector.extract_strided_slice %163 {offsets = [0, 32], sizes = [2, 32], strides = [1, 1]} : vector<2x128xf32> to vector<2x32xf32>
    %167 = vector.extract_strided_slice %164 {offsets = [0, 64], sizes = [2, 32], strides = [1, 1]} : vector<2x128xf32> to vector<2x32xf32>
    %168 = vector.extract_strided_slice %163 {offsets = [0, 96], sizes = [2, 32], strides = [1, 1]} : vector<2x128xf32> to vector<2x32xf32>
    %169 = arith.mulf %166, %131 : vector<2x32xf32>
    %170 = arith.mulf %165, %167 : vector<2x32xf32>
    %171 = arith.addf %169, %170 : vector<2x32xf32>
    %172 = math.tanh %171 : vector<2x32xf32>
    %173 = arith.mulf %168, %172 : vector<2x32xf32>
    %c4 = arith.constant 4 : index
    %c0_47 = arith.constant 0 : index
    %c0_48 = arith.constant 0 : index
    %174 = vector.load %arg0[%c4, %c0_47, %c0_48] : memref<8x2x8xf32, #tpu.memory_space<vmem>>, vector<1x2x8xf32>
    %175 = vector.shape_cast %174 : vector<1x2x8xf32> to vector<2x8xf32>
    %cst_49 = arith.constant dense<0.000000e+00> : vector<2x128xf32>
    %176 = tpu.matmul %175, %0, %cst_49 {dimension_numbers = #tpu.dot_dimension_numbers<[1], [0], [0], [1], [0, 0, 1, 1], [], []>} : vector<2x8xf32>, vector<8x128xf32>, vector<2x128xf32> -> vector<2x128xf32>
    %cst_50 = arith.constant dense<0.000000e+00> : vector<2x128xf32>
    %177 = tpu.matmul %154, %2, %cst_50 {dimension_numbers = #tpu.dot_dimension_numbers<[1], [0], [0], [1], [0, 0, 1, 1], [], []>} : vector<2x32xf32>, vector<32x128xf32>, vector<2x128xf32> -> vector<2x128xf32>
    %178 = arith.addf %176, %177 : vector<2x128xf32>
    %179 = arith.addf %178, %6 : vector<2x128xf32>
    %180 = arith.negf %179 : vector<2x128xf32>
    %181 = math.exp %180 : vector<2x128xf32>
    %cst_51 = arith.constant 1.000000e+00 : f32
    %182 = vector.broadcast %cst_51 : f32 to vector<2x128xf32>
    %183 = arith.addf %182, %181 : vector<2x128xf32>
    %184 = arith.divf %182, %183 : vector<2x128xf32>
    %185 = math.tanh %179 : vector<2x128xf32>
    %186 = vector.extract_strided_slice %184 {offsets = [0, 0], sizes = [2, 32], strides = [1, 1]} : vector<2x128xf32> to vector<2x32xf32>
    %187 = vector.extract_strided_slice %184 {offsets = [0, 32], sizes = [2, 32], strides = [1, 1]} : vector<2x128xf32> to vector<2x32xf32>
    %188 = vector.extract_strided_slice %185 {offsets = [0, 64], sizes = [2, 32], strides = [1, 1]} : vector<2x128xf32> to vector<2x32xf32>
    %189 = vector.extract_strided_slice %184 {offsets = [0, 96], sizes = [2, 32], strides = [1, 1]} : vector<2x128xf32> to vector<2x32xf32>
    %190 = arith.mulf %187, %152 : vector<2x32xf32>
    %191 = arith.mulf %186, %188 : vector<2x32xf32>
    %192 = arith.addf %190, %191 : vector<2x32xf32>
    %193 = math.tanh %192 : vector<2x32xf32>
    %194 = arith.mulf %189, %193 : vector<2x32xf32>
    %cst_52 = arith.constant dense<0.000000e+00> : vector<2x128xf32>
    %195 = tpu.matmul %194, %1, %cst_52 {dimension_numbers = #tpu.dot_dimension_numbers<[1], [0], [0], [1], [0, 0, 1, 1], [], []>} : vector<2x32xf32>, vector<32x128xf32>, vector<2x128xf32> -> vector<2x128xf32>
    %cst_53 = arith.constant dense<0.000000e+00> : vector<2x128xf32>
    %196 = tpu.matmul %173, %3, %cst_53 {dimension_numbers = #tpu.dot_dimension_numbers<[1], [0], [0], [1], [0, 0, 1, 1], [], []>} : vector<2x32xf32>, vector<32x128xf32>, vector<2x128xf32> -> vector<2x128xf32>
    %197 = arith.addf %195, %196 : vector<2x128xf32>
    %198 = arith.addf %197, %9 : vector<2x128xf32>
    %199 = arith.negf %198 : vector<2x128xf32>
    %200 = math.exp %199 : vector<2x128xf32>
    %cst_54 = arith.constant 1.000000e+00 : f32
    %201 = vector.broadcast %cst_54 : f32 to vector<2x128xf32>
    %202 = arith.addf %201, %200 : vector<2x128xf32>
    %203 = arith.divf %201, %202 : vector<2x128xf32>
    %204 = math.tanh %198 : vector<2x128xf32>
    %205 = vector.extract_strided_slice %203 {offsets = [0, 0], sizes = [2, 32], strides = [1, 1]} : vector<2x128xf32> to vector<2x32xf32>
    %206 = vector.extract_strided_slice %203 {offsets = [0, 32], sizes = [2, 32], strides = [1, 1]} : vector<2x128xf32> to vector<2x32xf32>
    %207 = vector.extract_strided_slice %204 {offsets = [0, 64], sizes = [2, 32], strides = [1, 1]} : vector<2x128xf32> to vector<2x32xf32>
    %208 = vector.extract_strided_slice %203 {offsets = [0, 96], sizes = [2, 32], strides = [1, 1]} : vector<2x128xf32> to vector<2x32xf32>
    %209 = arith.mulf %206, %171 : vector<2x32xf32>
    %210 = arith.mulf %205, %207 : vector<2x32xf32>
    %211 = arith.addf %209, %210 : vector<2x32xf32>
    %212 = math.tanh %211 : vector<2x32xf32>
    %213 = arith.mulf %208, %212 : vector<2x32xf32>
    %c5 = arith.constant 5 : index
    %c0_55 = arith.constant 0 : index
    %c0_56 = arith.constant 0 : index
    %214 = vector.load %arg0[%c5, %c0_55, %c0_56] : memref<8x2x8xf32, #tpu.memory_space<vmem>>, vector<1x2x8xf32>
    %215 = vector.shape_cast %214 : vector<1x2x8xf32> to vector<2x8xf32>
    %cst_57 = arith.constant dense<0.000000e+00> : vector<2x128xf32>
    %216 = tpu.matmul %215, %0, %cst_57 {dimension_numbers = #tpu.dot_dimension_numbers<[1], [0], [0], [1], [0, 0, 1, 1], [], []>} : vector<2x8xf32>, vector<8x128xf32>, vector<2x128xf32> -> vector<2x128xf32>
    %cst_58 = arith.constant dense<0.000000e+00> : vector<2x128xf32>
    %217 = tpu.matmul %194, %2, %cst_58 {dimension_numbers = #tpu.dot_dimension_numbers<[1], [0], [0], [1], [0, 0, 1, 1], [], []>} : vector<2x32xf32>, vector<32x128xf32>, vector<2x128xf32> -> vector<2x128xf32>
    %218 = arith.addf %216, %217 : vector<2x128xf32>
    %219 = arith.addf %218, %6 : vector<2x128xf32>
    %220 = arith.negf %219 : vector<2x128xf32>
    %221 = math.exp %220 : vector<2x128xf32>
    %cst_59 = arith.constant 1.000000e+00 : f32
    %222 = vector.broadcast %cst_59 : f32 to vector<2x128xf32>
    %223 = arith.addf %222, %221 : vector<2x128xf32>
    %224 = arith.divf %222, %223 : vector<2x128xf32>
    %225 = math.tanh %219 : vector<2x128xf32>
    %226 = vector.extract_strided_slice %224 {offsets = [0, 0], sizes = [2, 32], strides = [1, 1]} : vector<2x128xf32> to vector<2x32xf32>
    %227 = vector.extract_strided_slice %224 {offsets = [0, 32], sizes = [2, 32], strides = [1, 1]} : vector<2x128xf32> to vector<2x32xf32>
    %228 = vector.extract_strided_slice %225 {offsets = [0, 64], sizes = [2, 32], strides = [1, 1]} : vector<2x128xf32> to vector<2x32xf32>
    %229 = vector.extract_strided_slice %224 {offsets = [0, 96], sizes = [2, 32], strides = [1, 1]} : vector<2x128xf32> to vector<2x32xf32>
    %230 = arith.mulf %227, %192 : vector<2x32xf32>
    %231 = arith.mulf %226, %228 : vector<2x32xf32>
    %232 = arith.addf %230, %231 : vector<2x32xf32>
    %233 = math.tanh %232 : vector<2x32xf32>
    %234 = arith.mulf %229, %233 : vector<2x32xf32>
    %cst_60 = arith.constant dense<0.000000e+00> : vector<2x128xf32>
    %235 = tpu.matmul %234, %1, %cst_60 {dimension_numbers = #tpu.dot_dimension_numbers<[1], [0], [0], [1], [0, 0, 1, 1], [], []>} : vector<2x32xf32>, vector<32x128xf32>, vector<2x128xf32> -> vector<2x128xf32>
    %cst_61 = arith.constant dense<0.000000e+00> : vector<2x128xf32>
    %236 = tpu.matmul %213, %3, %cst_61 {dimension_numbers = #tpu.dot_dimension_numbers<[1], [0], [0], [1], [0, 0, 1, 1], [], []>} : vector<2x32xf32>, vector<32x128xf32>, vector<2x128xf32> -> vector<2x128xf32>
    %237 = arith.addf %235, %236 : vector<2x128xf32>
    %238 = arith.addf %237, %9 : vector<2x128xf32>
    %239 = arith.negf %238 : vector<2x128xf32>
    %240 = math.exp %239 : vector<2x128xf32>
    %cst_62 = arith.constant 1.000000e+00 : f32
    %241 = vector.broadcast %cst_62 : f32 to vector<2x128xf32>
    %242 = arith.addf %241, %240 : vector<2x128xf32>
    %243 = arith.divf %241, %242 : vector<2x128xf32>
    %244 = math.tanh %238 : vector<2x128xf32>
    %245 = vector.extract_strided_slice %243 {offsets = [0, 0], sizes = [2, 32], strides = [1, 1]} : vector<2x128xf32> to vector<2x32xf32>
    %246 = vector.extract_strided_slice %243 {offsets = [0, 32], sizes = [2, 32], strides = [1, 1]} : vector<2x128xf32> to vector<2x32xf32>
    %247 = vector.extract_strided_slice %244 {offsets = [0, 64], sizes = [2, 32], strides = [1, 1]} : vector<2x128xf32> to vector<2x32xf32>
    %248 = vector.extract_strided_slice %243 {offsets = [0, 96], sizes = [2, 32], strides = [1, 1]} : vector<2x128xf32> to vector<2x32xf32>
    %249 = arith.mulf %246, %211 : vector<2x32xf32>
    %250 = arith.mulf %245, %247 : vector<2x32xf32>
    %251 = arith.addf %249, %250 : vector<2x32xf32>
    %252 = math.tanh %251 : vector<2x32xf32>
    %253 = arith.mulf %248, %252 : vector<2x32xf32>
    %c6 = arith.constant 6 : index
    %c0_63 = arith.constant 0 : index
    %c0_64 = arith.constant 0 : index
    %254 = vector.load %arg0[%c6, %c0_63, %c0_64] : memref<8x2x8xf32, #tpu.memory_space<vmem>>, vector<1x2x8xf32>
    %255 = vector.shape_cast %254 : vector<1x2x8xf32> to vector<2x8xf32>
    %cst_65 = arith.constant dense<0.000000e+00> : vector<2x128xf32>
    %256 = tpu.matmul %255, %0, %cst_65 {dimension_numbers = #tpu.dot_dimension_numbers<[1], [0], [0], [1], [0, 0, 1, 1], [], []>} : vector<2x8xf32>, vector<8x128xf32>, vector<2x128xf32> -> vector<2x128xf32>
    %cst_66 = arith.constant dense<0.000000e+00> : vector<2x128xf32>
    %257 = tpu.matmul %234, %2, %cst_66 {dimension_numbers = #tpu.dot_dimension_numbers<[1], [0], [0], [1], [0, 0, 1, 1], [], []>} : vector<2x32xf32>, vector<32x128xf32>, vector<2x128xf32> -> vector<2x128xf32>
    %258 = arith.addf %256, %257 : vector<2x128xf32>
    %259 = arith.addf %258, %6 : vector<2x128xf32>
    %260 = arith.negf %259 : vector<2x128xf32>
    %261 = math.exp %260 : vector<2x128xf32>
    %cst_67 = arith.constant 1.000000e+00 : f32
    %262 = vector.broadcast %cst_67 : f32 to vector<2x128xf32>
    %263 = arith.addf %262, %261 : vector<2x128xf32>
    %264 = arith.divf %262, %263 : vector<2x128xf32>
    %265 = math.tanh %259 : vector<2x128xf32>
    %266 = vector.extract_strided_slice %264 {offsets = [0, 0], sizes = [2, 32], strides = [1, 1]} : vector<2x128xf32> to vector<2x32xf32>
    %267 = vector.extract_strided_slice %264 {offsets = [0, 32], sizes = [2, 32], strides = [1, 1]} : vector<2x128xf32> to vector<2x32xf32>
    %268 = vector.extract_strided_slice %265 {offsets = [0, 64], sizes = [2, 32], strides = [1, 1]} : vector<2x128xf32> to vector<2x32xf32>
    %269 = vector.extract_strided_slice %264 {offsets = [0, 96], sizes = [2, 32], strides = [1, 1]} : vector<2x128xf32> to vector<2x32xf32>
    %270 = arith.mulf %267, %232 : vector<2x32xf32>
    %271 = arith.mulf %266, %268 : vector<2x32xf32>
    %272 = arith.addf %270, %271 : vector<2x32xf32>
    %273 = math.tanh %272 : vector<2x32xf32>
    %274 = arith.mulf %269, %273 : vector<2x32xf32>
    %cst_68 = arith.constant dense<0.000000e+00> : vector<2x128xf32>
    %275 = tpu.matmul %274, %1, %cst_68 {dimension_numbers = #tpu.dot_dimension_numbers<[1], [0], [0], [1], [0, 0, 1, 1], [], []>} : vector<2x32xf32>, vector<32x128xf32>, vector<2x128xf32> -> vector<2x128xf32>
    %cst_69 = arith.constant dense<0.000000e+00> : vector<2x128xf32>
    %276 = tpu.matmul %253, %3, %cst_69 {dimension_numbers = #tpu.dot_dimension_numbers<[1], [0], [0], [1], [0, 0, 1, 1], [], []>} : vector<2x32xf32>, vector<32x128xf32>, vector<2x128xf32> -> vector<2x128xf32>
    %277 = arith.addf %275, %276 : vector<2x128xf32>
    %278 = arith.addf %277, %9 : vector<2x128xf32>
    %279 = arith.negf %278 : vector<2x128xf32>
    %280 = math.exp %279 : vector<2x128xf32>
    %cst_70 = arith.constant 1.000000e+00 : f32
    %281 = vector.broadcast %cst_70 : f32 to vector<2x128xf32>
    %282 = arith.addf %281, %280 : vector<2x128xf32>
    %283 = arith.divf %281, %282 : vector<2x128xf32>
    %284 = math.tanh %278 : vector<2x128xf32>
    %285 = vector.extract_strided_slice %283 {offsets = [0, 0], sizes = [2, 32], strides = [1, 1]} : vector<2x128xf32> to vector<2x32xf32>
    %286 = vector.extract_strided_slice %283 {offsets = [0, 32], sizes = [2, 32], strides = [1, 1]} : vector<2x128xf32> to vector<2x32xf32>
    %287 = vector.extract_strided_slice %284 {offsets = [0, 64], sizes = [2, 32], strides = [1, 1]} : vector<2x128xf32> to vector<2x32xf32>
    %288 = vector.extract_strided_slice %283 {offsets = [0, 96], sizes = [2, 32], strides = [1, 1]} : vector<2x128xf32> to vector<2x32xf32>
    %289 = arith.mulf %286, %251 : vector<2x32xf32>
    %290 = arith.mulf %285, %287 : vector<2x32xf32>
    %291 = arith.addf %289, %290 : vector<2x32xf32>
    %292 = math.tanh %291 : vector<2x32xf32>
    %293 = arith.mulf %288, %292 : vector<2x32xf32>
    %c7 = arith.constant 7 : index
    %c0_71 = arith.constant 0 : index
    %c0_72 = arith.constant 0 : index
    %294 = vector.load %arg0[%c7, %c0_71, %c0_72] : memref<8x2x8xf32, #tpu.memory_space<vmem>>, vector<1x2x8xf32>
    %295 = vector.shape_cast %294 : vector<1x2x8xf32> to vector<2x8xf32>
    %cst_73 = arith.constant dense<0.000000e+00> : vector<2x128xf32>
    %296 = tpu.matmul %295, %0, %cst_73 {dimension_numbers = #tpu.dot_dimension_numbers<[1], [0], [0], [1], [0, 0, 1, 1], [], []>} : vector<2x8xf32>, vector<8x128xf32>, vector<2x128xf32> -> vector<2x128xf32>
    %cst_74 = arith.constant dense<0.000000e+00> : vector<2x128xf32>
    %297 = tpu.matmul %274, %2, %cst_74 {dimension_numbers = #tpu.dot_dimension_numbers<[1], [0], [0], [1], [0, 0, 1, 1], [], []>} : vector<2x32xf32>, vector<32x128xf32>, vector<2x128xf32> -> vector<2x128xf32>
    %298 = arith.addf %296, %297 : vector<2x128xf32>
    %299 = arith.addf %298, %6 : vector<2x128xf32>
    %300 = arith.negf %299 : vector<2x128xf32>
    %301 = math.exp %300 : vector<2x128xf32>
    %cst_75 = arith.constant 1.000000e+00 : f32
    %302 = vector.broadcast %cst_75 : f32 to vector<2x128xf32>
    %303 = arith.addf %302, %301 : vector<2x128xf32>
    %304 = arith.divf %302, %303 : vector<2x128xf32>
    %305 = math.tanh %299 : vector<2x128xf32>
    %306 = vector.extract_strided_slice %304 {offsets = [0, 0], sizes = [2, 32], strides = [1, 1]} : vector<2x128xf32> to vector<2x32xf32>
    %307 = vector.extract_strided_slice %304 {offsets = [0, 32], sizes = [2, 32], strides = [1, 1]} : vector<2x128xf32> to vector<2x32xf32>
    %308 = vector.extract_strided_slice %305 {offsets = [0, 64], sizes = [2, 32], strides = [1, 1]} : vector<2x128xf32> to vector<2x32xf32>
    %309 = vector.extract_strided_slice %304 {offsets = [0, 96], sizes = [2, 32], strides = [1, 1]} : vector<2x128xf32> to vector<2x32xf32>
    %310 = arith.mulf %307, %272 : vector<2x32xf32>
    %311 = arith.mulf %306, %308 : vector<2x32xf32>
    %312 = arith.addf %310, %311 : vector<2x32xf32>
    %313 = math.tanh %312 : vector<2x32xf32>
    %314 = arith.mulf %309, %313 : vector<2x32xf32>
    %cst_76 = arith.constant dense<0.000000e+00> : vector<2x128xf32>
    %315 = tpu.matmul %314, %1, %cst_76 {dimension_numbers = #tpu.dot_dimension_numbers<[1], [0], [0], [1], [0, 0, 1, 1], [], []>} : vector<2x32xf32>, vector<32x128xf32>, vector<2x128xf32> -> vector<2x128xf32>
    %cst_77 = arith.constant dense<0.000000e+00> : vector<2x128xf32>
    %316 = tpu.matmul %293, %3, %cst_77 {dimension_numbers = #tpu.dot_dimension_numbers<[1], [0], [0], [1], [0, 0, 1, 1], [], []>} : vector<2x32xf32>, vector<32x128xf32>, vector<2x128xf32> -> vector<2x128xf32>
    %317 = arith.addf %315, %316 : vector<2x128xf32>
    %318 = arith.addf %317, %9 : vector<2x128xf32>
    %319 = arith.negf %318 : vector<2x128xf32>
    %320 = math.exp %319 : vector<2x128xf32>
    %cst_78 = arith.constant 1.000000e+00 : f32
    %321 = vector.broadcast %cst_78 : f32 to vector<2x128xf32>
    %322 = arith.addf %321, %320 : vector<2x128xf32>
    %323 = arith.divf %321, %322 : vector<2x128xf32>
    %324 = math.tanh %318 : vector<2x128xf32>
    %325 = vector.extract_strided_slice %323 {offsets = [0, 0], sizes = [2, 32], strides = [1, 1]} : vector<2x128xf32> to vector<2x32xf32>
    %326 = vector.extract_strided_slice %323 {offsets = [0, 32], sizes = [2, 32], strides = [1, 1]} : vector<2x128xf32> to vector<2x32xf32>
    %327 = vector.extract_strided_slice %324 {offsets = [0, 64], sizes = [2, 32], strides = [1, 1]} : vector<2x128xf32> to vector<2x32xf32>
    %328 = vector.extract_strided_slice %323 {offsets = [0, 96], sizes = [2, 32], strides = [1, 1]} : vector<2x128xf32> to vector<2x32xf32>
    %329 = arith.mulf %326, %291 : vector<2x32xf32>
    %330 = arith.mulf %325, %327 : vector<2x32xf32>
    %331 = arith.addf %329, %330 : vector<2x32xf32>
    %332 = math.tanh %331 : vector<2x32xf32>
    %333 = arith.mulf %328, %332 : vector<2x32xf32>
    %c0_79 = arith.constant 0 : index
    %c0_80 = arith.constant 0 : index
    %334 = vector.load %arg7[%c0_79, %c0_80] : memref<32x128xf32, #tpu.memory_space<vmem>>, vector<32x128xf32>
    %cst_81 = arith.constant dense<0.000000e+00> : vector<2x128xf32>
    %335 = tpu.matmul %333, %334, %cst_81 {dimension_numbers = #tpu.dot_dimension_numbers<[1], [0], [0], [1], [0, 0, 1, 1], [], []>} : vector<2x32xf32>, vector<32x128xf32>, vector<2x128xf32> -> vector<2x128xf32>
    %c0_82 = arith.constant 0 : index
    %c0_83 = arith.constant 0 : index
    %336 = vector.load %arg8[%c0_82, %c0_83] : memref<1x128xf32, #tpu.memory_space<vmem>>, vector<1x128xf32>
    %337 = vector.broadcast %336 : vector<1x128xf32> to vector<2x128xf32>
    %338 = arith.addf %335, %337 : vector<2x128xf32>
    %c0_84 = arith.constant 0 : index
    %c0_85 = arith.constant 0 : index
    %339 = vector.load %arg9[%c0_84, %c0_85] : memref<2x128xf32, #tpu.memory_space<vmem>>, vector<2x128xf32>
    tpu.vector_store %arg9[%c0_84, %c0_85], %338 {strides = array<i32>} : memref<2x128xf32, #tpu.memory_space<vmem>>, vector<2x128xf32>,
    return
  }
}

</mosaic_0001>

<llo_original>
// kernel: multilayer_lstm_forward.1
$region0: #{multilayer_lstm_forward.1}
  #allocation0 [shape = 'u32[]', space=smem, size = 0x4, offset = 0x4, fixed_abs, tag = 'smem constant byte address 0x4 - core index']
  #allocation1 [shape = 'u32[144,128]{1,0:T(1,128)}', space=vmem, size = 0x12000, scoped, tag = 'internal scratch']
  %s0 = inlined_call_operand.vmem [shape: f32[8,2,8], index: 0, kind: input, shape index: {}]
  %s1 = inlined_call_operand.vmem [shape: f32[8,128], index: 1, kind: input, shape index: {}]
  %s2 = inlined_call_operand.vmem [shape: f32[32,128], index: 2, kind: input, shape index: {}]
  %s3 = inlined_call_operand.hbm [shape: f32[32,128], index: 3, kind: input, shape index: {}]
  %s4 = inlined_call_operand.hbm [shape: f32[32,128], index: 4, kind: input, shape index: {}]
  %s5 = inlined_call_operand.vmem [shape: f32[1,128], index: 5, kind: input, shape index: {}]
  %s6 = inlined_call_operand.vmem [shape: f32[1,128], index: 6, kind: input, shape index: {}]
  %s7 = inlined_call_operand.hbm [shape: f32[32,128], index: 7, kind: input, shape index: {}]
  %s8 = inlined_call_operand.vmem [shape: f32[1,128], index: 8, kind: input, shape index: {}]
  %s9 = inlined_call_operand.hbm [shape: f32[2,128], index: 9, kind: output, shape index: {}]
  %s10 = sld [smem:[#allocation0]]
  $region58: #{multilayer_lstm_forward.1} parent=0
    _
  %s12 = ssub.s32 1, %s10
  %s13 = scalar_select 0, %s12, %s10
  $region1: #{multilayer_lstm_forward.1} parent=0
    #allocation2 [shape = 'u8[16384]{0}', space=vmem, size = 0x4000, scoped, tag = 'input window, operand 3, single buffered']
    #allocation3 [shape = 's32[1]{0}', space=sflag, size = 0x4, scoped, tag = 'scoped memory for multilayer_lstm_forward.1']
    #allocation4 [shape = 's32[1]{0}', space=sflag, size = 0x4, scoped, tag = 'scoped memory for multilayer_lstm_forward.1']
    #allocation5 [shape = 'u8[16384]{0}', space=vmem, size = 0x4000, scoped, tag = 'input window, operand 4, single buffered']
    #allocation6 [shape = 's32[1]{0}', space=sflag, size = 0x4, scoped, tag = 'scoped memory for multilayer_lstm_forward.1']
    #allocation7 [shape = 'u8[16384]{0}', space=vmem, size = 0x4000, scoped, tag = 'input window, operand 7, single buffered']
    #allocation8 [shape = 'u8[1024]{0}', space=vmem, size = 0x400, scoped, tag = 'output window, operand 0, single buffered']
    %14 = vsyncpa [#allocation3], 0
    %15 = vsyncpa [#allocation6], 0
    %16 = vsyncpa [#allocation4], 0
    // Predicated region
    $region2: #{multilayer_lstm_forward.1} parent=1 // pred_check
      _
    $region3: #{multilayer_lstm_forward.1} parent=1 // pred_check_branch
      %18 = sbr.rel (0) target = $region5
    $region4: #{multilayer_lstm_forward.1} parent=1 // pred_region
      _
    $region5: #{multilayer_lstm_forward.1} parent=1 // pred_fallthru
      _
    // Predicated region
    $region6: #{multilayer_lstm_forward.1} parent=1 // pred_check
      _
    $region7: #{multilayer_lstm_forward.1} parent=1 // pred_check_branch
      %20 = sbr.rel (0) target = $region9
    $region8: #{multilayer_lstm_forward.1} parent=1 // pred_region
      _
    $region9: #{multilayer_lstm_forward.1} parent=1 // pred_fallthru
      _
    // Predicated region
    $region10: #{multilayer_lstm_forward.1} parent=1 // pred_check
      _
    $region11: #{multilayer_lstm_forward.1} parent=1 // pred_check_branch
      %22 = sbr.rel (0) target = $region13
    $region12: #{multilayer_lstm_forward.1} parent=1 // pred_region
      _
    $region13: #{multilayer_lstm_forward.1} parent=1 // pred_fallthru
      _
    // Predicated region
    $region14: #{multilayer_lstm_forward.1} parent=1 // pred_check
      _
    $region15: #{multilayer_lstm_forward.1} parent=1 // pred_check_branch
      %24 = sbr.rel (0) target = $region17
    $region16: #{multilayer_lstm_forward.1} parent=1 // pred_region
      %s26 = ssub.s32 512, 512
      %27 = vsyncadd [#allocation3], %s26
      %s28 = sshll.u32 [#allocation2], 4
      %s29 = int_to_ptr.vmem [resolvable:$true] %s28
      %34 = dma.hbm_to_vmem [thread:$0]  %s3, 512, %s29, [#allocation3], 128, 128, 8
    $region17: #{multilayer_lstm_forward.1} parent=1 // pred_fallthru
      _
    // Predicated region
    $region18: #{multilayer_lstm_forward.1} parent=1 // pred_check
      _
    $region19: #{multilayer_lstm_forward.1} parent=1 // pred_check_branch
      %36 = sbr.rel (0) target = $region21
    $region20: #{multilayer_lstm_forward.1} parent=1 // pred_region
      %s38 = ssub.s32 512, 512
      %39 = vsyncadd [#allocation6], %s38
      %s40 = sshll.u32 [#allocation5], 4
      %s41 = int_to_ptr.vmem [resolvable:$true] %s40
      %46 = dma.hbm_to_vmem [thread:$0]  %s4, 512, %s41, [#allocation6], 128, 128, 8
    $region21: #{multilayer_lstm_forward.1} parent=1 // pred_fallthru
      _
    // Predicated region
    $region22: #{multilayer_lstm_forward.1} parent=1 // pred_check
      _
    $region23: #{multilayer_lstm_forward.1} parent=1 // pred_check_branch
      %48 = sbr.rel (0) target = $region25
    $region24: #{multilayer_lstm_forward.1} parent=1 // pred_region
      _
    $region25: #{multilayer_lstm_forward.1} parent=1 // pred_fallthru
      _
    // Predicated region
    $region26: #{multilayer_lstm_forward.1} parent=1 // pred_check
      _
    $region27: #{multilayer_lstm_forward.1} parent=1 // pred_check_branch
      %50 = sbr.rel (0) target = $region29
    $region28: #{multilayer_lstm_forward.1} parent=1 // pred_region
      _
    $region29: #{multilayer_lstm_forward.1} parent=1 // pred_fallthru
      _
    // Predicated region
    $region30: #{multilayer_lstm_forward.1} parent=1 // pred_check
      _
    $region31: #{multilayer_lstm_forward.1} parent=1 // pred_check_branch
      %52 = sbr.rel (0) target = $region33
    $region32: #{multilayer_lstm_forward.1} parent=1 // pred_region
      %s54 = ssub.s32 512, 512
      %55 = vsyncadd [#allocation6], %s54
      %s56 = sshll.u32 [#allocation7], 4
      %s57 = int_to_ptr.vmem [resolvable:$true] %s56
      %62 = dma.hbm_to_vmem [thread:$0]  %s7, 512, %s57, [#allocation6], 128, 128, 8
    $region33: #{multilayer_lstm_forward.1} parent=1 // pred_fallthru
      _
    // Predicated region
    $region34: #{multilayer_lstm_forward.1} parent=1 // pred_check
      _
    $region35: #{multilayer_lstm_forward.1} parent=1 // pred_check_branch
      %64 = sbr.rel (0) target = $region37
    $region36: #{multilayer_lstm_forward.1} parent=1 // pred_region
      _
    $region37: #{multilayer_lstm_forward.1} parent=1 // pred_fallthru
      _
    // Predicated region
    $region38: #{multilayer_lstm_forward.1} parent=1 // pred_check
      _
    $region39: #{multilayer_lstm_forward.1} parent=1 // pred_check_branch
      %66 = sbr.rel (0) target = $region41
    $region40: #{multilayer_lstm_forward.1} parent=1 // pred_region
      %67 = dma.done [#allocation3], 512
    $region41: #{multilayer_lstm_forward.1} parent=1 // pred_fallthru
      _
    // Predicated region
    $region42: #{multilayer_lstm_forward.1} parent=1 // pred_check
      _
    $region43: #{multilayer_lstm_forward.1} parent=1 // pred_check_branch
      %69 = sbr.rel (0) target = $region45
    $region44: #{multilayer_lstm_forward.1} parent=1 // pred_region
      %70 = dma.done [#allocation6], 512
    $region45: #{multilayer_lstm_forward.1} parent=1 // pred_fallthru
      _
    // Predicated region
    $region46: #{multilayer_lstm_forward.1} parent=1 // pred_check
      _
    $region47: #{multilayer_lstm_forward.1} parent=1 // pred_check_branch
      %72 = sbr.rel (0) target = $region49
    $region48: #{multilayer_lstm_forward.1} parent=1 // pred_region
      %73 = dma.done [#allocation6], 512
    $region49: #{multilayer_lstm_forward.1} parent=1 // pred_fallthru
      _
    %v74 = vld [vmem:[%s1] sm:$0xff]
    %v75 = vld [vmem:[%s2] sm:$0xff]
    %v76 = vld [vmem:[%s2 + $0x8] sm:$0xff]
    %v77 = vld [vmem:[%s2 + $0x10] sm:$0xff]
    %v78 = vld [vmem:[%s2 + $0x18] sm:$0xff]
    %v79 = vld [vmem:[#allocation2] sm:$0xff]
    %v80 = vld [vmem:[#allocation2 + $0x8] sm:$0xff]
    %v81 = vld [vmem:[#allocation2 + $0x10] sm:$0xff]
    %v82 = vld [vmem:[#allocation2 + $0x18] sm:$0xff]
    %v83 = vld [vmem:[#allocation5] sm:$0xff]
    %v84 = vld [vmem:[#allocation5 + $0x8] sm:$0xff]
    %v85 = vld [vmem:[#allocation5 + $0x10] sm:$0xff]
    %v86 = vld [vmem:[#allocation5 + $0x18] sm:$0xff]
    %v87 = vld [vmem:[%s5] sm:$0x1]
    %v89 = vlaneseq
    %v90 = vshrl.u32 %v89, 7
    %v91 = vsub.s32 0, %v90
    %v92 = vrot.slane %v87, %v91
    %v94 = vld [vmem:[%s6] sm:$0x1]
    %v96 = vlaneseq
    %v97 = vshrl.u32 %v96, 7
    %v98 = vsub.s32 0, %v97
    %v99 = vrot.slane %v94, %v98
    %v101 = vld [vmem:[%s0] sm:$0x3]
    %vm102 = vcmask 261120
    %v104 = vsel %vm102, 0.0, 0
    %106 = vmatprep.subr.mxu0 0.0
    %107 = vmatpush1.msra.mxu0 %v79
    %108 = vmatprep.subr.mxu0 0.0
    %109 = vmatpush1.msra.mxu0 %v80
    %110 = vmatprep.subr.mxu0 0.0
    %111 = vmatpush1.msra.mxu0 %v81
    %112 = vmatprep.subr.mxu0 0.0
    %113 = vmatpush1.msra.mxu0 %v82
    %114 = vmatprep.subr.mxu0 0.0
    %115 = vmatpush1.msra.mxu0 0.0
    %116 = vmatprep.subr.mxu0 0.0
    %117 = vmatpush1.msra.mxu0 0.0
    %118 = vmatprep.subr.mxu0 0.0
    %119 = vmatpush1.msra.mxu0 0.0
    %120 = vmatprep.subr.mxu0 0.0
    %121 = vmatpush1.msra.mxu0 0.0
    %122 = vmatprep.subr.mxu0 0.0
    %123 = vmatpush1.msra.mxu0 0.0
    %124 = vmatprep.subr.mxu0 0.0
    %125 = vmatpush1.msra.mxu0 0.0
    %126 = vmatprep.subr.mxu0 0.0
    %127 = vmatpush1.msra.mxu0 0.0
    %128 = vmatprep.subr.mxu0 0.0
    %129 = vmatpush1.msra.mxu0 0.0
    %130 = vmatprep.subr.mxu0 0.0
    %131 = vmatpush1.msra.mxu0 0.0
    %132 = vmatprep.subr.mxu0 0.0
    %133 = vmatpush1.msra.mxu0 0.0
    %134 = vmatprep.subr.mxu0 0.0
    %135 = vmatpush1.msra.mxu0 0.0
    %136 = vmatprep.subr.mxu0 0.0
    %137 = vmatpush1.msra.mxu0 0.0
    %138 = vmatprep.subr.mxu0 0.0
    %139 = vmatpush1.msra.mxu0 0.0
    %140 = vmatprep.subr.mxu0 0.0
    %141 = vmatpush1.msra.mxu0 0.0
    %142 = vmatprep.subr.mxu0 0.0
    %143 = vmatpush1.msra.mxu0 0.0
    %144 = vmatprep.subr.mxu0 0.0
    %145 = vmatpush1.msra.mxu0 0.0
    %146 = vmatprep.subr.mxu0 0.0
    %147 = vmatpush1.msra.mxu0 0.0
    %148 = vmatprep.subr.mxu0 0.0
    %149 = vmatpush1.msra.mxu0 0.0
    %150 = vmatprep.subr.mxu0 0.0
    %151 = vmatpush1.msra.mxu0 0.0
    %152 = vmatprep.subr.mxu0 0.0
    %153 = vmatpush1.msra.mxu0 0.0
    %154 = vmatprep.subr.mxu0 0.0
    %155 = vmatpush1.msra.mxu0 0.0
    %156 = vmatprep.subr.mxu0 0.0
    %157 = vmatpush1.msra.mxu0 0.0
    %158 = vmatprep.subr.mxu0 0.0
    %159 = vmatpush1.msra.mxu0 0.0
    %160 = vmatprep.subr.mxu0 0.0
    %161 = vmatpush1.msra.mxu0 0.0
    %162 = vmatprep.subr.mxu0 0.0
    %163 = vmatpush1.msra.mxu0 0.0
    %164 = vmatprep.subr.mxu0 0.0
    %165 = vmatpush1.msra.mxu0 0.0
    %166 = vmatprep.subr.mxu0 0.0
    %167 = vmatpush1.msra.mxu0 0.0
    %168 = vmatprep.subr.mxu0 0.0
    %169 = vmatpush1.msra.mxu0 0.0
    %170 = vmatprep.mubr.f32.mxu0 0.0
    %171 = vmatmul.mubr.f32.gmra.mrb[0].mxu0 %v104
    %v172 = vpop.f32.mrb[0].mxu0
    %v173 = vadd.f32 0.0, %v172
    %v174 = vpop.f32.mrb[0].mxu0
    %175 = vdwg.mxu0
    %vm176 = vcmask 64512
    %v178 = vsel %vm176, %v101, 0
    %180 = vmatprep.subr.mxu0 0.0
    %181 = vmatpush1.msra.mxu0 %v74
    %182 = vmatprep.subr.mxu0 0.0
    %183 = vmatpush1.msra.mxu0 0.0
    %184 = vmatprep.subr.mxu0 0.0
    %185 = vmatpush1.msra.mxu0 0.0
    %186 = vmatprep.subr.mxu0 0.0
    %187 = vmatpush1.msra.mxu0 0.0
    %188 = vmatprep.subr.mxu0 0.0
    %189 = vmatpush1.msra.mxu0 0.0
    %190 = vmatprep.subr.mxu0 0.0
    %191 = vmatpush1.msra.mxu0 0.0
    %192 = vmatprep.subr.mxu0 0.0
    %193 = vmatpush1.msra.mxu0 0.0
    %194 = vmatprep.subr.mxu0 0.0
    %195 = vmatpush1.msra.mxu0 0.0
    %196 = vmatprep.subr.mxu0 0.0
    %197 = vmatpush1.msra.mxu0 0.0
    %198 = vmatprep.subr.mxu0 0.0
    %199 = vmatpush1.msra.mxu0 0.0
    %200 = vmatprep.subr.mxu0 0.0
    %201 = vmatpush1.msra.mxu0 0.0
    %202 = vmatprep.subr.mxu0 0.0
    %203 = vmatpush1.msra.mxu0 0.0
    %204 = vmatprep.subr.mxu0 0.0
    %205 = vmatpush1.msra.mxu0 0.0
    %206 = vmatprep.subr.mxu0 0.0
    %207 = vmatpush1.msra.mxu0 0.0
    %208 = vmatprep.subr.mxu0 0.0
    %209 = vmatpush1.msra.mxu0 0.0
    %210 = vmatprep.subr.mxu0 0.0
    %211 = vmatpush1.msra.mxu0 0.0
    %212 = vmatprep.subr.mxu0 0.0
    %213 = vmatpush1.msra.mxu0 0.0
    %214 = vmatprep.subr.mxu0 0.0
    %215 = vmatpush1.msra.mxu0 0.0
    %216 = vmatprep.subr.mxu0 0.0
    %217 = vmatpush1.msra.mxu0 0.0
    %218 = vmatprep.subr.mxu0 0.0
    %219 = vmatpush1.msra.mxu0 0.0
    %220 = vmatprep.subr.mxu0 0.0
    %221 = vmatpush1.msra.mxu0 0.0
    %222 = vmatprep.subr.mxu0 0.0
    %223 = vmatpush1.msra.mxu0 0.0
    %224 = vmatprep.subr.mxu0 0.0
    %225 = vmatpush1.msra.mxu0 0.0
    %226 = vmatprep.subr.mxu0 0.0
    %227 = vmatpush1.msra.mxu0 0.0
    %228 = vmatprep.subr.mxu0 0.0
    %229 = vmatpush1.msra.mxu0 0.0
    %230 = vmatprep.subr.mxu0 0.0
    %231 = vmatpush1.msra.mxu0 0.0
    %232 = vmatprep.subr.mxu0 0.0
    %233 = vmatpush1.msra.mxu0 0.0
    %234 = vmatprep.subr.mxu0 0.0
    %235 = vmatpush1.msra.mxu0 0.0
    %236 = vmatprep.subr.mxu0 0.0
    %237 = vmatpush1.msra.mxu0 0.0
    %238 = vmatprep.subr.mxu0 0.0
    %239 = vmatpush1.msra.mxu0 0.0
    %240 = vmatprep.subr.mxu0 0.0
    %241 = vmatpush1.msra.mxu0 0.0
    %242 = vmatprep.subr.mxu0 0.0
    %243 = vmatpush1.msra.mxu0 0.0
    %244 = vmatprep.mubr.f32.mxu0 0.0
    %245 = vmatmul.mubr.f32.gmra.mrb[0].mxu0 %v178
    %v246 = vpop.f32.mrb[0].mxu0
    %v247 = vadd.f32 %v173, %v246
    %v248 = vpop.f32.mrb[0].mxu0
    %249 = vdwg.mxu0
    %v250 = vadd.f32 %v247, %v92
    %v251 = vxor.u32 %v250, 2147483648
    %v252 = vmul.f32 %v251, 1.442695
    %v253 = vpow.pop %v252
    %v254 = vadd.f32 %v253, 1.0
    %v255 = vrcp.pop %v254
    %v256 = vmul.f32 1.0, %v255
    %v257 = vtanh.pop %v250
    %v258 = vmul.f32 %v256, 0.0
    %260 = vrot.lane.b32.xlu0 %v257, 64
    %v261 = vpop.permute.xlu0 %260
    %v263 = vmul.f32 %v256, %v261
    %265 = vrot.lane.b32.xlu0 %v263, 32
    %v266 = vpop.permute.xlu0 %265
    %v268 = vadd.f32 %v258, %v266
    %v269 = vtanh.pop %v268
    %271 = vrot.lane.b32.xlu0 %v269, 64
    %v272 = vpop.permute.xlu0 %271
    %v274 = vmul.f32 %v256, %v272
    %275 = vmatprep.subr.mxu0 0.0
    %276 = vmatpush1.msra.mxu0 %v83
    %277 = vmatprep.subr.mxu0 0.0
    %278 = vmatpush1.msra.mxu0 %v84
    %279 = vmatprep.subr.mxu0 0.0
    %280 = vmatpush1.msra.mxu0 %v85
    %281 = vmatprep.subr.mxu0 0.0
    %282 = vmatpush1.msra.mxu0 %v86
    %283 = vmatprep.subr.mxu0 0.0
    %284 = vmatpush1.msra.mxu0 0.0
    %285 = vmatprep.subr.mxu0 0.0
    %286 = vmatpush1.msra.mxu0 0.0
    %287 = vmatprep.subr.mxu0 0.0
    %288 = vmatpush1.msra.mxu0 0.0
    %289 = vmatprep.subr.mxu0 0.0
    %290 = vmatpush1.msra.mxu0 0.0
    %291 = vmatprep.subr.mxu0 0.0
    %292 = vmatpush1.msra.mxu0 0.0
    %293 = vmatprep.subr.mxu0 0.0
    %294 = vmatpush1.msra.mxu0 0.0
    %295 = vmatprep.subr.mxu0 0.0
    %296 = vmatpush1.msra.mxu0 0.0
    %297 = vmatprep.subr.mxu0 0.0
    %298 = vmatpush1.msra.mxu0 0.0
    %299 = vmatprep.subr.mxu0 0.0
    %300 = vmatpush1.msra.mxu0 0.0
    %301 = vmatprep.subr.mxu0 0.0
    %302 = vmatpush1.msra.mxu0 0.0
    %303 = vmatprep.subr.mxu0 0.0
    %304 = vmatpush1.msra.mxu0 0.0
    %305 = vmatprep.subr.mxu0 0.0
    %306 = vmatpush1.msra.mxu0 0.0
    %307 = vmatprep.subr.mxu0 0.0
    %308 = vmatpush1.msra.mxu0 0.0
    %309 = vmatprep.subr.mxu0 0.0
    %310 = vmatpush1.msra.mxu0 0.0
    %311 = vmatprep.subr.mxu0 0.0
    %312 = vmatpush1.msra.mxu0 0.0
    %313 = vmatprep.subr.mxu0 0.0
    %314 = vmatpush1.msra.mxu0 0.0
    %315 = vmatprep.subr.mxu0 0.0
    %316 = vmatpush1.msra.mxu0 0.0
    %317 = vmatprep.subr.mxu0 0.0
    %318 = vmatpush1.msra.mxu0 0.0
    %319 = vmatprep.subr.mxu0 0.0
    %320 = vmatpush1.msra.mxu0 0.0
    %321 = vmatprep.subr.mxu0 0.0
    %322 = vmatpush1.msra.mxu0 0.0
    %323 = vmatprep.subr.mxu0 0.0
    %324 = vmatpush1.msra.mxu0 0.0
    %325 = vmatprep.subr.mxu0 0.0
    %326 = vmatpush1.msra.mxu0 0.0
    %327 = vmatprep.subr.mxu0 0.0
    %328 = vmatpush1.msra.mxu0 0.0
    %329 = vmatprep.subr.mxu0 0.0
    %330 = vmatpush1.msra.mxu0 0.0
    %331 = vmatprep.subr.mxu0 0.0
    %332 = vmatpush1.msra.mxu0 0.0
    %333 = vmatprep.subr.mxu0 0.0
    %334 = vmatpush1.msra.mxu0 0.0
    %335 = vmatprep.subr.mxu0 0.0
    %336 = vmatpush1.msra.mxu0 0.0
    %337 = vmatprep.subr.mxu0 0.0
    %338 = vmatpush1.msra.mxu0 0.0
    %339 = vmatprep.mubr.f32.mxu0 0.0
    %340 = vmatmul.mubr.f32.gmra.mrb[0].mxu0 %v104
    %v341 = vpop.f32.mrb[0].mxu0
    %v342 = vadd.f32 0.0, %v341
    %v343 = vpop.f32.mrb[0].mxu0
    %344 = vdwg.mxu0
    %346 = vrot.lane.b32.xlu0 %v274, 32
    %v347 = vpop.permute.xlu0 %346
    %v348 = vsel %vm102, %v347, 0
    %350 = vmatprep.subr.mxu0 0.0
    %351 = vmatpush1.msra.mxu0 %v75
    %352 = vmatprep.subr.mxu0 0.0
    %353 = vmatpush1.msra.mxu0 %v76
    %354 = vmatprep.subr.mxu0 0.0
    %355 = vmatpush1.msra.mxu0 %v77
    %356 = vmatprep.subr.mxu0 0.0
    %357 = vmatpush1.msra.mxu0 %v78
    %358 = vmatprep.subr.mxu0 0.0
    %359 = vmatpush1.msra.mxu0 0.0
    %360 = vmatprep.subr.mxu0 0.0
    %361 = vmatpush1.msra.mxu0 0.0
    %362 = vmatprep.subr.mxu0 0.0
    %363 = vmatpush1.msra.mxu0 0.0
    %364 = vmatprep.subr.mxu0 0.0
    %365 = vmatpush1.msra.mxu0 0.0
    %366 = vmatprep.subr.mxu0 0.0
    %367 = vmatpush1.msra.mxu0 0.0
    %368 = vmatprep.subr.mxu0 0.0
    %369 = vmatpush1.msra.mxu0 0.0
    %370 = vmatprep.subr.mxu0 0.0
    %371 = vmatpush1.msra.mxu0 0.0
    %372 = vmatprep.subr.mxu0 0.0
    %373 = vmatpush1.msra.mxu0 0.0
    %374 = vmatprep.subr.mxu0 0.0
    %375 = vmatpush1.msra.mxu0 0.0
    %376 = vmatprep.subr.mxu0 0.0
    %377 = vmatpush1.msra.mxu0 0.0
    %378 = vmatprep.subr.mxu0 0.0
    %379 = vmatpush1.msra.mxu0 0.0
    %380 = vmatprep.subr.mxu0 0.0
    %381 = vmatpush1.msra.mxu0 0.0
    %382 = vmatprep.subr.mxu0 0.0
    %383 = vmatpush1.msra.mxu0 0.0
    %384 = vmatprep.subr.mxu0 0.0
    %385 = vmatpush1.msra.mxu0 0.0
    %386 = vmatprep.subr.mxu0 0.0
    %387 = vmatpush1.msra.mxu0 0.0
    %388 = vmatprep.subr.mxu0 0.0
    %389 = vmatpush1.msra.mxu0 0.0
    %390 = vmatprep.subr.mxu0 0.0
    %391 = vmatpush1.msra.mxu0 0.0
    %392 = vmatprep.subr.mxu0 0.0
    %393 = vmatpush1.msra.mxu0 0.0
    %394 = vmatprep.subr.mxu0 0.0
    %395 = vmatpush1.msra.mxu0 0.0
    %396 = vmatprep.subr.mxu0 0.0
    %397 = vmatpush1.msra.mxu0 0.0
    %398 = vmatprep.subr.mxu0 0.0
    %399 = vmatpush1.msra.mxu0 0.0
    %400 = vmatprep.subr.mxu0 0.0
    %401 = vmatpush1.msra.mxu0 0.0
    %402 = vmatprep.subr.mxu0 0.0
    %403 = vmatpush1.msra.mxu0 0.0
    %404 = vmatprep.subr.mxu0 0.0
    %405 = vmatpush1.msra.mxu0 0.0
    %406 = vmatprep.subr.mxu0 0.0
    %407 = vmatpush1.msra.mxu0 0.0
    %408 = vmatprep.subr.mxu0 0.0
    %409 = vmatpush1.msra.mxu0 0.0
    %410 = vmatprep.subr.mxu0 0.0
    %411 = vmatpush1.msra.mxu0 0.0
    %412 = vmatprep.subr.mxu0 0.0
    %413 = vmatpush1.msra.mxu0 0.0
    %414 = vmatprep.mubr.f32.mxu0 0.0
    %415 = vmatmul.mubr.f32.gmra.mrb[0].mxu0 %v348
    %v416 = vpop.f32.mrb[0].mxu0
    %v417 = vadd.f32 %v342, %v416
    %v418 = vpop.f32.mrb[0].mxu0
    %419 = vdwg.mxu0
    %v420 = vadd.f32 %v417, %v99
    %v421 = vxor.u32 %v420, 2147483648
    %v422 = vmul.f32 %v421, 1.442695
    %v423 = vpow.pop %v422
    %v424 = vadd.f32 %v423, 1.0
    %v425 = vrcp.pop %v424
    %v426 = vmul.f32 1.0, %v425
    %v427 = vtanh.pop %v420
    %v428 = vmul.f32 %v426, 0.0
    %430 = vrot.lane.b32.xlu0 %v427, 64
    %v431 = vpop.permute.xlu0 %430
    %v433 = vmul.f32 %v426, %v431
    %435 = vrot.lane.b32.xlu0 %v433, 32
    %v436 = vpop.permute.xlu0 %435
    %v438 = vadd.f32 %v428, %v436
    %v439 = vtanh.pop %v438
    %441 = vrot.lane.b32.xlu0 %v439, 64
    %v442 = vpop.permute.xlu0 %441
    %v444 = vmul.f32 %v426, %v442
    %s445 = scalar_lea.vmem %s0, 2
    %v446 = vld [vmem:[%s445] sm:$0x3]
    %447 = vmatprep.subr.mxu0 0.0
    %448 = vmatpush1.msra.mxu0 %v79
    %449 = vmatprep.subr.mxu0 0.0
    %450 = vmatpush1.msra.mxu0 %v80
    %451 = vmatprep.subr.mxu0 0.0
    %452 = vmatpush1.msra.mxu0 %v81
    %453 = vmatprep.subr.mxu0 0.0
    %454 = vmatpush1.msra.mxu0 %v82
    %455 = vmatprep.subr.mxu0 0.0
    %456 = vmatpush1.msra.mxu0 0.0
    %457 = vmatprep.subr.mxu0 0.0
    %458 = vmatpush1.msra.mxu0 0.0
    %459 = vmatprep.subr.mxu0 0.0
    %460 = vmatpush1.msra.mxu0 0.0
    %461 = vmatprep.subr.mxu0 0.0
    %462 = vmatpush1.msra.mxu0 0.0
    %463 = vmatprep.subr.mxu0 0.0
    %464 = vmatpush1.msra.mxu0 0.0
    %465 = vmatprep.subr.mxu0 0.0
    %466 = vmatpush1.msra.mxu0 0.0
    %467 = vmatprep.subr.mxu0 0.0
    %468 = vmatpush1.msra.mxu0 0.0
    %469 = vmatprep.subr.mxu0 0.0
    %470 = vmatpush1.msra.mxu0 0.0
    %471 = vmatprep.subr.mxu0 0.0
    %472 = vmatpush1.msra.mxu0 0.0
    %473 = vmatprep.subr.mxu0 0.0
    %474 = vmatpush1.msra.mxu0 0.0
    %475 = vmatprep.subr.mxu0 0.0
    %476 = vmatpush1.msra.mxu0 0.0
    %477 = vmatprep.subr.mxu0 0.0
    %478 = vmatpush1.msra.mxu0 0.0
    %479 = vmatprep.subr.mxu0 0.0
    %480 = vmatpush1.msra.mxu0 0.0
    %481 = vmatprep.subr.mxu0 0.0
    %482 = vmatpush1.msra.mxu0 0.0
    %483 = vmatprep.subr.mxu0 0.0
    %484 = vmatpush1.msra.mxu0 0.0
    %485 = vmatprep.subr.mxu0 0.0
    %486 = vmatpush1.msra.mxu0 0.0
    %487 = vmatprep.subr.mxu0 0.0
    %488 = vmatpush1.msra.mxu0 0.0
    %489 = vmatprep.subr.mxu0 0.0
    %490 = vmatpush1.msra.mxu0 0.0
    %491 = vmatprep.subr.mxu0 0.0
    %492 = vmatpush1.msra.mxu0 0.0
    %493 = vmatprep.subr.mxu0 0.0
    %494 = vmatpush1.msra.mxu0 0.0
    %495 = vmatprep.subr.mxu0 0.0
    %496 = vmatpush1.msra.mxu0 0.0
    %497 = vmatprep.subr.mxu0 0.0
    %498 = vmatpush1.msra.mxu0 0.0
    %499 = vmatprep.subr.mxu0 0.0
    %500 = vmatpush1.msra.mxu0 0.0
    %501 = vmatprep.subr.mxu0 0.0
    %502 = vmatpush1.msra.mxu0 0.0
    %503 = vmatprep.subr.mxu0 0.0
    %504 = vmatpush1.msra.mxu0 0.0
    %505 = vmatprep.subr.mxu0 0.0
    %506 = vmatpush1.msra.mxu0 0.0
    %507 = vmatprep.subr.mxu0 0.0
    %508 = vmatpush1.msra.mxu0 0.0
    %509 = vmatprep.subr.mxu0 0.0
    %510 = vmatpush1.msra.mxu0 0.0
    %511 = vmatprep.mubr.f32.mxu0 0.0
    %512 = vmatmul.mubr.f32.gmra.mrb[0].mxu0 %v348
    %v513 = vpop.f32.mrb[0].mxu0
    %v514 = vadd.f32 0.0, %v513
    %v515 = vpop.f32.mrb[0].mxu0
    %516 = vdwg.mxu0
    %v518 = vsel %vm176, %v446, 0
    %520 = vmatprep.subr.mxu0 0.0
    %521 = vmatpush1.msra.mxu0 %v74
    %522 = vmatprep.subr.mxu0 0.0
    %523 = vmatpush1.msra.mxu0 0.0
    %524 = vmatprep.subr.mxu0 0.0
    %525 = vmatpush1.msra.mxu0 0.0
    %526 = vmatprep.subr.mxu0 0.0
    %527 = vmatpush1.msra.mxu0 0.0
    %528 = vmatprep.subr.mxu0 0.0
    %529 = vmatpush1.msra.mxu0 0.0
    %530 = vmatprep.subr.mxu0 0.0
    %531 = vmatpush1.msra.mxu0 0.0
    %532 = vmatprep.subr.mxu0 0.0
    %533 = vmatpush1.msra.mxu0 0.0
    %534 = vmatprep.subr.mxu0 0.0
    %535 = vmatpush1.msra.mxu0 0.0
    %536 = vmatprep.subr.mxu0 0.0
    %537 = vmatpush1.msra.mxu0 0.0
    %538 = vmatprep.subr.mxu0 0.0
    %539 = vmatpush1.msra.mxu0 0.0
    %540 = vmatprep.subr.mxu0 0.0
    %541 = vmatpush1.msra.mxu0 0.0
    %542 = vmatprep.subr.mxu0 0.0
    %543 = vmatpush1.msra.mxu0 0.0
    %544 = vmatprep.subr.mxu0 0.0
    %545 = vmatpush1.msra.mxu0 0.0
    %546 = vmatprep.subr.mxu0 0.0
    %547 = vmatpush1.msra.mxu0 0.0
    %548 = vmatprep.subr.mxu0 0.0
    %549 = vmatpush1.msra.mxu0 0.0
    %550 = vmatprep.subr.mxu0 0.0
    %551 = vmatpush1.msra.mxu0 0.0
    %552 = vmatprep.subr.mxu0 0.0
    %553 = vmatpush1.msra.mxu0 0.0
    %554 = vmatprep.subr.mxu0 0.0
    %555 = vmatpush1.msra.mxu0 0.0
    %556 = vmatprep.subr.mxu0 0.0
    %557 = vmatpush1.msra.mxu0 0.0
    %558 = vmatprep.subr.mxu0 0.0
    %559 = vmatpush1.msra.mxu0 0.0
    %560 = vmatprep.subr.mxu0 0.0
    %561 = vmatpush1.msra.mxu0 0.0
    %562 = vmatprep.subr.mxu0 0.0
    %563 = vmatpush1.msra.mxu0 0.0
    %564 = vmatprep.subr.mxu0 0.0
    %565 = vmatpush1.msra.mxu0 0.0
    %566 = vmatprep.subr.mxu0 0.0
    %567 = vmatpush1.msra.mxu0 0.0
    %568 = vmatprep.subr.mxu0 0.0
    %569 = vmatpush1.msra.mxu0 0.0
    %570 = vmatprep.subr.mxu0 0.0
    %571 = vmatpush1.msra.mxu0 0.0
    %572 = vmatprep.subr.mxu0 0.0
    %573 = vmatpush1.msra.mxu0 0.0
    %574 = vmatprep.subr.mxu0 0.0
    %575 = vmatpush1.msra.mxu0 0.0
    %576 = vmatprep.subr.mxu0 0.0
    %577 = vmatpush1.msra.mxu0 0.0
    %578 = vmatprep.subr.mxu0 0.0
    %579 = vmatpush1.msra.mxu0 0.0
    %580 = vmatprep.subr.mxu0 0.0
    %581 = vmatpush1.msra.mxu0 0.0
    %582 = vmatprep.subr.mxu0 0.0
    %583 = vmatpush1.msra.mxu0 0.0
    %584 = vmatprep.mubr.f32.mxu0 0.0
    %585 = vmatmul.mubr.f32.gmra.mrb[0].mxu0 %v518
    %v586 = vpop.f32.mrb[0].mxu0
    %v587 = vadd.f32 %v514, %v586
    %v588 = vpop.f32.mrb[0].mxu0
    %589 = vdwg.mxu0
    %v590 = vadd.f32 %v587, %v92
    %v591 = vxor.u32 %v590, 2147483648
    %v592 = vmul.f32 %v591, 1.442695
    %v593 = vpow.pop %v592
    %v594 = vadd.f32 %v593, 1.0
    %v595 = vrcp.pop %v594
    %v596 = vmul.f32 1.0, %v595
    %v597 = vtanh.pop %v590
    %v598 = vmul.f32 %v596, %v268
    %600 = vrot.lane.b32.xlu0 %v597, 64
    %v601 = vpop.permute.xlu0 %600
    %v603 = vmul.f32 %v596, %v601
    %605 = vrot.lane.b32.xlu0 %v603, 32
    %v606 = vpop.permute.xlu0 %605
    %v608 = vadd.f32 %v598, %v606
    %v609 = vtanh.pop %v608
    %611 = vrot.lane.b32.xlu0 %v609, 64
    %v612 = vpop.permute.xlu0 %611
    %v614 = vmul.f32 %v596, %v612
    %616 = vrot.lane.b32.xlu0 %v444, 32
    %v617 = vpop.permute.xlu0 %616
    %v618 = vsel %vm102, %v617, 0
    %620 = vmatprep.subr.mxu0 0.0
    %621 = vmatpush1.msra.mxu0 %v83
    %622 = vmatprep.subr.mxu0 0.0
    %623 = vmatpush1.msra.mxu0 %v84
    %624 = vmatprep.subr.mxu0 0.0
    %625 = vmatpush1.msra.mxu0 %v85
    %626 = vmatprep.subr.mxu0 0.0
    %627 = vmatpush1.msra.mxu0 %v86
    %628 = vmatprep.subr.mxu0 0.0
    %629 = vmatpush1.msra.mxu0 0.0
    %630 = vmatprep.subr.mxu0 0.0
    %631 = vmatpush1.msra.mxu0 0.0
    %632 = vmatprep.subr.mxu0 0.0
    %633 = vmatpush1.msra.mxu0 0.0
    %634 = vmatprep.subr.mxu0 0.0
    %635 = vmatpush1.msra.mxu0 0.0
    %636 = vmatprep.subr.mxu0 0.0
    %637 = vmatpush1.msra.mxu0 0.0
    %638 = vmatprep.subr.mxu0 0.0
    %639 = vmatpush1.msra.mxu0 0.0
    %640 = vmatprep.subr.mxu0 0.0
    %641 = vmatpush1.msra.mxu0 0.0
    %642 = vmatprep.subr.mxu0 0.0
    %643 = vmatpush1.msra.mxu0 0.0
    %644 = vmatprep.subr.mxu0 0.0
    %645 = vmatpush1.msra.mxu0 0.0
    %646 = vmatprep.subr.mxu0 0.0
    %647 = vmatpush1.msra.mxu0 0.0
    %648 = vmatprep.subr.mxu0 0.0
    %649 = vmatpush1.msra.mxu0 0.0
    %650 = vmatprep.subr.mxu0 0.0
    %651 = vmatpush1.msra.mxu0 0.0
    %652 = vmatprep.subr.mxu0 0.0
    %653 = vmatpush1.msra.mxu0 0.0
    %654 = vmatprep.subr.mxu0 0.0
    %655 = vmatpush1.msra.mxu0 0.0
    %656 = vmatprep.subr.mxu0 0.0
    %657 = vmatpush1.msra.mxu0 0.0
    %658 = vmatprep.subr.mxu0 0.0
    %659 = vmatpush1.msra.mxu0 0.0
    %660 = vmatprep.subr.mxu0 0.0
    %661 = vmatpush1.msra.mxu0 0.0
    %662 = vmatprep.subr.mxu0 0.0
    %663 = vmatpush1.msra.mxu0 0.0
    %664 = vmatprep.subr.mxu0 0.0
    %665 = vmatpush1.msra.mxu0 0.0
    %666 = vmatprep.subr.mxu0 0.0
    %667 = vmatpush1.msra.mxu0 0.0
    %668 = vmatprep.subr.mxu0 0.0
    %669 = vmatpush1.msra.mxu0 0.0
    %670 = vmatprep.subr.mxu0 0.0
    %671 = vmatpush1.msra.mxu0 0.0
    %672 = vmatprep.subr.mxu0 0.0
    %673 = vmatpush1.msra.mxu0 0.0
    %674 = vmatprep.subr.mxu0 0.0
    %675 = vmatpush1.msra.mxu0 0.0
    %676 = vmatprep.subr.mxu0 0.0
    %677 = vmatpush1.msra.mxu0 0.0
    %678 = vmatprep.subr.mxu0 0.0
    %679 = vmatpush1.msra.mxu0 0.0
    %680 = vmatprep.subr.mxu0 0.0
    %681 = vmatpush1.msra.mxu0 0.0
    %682 = vmatprep.subr.mxu0 0.0
    %683 = vmatpush1.msra.mxu0 0.0
    %684 = vmatprep.mubr.f32.mxu0 0.0
    %685 = vmatmul.mubr.f32.gmra.mrb[0].mxu0 %v618
    %v686 = vpop.f32.mrb[0].mxu0
    %v687 = vadd.f32 0.0, %v686
    %v688 = vpop.f32.mrb[0].mxu0
    %689 = vdwg.mxu0
    %691 = vrot.lane.b32.xlu0 %v614, 32
    %v692 = vpop.permute.xlu0 %691
    %v693 = vsel %vm102, %v692, 0
    %695 = vmatprep.subr.mxu0 0.0
    %696 = vmatpush1.msra.mxu0 %v75
    %697 = vmatprep.subr.mxu0 0.0
    %698 = vmatpush1.msra.mxu0 %v76
    %699 = vmatprep.subr.mxu0 0.0
    %700 = vmatpush1.msra.mxu0 %v77
    %701 = vmatprep.subr.mxu0 0.0
    %702 = vmatpush1.msra.mxu0 %v78
    %703 = vmatprep.subr.mxu0 0.0
    %704 = vmatpush1.msra.mxu0 0.0
    %705 = vmatprep.subr.mxu0 0.0
    %706 = vmatpush1.msra.mxu0 0.0
    %707 = vmatprep.subr.mxu0 0.0
    %708 = vmatpush1.msra.mxu0 0.0
    %709 = vmatprep.subr.mxu0 0.0
    %710 = vmatpush1.msra.mxu0 0.0
    %711 = vmatprep.subr.mxu0 0.0
    %712 = vmatpush1.msra.mxu0 0.0
    %713 = vmatprep.subr.mxu0 0.0
    %714 = vmatpush1.msra.mxu0 0.0
    %715 = vmatprep.subr.mxu0 0.0
    %716 = vmatpush1.msra.mxu0 0.0
    %717 = vmatprep.subr.mxu0 0.0
    %718 = vmatpush1.msra.mxu0 0.0
    %719 = vmatprep.subr.mxu0 0.0
    %720 = vmatpush1.msra.mxu0 0.0
    %721 = vmatprep.subr.mxu0 0.0
    %722 = vmatpush1.msra.mxu0 0.0
    %723 = vmatprep.subr.mxu0 0.0
    %724 = vmatpush1.msra.mxu0 0.0
    %725 = vmatprep.subr.mxu0 0.0
    %726 = vmatpush1.msra.mxu0 0.0
    %727 = vmatprep.subr.mxu0 0.0
    %728 = vmatpush1.msra.mxu0 0.0
    %729 = vmatprep.subr.mxu0 0.0
    %730 = vmatpush1.msra.mxu0 0.0
    %731 = vmatprep.subr.mxu0 0.0
    %732 = vmatpush1.msra.mxu0 0.0
    %733 = vmatprep.subr.mxu0 0.0
    %734 = vmatpush1.msra.mxu0 0.0
    %735 = vmatprep.subr.mxu0 0.0
    %736 = vmatpush1.msra.mxu0 0.0
    %737 = vmatprep.subr.mxu0 0.0
    %738 = vmatpush1.msra.mxu0 0.0
    %739 = vmatprep.subr.mxu0 0.0
    %740 = vmatpush1.msra.mxu0 0.0
    %741 = vmatprep.subr.mxu0 0.0
    %742 = vmatpush1.msra.mxu0 0.0
    %743 = vmatprep.subr.mxu0 0.0
    %744 = vmatpush1.msra.mxu0 0.0
    %745 = vmatprep.subr.mxu0 0.0
    %746 = vmatpush1.msra.mxu0 0.0
    %747 = vmatprep.subr.mxu0 0.0
    %748 = vmatpush1.msra.mxu0 0.0
    %749 = vmatprep.subr.mxu0 0.0
    %750 = vmatpush1.msra.mxu0 0.0
    %751 = vmatprep.subr.mxu0 0.0
    %752 = vmatpush1.msra.mxu0 0.0
    %753 = vmatprep.subr.mxu0 0.0
    %754 = vmatpush1.msra.mxu0 0.0
    %755 = vmatprep.subr.mxu0 0.0
    %756 = vmatpush1.msra.mxu0 0.0
    %757 = vmatprep.subr.mxu0 0.0
    %758 = vmatpush1.msra.mxu0 0.0
    %759 = vmatprep.mubr.f32.mxu0 0.0
    %760 = vmatmul.mubr.f32.gmra.mrb[0].mxu0 %v693
    %v761 = vpop.f32.mrb[0].mxu0
    %v762 = vadd.f32 %v687, %v761
    %v763 = vpop.f32.mrb[0].mxu0
    %764 = vdwg.mxu0
    %v765 = vadd.f32 %v762, %v99
    %v766 = vxor.u32 %v765, 2147483648
    %v767 = vmul.f32 %v766, 1.442695
    %v768 = vpow.pop %v767
    %v769 = vadd.f32 %v768, 1.0
    %v770 = vrcp.pop %v769
    %v771 = vmul.f32 1.0, %v770
    %v772 = vtanh.pop %v765
    %v773 = vmul.f32 %v771, %v438
    %775 = vrot.lane.b32.xlu0 %v772, 64
    %v776 = vpop.permute.xlu0 %775
    %v778 = vmul.f32 %v771, %v776
    %780 = vrot.lane.b32.xlu0 %v778, 32
    %v781 = vpop.permute.xlu0 %780
    %v783 = vadd.f32 %v773, %v781
    %v784 = vtanh.pop %v783
    %786 = vrot.lane.b32.xlu0 %v784, 64
    %v787 = vpop.permute.xlu0 %786
    %v789 = vmul.f32 %v771, %v787
    %s790 = scalar_lea.vmem %s0, 4
    %v791 = vld [vmem:[%s790] sm:$0x3]
    %792 = vmatprep.subr.mxu0 0.0
    %793 = vmatpush1.msra.mxu0 %v79
    %794 = vmatprep.subr.mxu0 0.0
    %795 = vmatpush1.msra.mxu0 %v80
    %796 = vmatprep.subr.mxu0 0.0
    %797 = vmatpush1.msra.mxu0 %v81
    %798 = vmatprep.subr.mxu0 0.0
    %799 = vmatpush1.msra.mxu0 %v82
    %800 = vmatprep.subr.mxu0 0.0
    %801 = vmatpush1.msra.mxu0 0.0
    %802 = vmatprep.subr.mxu0 0.0
    %803 = vmatpush1.msra.mxu0 0.0
    %804 = vmatprep.subr.mxu0 0.0
    %805 = vmatpush1.msra.mxu0 0.0
    %806 = vmatprep.subr.mxu0 0.0
    %807 = vmatpush1.msra.mxu0 0.0
    %808 = vmatprep.subr.mxu0 0.0
    %809 = vmatpush1.msra.mxu0 0.0
    %810 = vmatprep.subr.mxu0 0.0
    %811 = vmatpush1.msra.mxu0 0.0
    %812 = vmatprep.subr.mxu0 0.0
    %813 = vmatpush1.msra.mxu0 0.0
    %814 = vmatprep.subr.mxu0 0.0
    %815 = vmatpush1.msra.mxu0 0.0
    %816 = vmatprep.subr.mxu0 0.0
    %817 = vmatpush1.msra.mxu0 0.0
    %818 = vmatprep.subr.mxu0 0.0
    %819 = vmatpush1.msra.mxu0 0.0
    %820 = vmatprep.subr.mxu0 0.0
    %821 = vmatpush1.msra.mxu0 0.0
    %822 = vmatprep.subr.mxu0 0.0
    %823 = vmatpush1.msra.mxu0 0.0
    %824 = vmatprep.subr.mxu0 0.0
    %825 = vmatpush1.msra.mxu0 0.0
    %826 = vmatprep.subr.mxu0 0.0
    %827 = vmatpush1.msra.mxu0 0.0
    %828 = vmatprep.subr.mxu0 0.0
    %829 = vmatpush1.msra.mxu0 0.0
    %830 = vmatprep.subr.mxu0 0.0
    %831 = vmatpush1.msra.mxu0 0.0
    %832 = vmatprep.subr.mxu0 0.0
    %833 = vmatpush1.msra.mxu0 0.0
    %834 = vmatprep.subr.mxu0 0.0
    %835 = vmatpush1.msra.mxu0 0.0
    %836 = vmatprep.subr.mxu0 0.0
    %837 = vmatpush1.msra.mxu0 0.0
    %838 = vmatprep.subr.mxu0 0.0
    %839 = vmatpush1.msra.mxu0 0.0
    %840 = vmatprep.subr.mxu0 0.0
    %841 = vmatpush1.msra.mxu0 0.0
    %842 = vmatprep.subr.mxu0 0.0
    %843 = vmatpush1.msra.mxu0 0.0
    %844 = vmatprep.subr.mxu0 0.0
    %845 = vmatpush1.msra.mxu0 0.0
    %846 = vmatprep.subr.mxu0 0.0
    %847 = vmatpush1.msra.mxu0 0.0
    %848 = vmatprep.subr.mxu0 0.0
    %849 = vmatpush1.msra.mxu0 0.0
    %850 = vmatprep.subr.mxu0 0.0
    %851 = vmatpush1.msra.mxu0 0.0
    %852 = vmatprep.subr.mxu0 0.0
    %853 = vmatpush1.msra.mxu0 0.0
    %854 = vmatprep.subr.mxu0 0.0
    %855 = vmatpush1.msra.mxu0 0.0
    %856 = vmatprep.mubr.f32.mxu0 0.0
    %857 = vmatmul.mubr.f32.gmra.mrb[0].mxu0 %v693
    %v858 = vpop.f32.mrb[0].mxu0
    %v859 = vadd.f32 0.0, %v858
    %v860 = vpop.f32.mrb[0].mxu0
    %861 = vdwg.mxu0
    %v863 = vsel %vm176, %v791, 0
    %865 = vmatprep.subr.mxu0 0.0
    %866 = vmatpush1.msra.mxu0 %v74
    %867 = vmatprep.subr.mxu0 0.0
    %868 = vmatpush1.msra.mxu0 0.0
    %869 = vmatprep.subr.mxu0 0.0
    %870 = vmatpush1.msra.mxu0 0.0
    %871 = vmatprep.subr.mxu0 0.0
    %872 = vmatpush1.msra.mxu0 0.0
    %873 = vmatprep.subr.mxu0 0.0
    %874 = vmatpush1.msra.mxu0 0.0
    %875 = vmatprep.subr.mxu0 0.0
    %876 = vmatpush1.msra.mxu0 0.0
    %877 = vmatprep.subr.mxu0 0.0
    %878 = vmatpush1.msra.mxu0 0.0
    %879 = vmatprep.subr.mxu0 0.0
    %880 = vmatpush1.msra.mxu0 0.0
    %881 = vmatprep.subr.mxu0 0.0
    %882 = vmatpush1.msra.mxu0 0.0
    %883 = vmatprep.subr.mxu0 0.0
    %884 = vmatpush1.msra.mxu0 0.0
    %885 = vmatprep.subr.mxu0 0.0
    %886 = vmatpush1.msra.mxu0 0.0
    %887 = vmatprep.subr.mxu0 0.0
    %888 = vmatpush1.msra.mxu0 0.0
    %889 = vmatprep.subr.mxu0 0.0
    %890 = vmatpush1.msra.mxu0 0.0
    %891 = vmatprep.subr.mxu0 0.0
    %892 = vmatpush1.msra.mxu0 0.0
    %893 = vmatprep.subr.mxu0 0.0
    %894 = vmatpush1.msra.mxu0 0.0
    %895 = vmatprep.subr.mxu0 0.0
    %896 = vmatpush1.msra.mxu0 0.0
    %897 = vmatprep.subr.mxu0 0.0
    %898 = vmatpush1.msra.mxu0 0.0
    %899 = vmatprep.subr.mxu0 0.0
    %900 = vmatpush1.msra.mxu0 0.0
    %901 = vmatprep.subr.mxu0 0.0
    %902 = vmatpush1.msra.mxu0 0.0
    %903 = vmatprep.subr.mxu0 0.0
    %904 = vmatpush1.msra.mxu0 0.0
    %905 = vmatprep.subr.mxu0 0.0
    %906 = vmatpush1.msra.mxu0 0.0
    %907 = vmatprep.subr.mxu0 0.0
    %908 = vmatpush1.msra.mxu0 0.0
    %909 = vmatprep.subr.mxu0 0.0
    %910 = vmatpush1.msra.mxu0 0.0
    %911 = vmatprep.subr.mxu0 0.0
    %912 = vmatpush1.msra.mxu0 0.0
    %913 = vmatprep.subr.mxu0 0.0
    %914 = vmatpush1.msra.mxu0 0.0
    %915 = vmatprep.subr.mxu0 0.0
    %916 = vmatpush1.msra.mxu0 0.0
    %917 = vmatprep.subr.mxu0 0.0
    %918 = vmatpush1.msra.mxu0 0.0
    %919 = vmatprep.subr.mxu0 0.0
    %920 = vmatpush1.msra.mxu0 0.0
    %921 = vmatprep.subr.mxu0 0.0
    %922 = vmatpush1.msra.mxu0 0.0
    %923 = vmatprep.subr.mxu0 0.0
    %924 = vmatpush1.msra.mxu0 0.0
    %925 = vmatprep.subr.mxu0 0.0
    %926 = vmatpush1.msra.mxu0 0.0
    %927 = vmatprep.subr.mxu0 0.0
    %928 = vmatpush1.msra.mxu0 0.0
    %929 = vmatprep.mubr.f32.mxu0 0.0
    %930 = vmatmul.mubr.f32.gmra.mrb[0].mxu0 %v863
    %v931 = vpop.f32.mrb[0].mxu0
    %v932 = vadd.f32 %v859, %v931
    %v933 = vpop.f32.mrb[0].mxu0
    %934 = vdwg.mxu0
    %v935 = vadd.f32 %v932, %v92
    %v936 = vxor.u32 %v935, 2147483648
    %v937 = vmul.f32 %v936, 1.442695
    %v938 = vpow.pop %v937
    %v939 = vadd.f32 %v938, 1.0
    %v940 = vrcp.pop %v939
    %v941 = vmul.f32 1.0, %v940
    %v942 = vtanh.pop %v935
    %v943 = vmul.f32 %v941, %v608
    %945 = vrot.lane.b32.xlu0 %v942, 64
    %v946 = vpop.permute.xlu0 %945
    %v948 = vmul.f32 %v941, %v946
    %950 = vrot.lane.b32.xlu0 %v948, 32
    %v951 = vpop.permute.xlu0 %950
    %v953 = vadd.f32 %v943, %v951
    %v954 = vtanh.pop %v953
    %956 = vrot.lane.b32.xlu0 %v954, 64
    %v957 = vpop.permute.xlu0 %956
    %v959 = vmul.f32 %v941, %v957
    %961 = vrot.lane.b32.xlu0 %v789, 32
    %v962 = vpop.permute.xlu0 %961
    %v963 = vsel %vm102, %v962, 0
    %965 = vmatprep.subr.mxu0 0.0
    %966 = vmatpush1.msra.mxu0 %v83
    %967 = vmatprep.subr.mxu0 0.0
    %968 = vmatpush1.msra.mxu0 %v84
    %969 = vmatprep.subr.mxu0 0.0
    %970 = vmatpush1.msra.mxu0 %v85
    %971 = vmatprep.subr.mxu0 0.0
    %972 = vmatpush1.msra.mxu0 %v86
    %973 = vmatprep.subr.mxu0 0.0
    %974 = vmatpush1.msra.mxu0 0.0
    %975 = vmatprep.subr.mxu0 0.0
    %976 = vmatpush1.msra.mxu0 0.0
    %977 = vmatprep.subr.mxu0 0.0
    %978 = vmatpush1.msra.mxu0 0.0
    %979 = vmatprep.subr.mxu0 0.0
    %980 = vmatpush1.msra.mxu0 0.0
    %981 = vmatprep.subr.mxu0 0.0
    %982 = vmatpush1.msra.mxu0 0.0
    %983 = vmatprep.subr.mxu0 0.0
    %984 = vmatpush1.msra.mxu0 0.0
    %985 = vmatprep.subr.mxu0 0.0
    %986 = vmatpush1.msra.mxu0 0.0
    %987 = vmatprep.subr.mxu0 0.0
    %988 = vmatpush1.msra.mxu0 0.0
    %989 = vmatprep.subr.mxu0 0.0
    %990 = vmatpush1.msra.mxu0 0.0
    %991 = vmatprep.subr.mxu0 0.0
    %992 = vmatpush1.msra.mxu0 0.0
    %993 = vmatprep.subr.mxu0 0.0
    %994 = vmatpush1.msra.mxu0 0.0
    %995 = vmatprep.subr.mxu0 0.0
    %996 = vmatpush1.msra.mxu0 0.0
    %997 = vmatprep.subr.mxu0 0.0
    %998 = vmatpush1.msra.mxu0 0.0
    %999 = vmatprep.subr.mxu0 0.0
    %1000 = vmatpush1.msra.mxu0 0.0
    %1001 = vmatprep.subr.mxu0 0.0
    %1002 = vmatpush1.msra.mxu0 0.0
    %1003 = vmatprep.subr.mxu0 0.0
    %1004 = vmatpush1.msra.mxu0 0.0
    %1005 = vmatprep.subr.mxu0 0.0
    %1006 = vmatpush1.msra.mxu0 0.0
    %1007 = vmatprep.subr.mxu0 0.0
    %1008 = vmatpush1.msra.mxu0 0.0
    %1009 = vmatprep.subr.mxu0 0.0
    %1010 = vmatpush1.msra.mxu0 0.0
    %1011 = vmatprep.subr.mxu0 0.0
    %1012 = vmatpush1.msra.mxu0 0.0
    %1013 = vmatprep.subr.mxu0 0.0
    %1014 = vmatpush1.msra.mxu0 0.0
    %1015 = vmatprep.subr.mxu0 0.0
    %1016 = vmatpush1.msra.mxu0 0.0
    %1017 = vmatprep.subr.mxu0 0.0
    %1018 = vmatpush1.msra.mxu0 0.0
    %1019 = vmatprep.subr.mxu0 0.0
    %1020 = vmatpush1.msra.mxu0 0.0
    %1021 = vmatprep.subr.mxu0 0.0
    %1022 = vmatpush1.msra.mxu0 0.0
    %1023 = vmatprep.subr.mxu0 0.0
    %1024 = vmatpush1.msra.mxu0 0.0
    %1025 = vmatprep.subr.mxu0 0.0
    %1026 = vmatpush1.msra.mxu0 0.0
    %1027 = vmatprep.subr.mxu0 0.0
    %1028 = vmatpush1.msra.mxu0 0.0
    %1029 = vmatprep.mubr.f32.mxu0 0.0
    %1030 = vmatmul.mubr.f32.gmra.mrb[0].mxu0 %v963
    %v1031 = vpop.f32.mrb[0].mxu0
    %v1032 = vadd.f32 0.0, %v1031
    %v1033 = vpop.f32.mrb[0].mxu0
    %1034 = vdwg.mxu0
    %1036 = vrot.lane.b32.xlu0 %v959, 32
    %v1037 = vpop.permute.xlu0 %1036
    %v1038 = vsel %vm102, %v1037, 0
    %1040 = vmatprep.subr.mxu0 0.0
    %1041 = vmatpush1.msra.mxu0 %v75
    %1042 = vmatprep.subr.mxu0 0.0
    %1043 = vmatpush1.msra.mxu0 %v76
    %1044 = vmatprep.subr.mxu0 0.0
    %1045 = vmatpush1.msra.mxu0 %v77
    %1046 = vmatprep.subr.mxu0 0.0
    %1047 = vmatpush1.msra.mxu0 %v78
    %1048 = vmatprep.subr.mxu0 0.0
    %1049 = vmatpush1.msra.mxu0 0.0
    %1050 = vmatprep.subr.mxu0 0.0
    %1051 = vmatpush1.msra.mxu0 0.0
    %1052 = vmatprep.subr.mxu0 0.0
    %1053 = vmatpush1.msra.mxu0 0.0
    %1054 = vmatprep.subr.mxu0 0.0
    %1055 = vmatpush1.msra.mxu0 0.0
    %1056 = vmatprep.subr.mxu0 0.0
    %1057 = vmatpush1.msra.mxu0 0.0
    %1058 = vmatprep.subr.mxu0 0.0
    %1059 = vmatpush1.msra.mxu0 0.0
    %1060 = vmatprep.subr.mxu0 0.0
    %1061 = vmatpush1.msra.mxu0 0.0
    %1062 = vmatprep.subr.mxu0 0.0
    %1063 = vmatpush1.msra.mxu0 0.0
    %1064 = vmatprep.subr.mxu0 0.0
    %1065 = vmatpush1.msra.mxu0 0.0
    %1066 = vmatprep.subr.mxu0 0.0
    %1067 = vmatpush1.msra.mxu0 0.0
    %1068 = vmatprep.subr.mxu0 0.0
    %1069 = vmatpush1.msra.mxu0 0.0
    %1070 = vmatprep.subr.mxu0 0.0
    %1071 = vmatpush1.msra.mxu0 0.0
    %1072 = vmatprep.subr.mxu0 0.0
    %1073 = vmatpush1.msra.mxu0 0.0
    %1074 = vmatprep.subr.mxu0 0.0
    %1075 = vmatpush1.msra.mxu0 0.0
    %1076 = vmatprep.subr.mxu0 0.0
    %1077 = vmatpush1.msra.mxu0 0.0
    %1078 = vmatprep.subr.mxu0 0.0
    %1079 = vmatpush1.msra.mxu0 0.0
    %1080 = vmatprep.subr.mxu0 0.0
    %1081 = vmatpush1.msra.mxu0 0.0
    %1082 = vmatprep.subr.mxu0 0.0
    %1083 = vmatpush1.msra.mxu0 0.0
    %1084 = vmatprep.subr.mxu0 0.0
    %1085 = vmatpush1.msra.mxu0 0.0
    %1086 = vmatprep.subr.mxu0 0.0
    %1087 = vmatpush1.msra.mxu0 0.0
    %1088 = vmatprep.subr.mxu0 0.0
    %1089 = vmatpush1.msra.mxu0 0.0
    %1090 = vmatprep.subr.mxu0 0.0
    %1091 = vmatpush1.msra.mxu0 0.0
    %1092 = vmatprep.subr.mxu0 0.0
    %1093 = vmatpush1.msra.mxu0 0.0
    %1094 = vmatprep.subr.mxu0 0.0
    %1095 = vmatpush1.msra.mxu0 0.0
    %1096 = vmatprep.subr.mxu0 0.0
    %1097 = vmatpush1.msra.mxu0 0.0
    %1098 = vmatprep.subr.mxu0 0.0
    %1099 = vmatpush1.msra.mxu0 0.0
    %1100 = vmatprep.subr.mxu0 0.0
    %1101 = vmatpush1.msra.mxu0 0.0
    %1102 = vmatprep.subr.mxu0 0.0
    %1103 = vmatpush1.msra.mxu0 0.0
    %1104 = vmatprep.mubr.f32.mxu0 0.0
    %1105 = vmatmul.mubr.f32.gmra.mrb[0].mxu0 %v1038
    %v1106 = vpop.f32.mrb[0].mxu0
    %v1107 = vadd.f32 %v1032, %v1106
    %v1108 = vpop.f32.mrb[0].mxu0
    %1109 = vdwg.mxu0
    %v1110 = vadd.f32 %v1107, %v99
    %v1111 = vxor.u32 %v1110, 2147483648
    %v1112 = vmul.f32 %v1111, 1.442695
    %v1113 = vpow.pop %v1112
    %v1114 = vadd.f32 %v1113, 1.0
    %v1115 = vrcp.pop %v1114
    %v1116 = vmul.f32 1.0, %v1115
    %v1117 = vtanh.pop %v1110
    %v1118 = vmul.f32 %v1116, %v783
    %1120 = vrot.lane.b32.xlu0 %v1117, 64
    %v1121 = vpop.permute.xlu0 %1120
    %v1123 = vmul.f32 %v1116, %v1121
    %1125 = vrot.lane.b32.xlu0 %v1123, 32
    %v1126 = vpop.permute.xlu0 %1125
    %v1128 = vadd.f32 %v1118, %v1126
    %v1129 = vtanh.pop %v1128
    %1131 = vrot.lane.b32.xlu0 %v1129, 64
    %v1132 = vpop.permute.xlu0 %1131
    %v1134 = vmul.f32 %v1116, %v1132
    %s1135 = scalar_lea.vmem %s0, 6
    %v1136 = vld [vmem:[%s1135] sm:$0x3]
    %1137 = vmatprep.subr.mxu0 0.0
    %1138 = vmatpush1.msra.mxu0 %v79
    %1139 = vmatprep.subr.mxu0 0.0
    %1140 = vmatpush1.msra.mxu0 %v80
    %1141 = vmatprep.subr.mxu0 0.0
    %1142 = vmatpush1.msra.mxu0 %v81
    %1143 = vmatprep.subr.mxu0 0.0
    %1144 = vmatpush1.msra.mxu0 %v82
    %1145 = vmatprep.subr.mxu0 0.0
    %1146 = vmatpush1.msra.mxu0 0.0
    %1147 = vmatprep.subr.mxu0 0.0
    %1148 = vmatpush1.msra.mxu0 0.0
    %1149 = vmatprep.subr.mxu0 0.0
    %1150 = vmatpush1.msra.mxu0 0.0
    %1151 = vmatprep.subr.mxu0 0.0
    %1152 = vmatpush1.msra.mxu0 0.0
    %1153 = vmatprep.subr.mxu0 0.0
    %1154 = vmatpush1.msra.mxu0 0.0
    %1155 = vmatprep.subr.mxu0 0.0
    %1156 = vmatpush1.msra.mxu0 0.0
    %1157 = vmatprep.subr.mxu0 0.0
    %1158 = vmatpush1.msra.mxu0 0.0
    %1159 = vmatprep.subr.mxu0 0.0
    %1160 = vmatpush1.msra.mxu0 0.0
    %1161 = vmatprep.subr.mxu0 0.0
    %1162 = vmatpush1.msra.mxu0 0.0
    %1163 = vmatprep.subr.mxu0 0.0
    %1164 = vmatpush1.msra.mxu0 0.0
    %1165 = vmatprep.subr.mxu0 0.0
    %1166 = vmatpush1.msra.mxu0 0.0
    %1167 = vmatprep.subr.mxu0 0.0
    %1168 = vmatpush1.msra.mxu0 0.0
    %1169 = vmatprep.subr.mxu0 0.0
    %1170 = vmatpush1.msra.mxu0 0.0
    %1171 = vmatprep.subr.mxu0 0.0
    %1172 = vmatpush1.msra.mxu0 0.0
    %1173 = vmatprep.subr.mxu0 0.0
    %1174 = vmatpush1.msra.mxu0 0.0
    %1175 = vmatprep.subr.mxu0 0.0
    %1176 = vmatpush1.msra.mxu0 0.0
    %1177 = vmatprep.subr.mxu0 0.0
    %1178 = vmatpush1.msra.mxu0 0.0
    %1179 = vmatprep.subr.mxu0 0.0
    %1180 = vmatpush1.msra.mxu0 0.0
    %1181 = vmatprep.subr.mxu0 0.0
    %1182 = vmatpush1.msra.mxu0 0.0
    %1183 = vmatprep.subr.mxu0 0.0
    %1184 = vmatpush1.msra.mxu0 0.0
    %1185 = vmatprep.subr.mxu0 0.0
    %1186 = vmatpush1.msra.mxu0 0.0
    %1187 = vmatprep.subr.mxu0 0.0
    %1188 = vmatpush1.msra.mxu0 0.0
    %1189 = vmatprep.subr.mxu0 0.0
    %1190 = vmatpush1.msra.mxu0 0.0
    %1191 = vmatprep.subr.mxu0 0.0
    %1192 = vmatpush1.msra.mxu0 0.0
    %1193 = vmatprep.subr.mxu0 0.0
    %1194 = vmatpush1.msra.mxu0 0.0
    %1195 = vmatprep.subr.mxu0 0.0
    %1196 = vmatpush1.msra.mxu0 0.0
    %1197 = vmatprep.subr.mxu0 0.0
    %1198 = vmatpush1.msra.mxu0 0.0
    %1199 = vmatprep.subr.mxu0 0.0
    %1200 = vmatpush1.msra.mxu0 0.0
    %1201 = vmatprep.mubr.f32.mxu0 0.0
    %1202 = vmatmul.mubr.f32.gmra.mrb[0].mxu0 %v1038
    %v1203 = vpop.f32.mrb[0].mxu0
    %v1204 = vadd.f32 0.0, %v1203
    %v1205 = vpop.f32.mrb[0].mxu0
    %1206 = vdwg.mxu0
    %v1208 = vsel %vm176, %v1136, 0
    %1210 = vmatprep.subr.mxu0 0.0
    %1211 = vmatpush1.msra.mxu0 %v74
    %1212 = vmatprep.subr.mxu0 0.0
    %1213 = vmatpush1.msra.mxu0 0.0
    %1214 = vmatprep.subr.mxu0 0.0
    %1215 = vmatpush1.msra.mxu0 0.0
    %1216 = vmatprep.subr.mxu0 0.0
    %1217 = vmatpush1.msra.mxu0 0.0
    %1218 = vmatprep.subr.mxu0 0.0
    %1219 = vmatpush1.msra.mxu0 0.0
    %1220 = vmatprep.subr.mxu0 0.0
    %1221 = vmatpush1.msra.mxu0 0.0
    %1222 = vmatprep.subr.mxu0 0.0
    %1223 = vmatpush1.msra.mxu0 0.0
    %1224 = vmatprep.subr.mxu0 0.0
    %1225 = vmatpush1.msra.mxu0 0.0
    %1226 = vmatprep.subr.mxu0 0.0
    %1227 = vmatpush1.msra.mxu0 0.0
    %1228 = vmatprep.subr.mxu0 0.0
    %1229 = vmatpush1.msra.mxu0 0.0
    %1230 = vmatprep.subr.mxu0 0.0
    %1231 = vmatpush1.msra.mxu0 0.0
    %1232 = vmatprep.subr.mxu0 0.0
    %1233 = vmatpush1.msra.mxu0 0.0
    %1234 = vmatprep.subr.mxu0 0.0
    %1235 = vmatpush1.msra.mxu0 0.0
    %1236 = vmatprep.subr.mxu0 0.0
    %1237 = vmatpush1.msra.mxu0 0.0
    %1238 = vmatprep.subr.mxu0 0.0
    %1239 = vmatpush1.msra.mxu0 0.0
    %1240 = vmatprep.subr.mxu0 0.0
    %1241 = vmatpush1.msra.mxu0 0.0
    %1242 = vmatprep.subr.mxu0 0.0
    %1243 = vmatpush1.msra.mxu0 0.0
    %1244 = vmatprep.subr.mxu0 0.0
    %1245 = vmatpush1.msra.mxu0 0.0
    %1246 = vmatprep.subr.mxu0 0.0
    %1247 = vmatpush1.msra.mxu0 0.0
    %1248 = vmatprep.subr.mxu0 0.0
    %1249 = vmatpush1.msra.mxu0 0.0
    %1250 = vmatprep.subr.mxu0 0.0
    %1251 = vmatpush1.msra.mxu0 0.0
    %1252 = vmatprep.subr.mxu0 0.0
    %1253 = vmatpush1.msra.mxu0 0.0
    %1254 = vmatprep.subr.mxu0 0.0
    %1255 = vmatpush1.msra.mxu0 0.0
    %1256 = vmatprep.subr.mxu0 0.0
    %1257 = vmatpush1.msra.mxu0 0.0
    %1258 = vmatprep.subr.mxu0 0.0
    %1259 = vmatpush1.msra.mxu0 0.0
    %1260 = vmatprep.subr.mxu0 0.0
    %1261 = vmatpush1.msra.mxu0 0.0
    %1262 = vmatprep.subr.mxu0 0.0
    %1263 = vmatpush1.msra.mxu0 0.0
    %1264 = vmatprep.subr.mxu0 0.0
    %1265 = vmatpush1.msra.mxu0 0.0
    %1266 = vmatprep.subr.mxu0 0.0
    %1267 = vmatpush1.msra.mxu0 0.0
    %1268 = vmatprep.subr.mxu0 0.0
    %1269 = vmatpush1.msra.mxu0 0.0
    %1270 = vmatprep.subr.mxu0 0.0
    %1271 = vmatpush1.msra.mxu0 0.0
    %1272 = vmatprep.subr.mxu0 0.0
    %1273 = vmatpush1.msra.mxu0 0.0
    %1274 = vmatprep.mubr.f32.mxu0 0.0
    %1275 = vmatmul.mubr.f32.gmra.mrb[0].mxu0 %v1208
    %v1276 = vpop.f32.mrb[0].mxu0
    %v1277 = vadd.f32 %v1204, %v1276
    %v1278 = vpop.f32.mrb[0].mxu0
    %1279 = vdwg.mxu0
    %v1280 = vadd.f32 %v1277, %v92
    %v1281 = vxor.u32 %v1280, 2147483648
    %v1282 = vmul.f32 %v1281, 1.442695
    %v1283 = vpow.pop %v1282
    %v1284 = vadd.f32 %v1283, 1.0
    %v1285 = vrcp.pop %v1284
    %v1286 = vmul.f32 1.0, %v1285
    %v1287 = vtanh.pop %v1280
    %v1288 = vmul.f32 %v1286, %v953
    %1290 = vrot.lane.b32.xlu0 %v1287, 64
    %v1291 = vpop.permute.xlu0 %1290
    %v1293 = vmul.f32 %v1286, %v1291
    %1295 = vrot.lane.b32.xlu0 %v1293, 32
    %v1296 = vpop.permute.xlu0 %1295
    %v1298 = vadd.f32 %v1288, %v1296
    %v1299 = vtanh.pop %v1298
    %1301 = vrot.lane.b32.xlu0 %v1299, 64
    %v1302 = vpop.permute.xlu0 %1301
    %v1304 = vmul.f32 %v1286, %v1302
    %1306 = vrot.lane.b32.xlu0 %v1134, 32
    %v1307 = vpop.permute.xlu0 %1306
    %v1308 = vsel %vm102, %v1307, 0
    %1310 = vmatprep.subr.mxu0 0.0
    %1311 = vmatpush1.msra.mxu0 %v83
    %1312 = vmatprep.subr.mxu0 0.0
    %1313 = vmatpush1.msra.mxu0 %v84
    %1314 = vmatprep.subr.mxu0 0.0
    %1315 = vmatpush1.msra.mxu0 %v85
    %1316 = vmatprep.subr.mxu0 0.0
    %1317 = vmatpush1.msra.mxu0 %v86
    %1318 = vmatprep.subr.mxu0 0.0
    %1319 = vmatpush1.msra.mxu0 0.0
    %1320 = vmatprep.subr.mxu0 0.0
    %1321 = vmatpush1.msra.mxu0 0.0
    %1322 = vmatprep.subr.mxu0 0.0
    %1323 = vmatpush1.msra.mxu0 0.0
    %1324 = vmatprep.subr.mxu0 0.0
    %1325 = vmatpush1.msra.mxu0 0.0
    %1326 = vmatprep.subr.mxu0 0.0
    %1327 = vmatpush1.msra.mxu0 0.0
    %1328 = vmatprep.subr.mxu0 0.0
    %1329 = vmatpush1.msra.mxu0 0.0
    %1330 = vmatprep.subr.mxu0 0.0
    %1331 = vmatpush1.msra.mxu0 0.0
    %1332 = vmatprep.subr.mxu0 0.0
    %1333 = vmatpush1.msra.mxu0 0.0
    %1334 = vmatprep.subr.mxu0 0.0
    %1335 = vmatpush1.msra.mxu0 0.0
    %1336 = vmatprep.subr.mxu0 0.0
    %1337 = vmatpush1.msra.mxu0 0.0
    %1338 = vmatprep.subr.mxu0 0.0
    %1339 = vmatpush1.msra.mxu0 0.0
    %1340 = vmatprep.subr.mxu0 0.0
    %1341 = vmatpush1.msra.mxu0 0.0
    %1342 = vmatprep.subr.mxu0 0.0
    %1343 = vmatpush1.msra.mxu0 0.0
    %1344 = vmatprep.subr.mxu0 0.0
    %1345 = vmatpush1.msra.mxu0 0.0
    %1346 = vmatprep.subr.mxu0 0.0
    %1347 = vmatpush1.msra.mxu0 0.0
    %1348 = vmatprep.subr.mxu0 0.0
    %1349 = vmatpush1.msra.mxu0 0.0
    %1350 = vmatprep.subr.mxu0 0.0
    %1351 = vmatpush1.msra.mxu0 0.0
    %1352 = vmatprep.subr.mxu0 0.0
    %1353 = vmatpush1.msra.mxu0 0.0
    %1354 = vmatprep.subr.mxu0 0.0
    %1355 = vmatpush1.msra.mxu0 0.0
    %1356 = vmatprep.subr.mxu0 0.0
    %1357 = vmatpush1.msra.mxu0 0.0
    %1358 = vmatprep.subr.mxu0 0.0
    %1359 = vmatpush1.msra.mxu0 0.0
    %1360 = vmatprep.subr.mxu0 0.0
    %1361 = vmatpush1.msra.mxu0 0.0
    %1362 = vmatprep.subr.mxu0 0.0
    %1363 = vmatpush1.msra.mxu0 0.0
    %1364 = vmatprep.subr.mxu0 0.0
    %1365 = vmatpush1.msra.mxu0 0.0
    %1366 = vmatprep.subr.mxu0 0.0
    %1367 = vmatpush1.msra.mxu0 0.0
    %1368 = vmatprep.subr.mxu0 0.0
    %1369 = vmatpush1.msra.mxu0 0.0
    %1370 = vmatprep.subr.mxu0 0.0
    %1371 = vmatpush1.msra.mxu0 0.0
    %1372 = vmatprep.subr.mxu0 0.0
    %1373 = vmatpush1.msra.mxu0 0.0
    %1374 = vmatprep.mubr.f32.mxu0 0.0
    %1375 = vmatmul.mubr.f32.gmra.mrb[0].mxu0 %v1308
    %v1376 = vpop.f32.mrb[0].mxu0
    %v1377 = vadd.f32 0.0, %v1376
    %v1378 = vpop.f32.mrb[0].mxu0
    %1379 = vdwg.mxu0
    %1381 = vrot.lane.b32.xlu0 %v1304, 32
    %v1382 = vpop.permute.xlu0 %1381
    %v1383 = vsel %vm102, %v1382, 0
    %1385 = vmatprep.subr.mxu0 0.0
    %1386 = vmatpush1.msra.mxu0 %v75
    %1387 = vmatprep.subr.mxu0 0.0
    %1388 = vmatpush1.msra.mxu0 %v76
    %1389 = vmatprep.subr.mxu0 0.0
    %1390 = vmatpush1.msra.mxu0 %v77
    %1391 = vmatprep.subr.mxu0 0.0
    %1392 = vmatpush1.msra.mxu0 %v78
    %1393 = vmatprep.subr.mxu0 0.0
    %1394 = vmatpush1.msra.mxu0 0.0
    %1395 = vmatprep.subr.mxu0 0.0
    %1396 = vmatpush1.msra.mxu0 0.0
    %1397 = vmatprep.subr.mxu0 0.0
    %1398 = vmatpush1.msra.mxu0 0.0
    %1399 = vmatprep.subr.mxu0 0.0
    %1400 = vmatpush1.msra.mxu0 0.0
    %1401 = vmatprep.subr.mxu0 0.0
    %1402 = vmatpush1.msra.mxu0 0.0
    %1403 = vmatprep.subr.mxu0 0.0
    %1404 = vmatpush1.msra.mxu0 0.0
    %1405 = vmatprep.subr.mxu0 0.0
    %1406 = vmatpush1.msra.mxu0 0.0
    %1407 = vmatprep.subr.mxu0 0.0
    %1408 = vmatpush1.msra.mxu0 0.0
    %1409 = vmatprep.subr.mxu0 0.0
    %1410 = vmatpush1.msra.mxu0 0.0
    %1411 = vmatprep.subr.mxu0 0.0
    %1412 = vmatpush1.msra.mxu0 0.0
    %1413 = vmatprep.subr.mxu0 0.0
    %1414 = vmatpush1.msra.mxu0 0.0
    %1415 = vmatprep.subr.mxu0 0.0
    %1416 = vmatpush1.msra.mxu0 0.0
    %1417 = vmatprep.subr.mxu0 0.0
    %1418 = vmatpush1.msra.mxu0 0.0
    %1419 = vmatprep.subr.mxu0 0.0
    %1420 = vmatpush1.msra.mxu0 0.0
    %1421 = vmatprep.subr.mxu0 0.0
    %1422 = vmatpush1.msra.mxu0 0.0
    %1423 = vmatprep.subr.mxu0 0.0
    %1424 = vmatpush1.msra.mxu0 0.0
    %1425 = vmatprep.subr.mxu0 0.0
    %1426 = vmatpush1.msra.mxu0 0.0
    %1427 = vmatprep.subr.mxu0 0.0
    %1428 = vmatpush1.msra.mxu0 0.0
    %1429 = vmatprep.subr.mxu0 0.0
    %1430 = vmatpush1.msra.mxu0 0.0
    %1431 = vmatprep.subr.mxu0 0.0
    %1432 = vmatpush1.msra.mxu0 0.0
    %1433 = vmatprep.subr.mxu0 0.0
    %1434 = vmatpush1.msra.mxu0 0.0
    %1435 = vmatprep.subr.mxu0 0.0
    %1436 = vmatpush1.msra.mxu0 0.0
    %1437 = vmatprep.subr.mxu0 0.0
    %1438 = vmatpush1.msra.mxu0 0.0
    %1439 = vmatprep.subr.mxu0 0.0
    %1440 = vmatpush1.msra.mxu0 0.0
    %1441 = vmatprep.subr.mxu0 0.0
    %1442 = vmatpush1.msra.mxu0 0.0
    %1443 = vmatprep.subr.mxu0 0.0
    %1444 = vmatpush1.msra.mxu0 0.0
    %1445 = vmatprep.subr.mxu0 0.0
    %1446 = vmatpush1.msra.mxu0 0.0
    %1447 = vmatprep.subr.mxu0 0.0
    %1448 = vmatpush1.msra.mxu0 0.0
    %1449 = vmatprep.mubr.f32.mxu0 0.0
    %1450 = vmatmul.mubr.f32.gmra.mrb[0].mxu0 %v1383
    %v1451 = vpop.f32.mrb[0].mxu0
    %v1452 = vadd.f32 %v1377, %v1451
    %v1453 = vpop.f32.mrb[0].mxu0
    %1454 = vdwg.mxu0
    %v1455 = vadd.f32 %v1452, %v99
    %v1456 = vxor.u32 %v1455, 2147483648
    %v1457 = vmul.f32 %v1456, 1.442695
    %v1458 = vpow.pop %v1457
    %v1459 = vadd.f32 %v1458, 1.0
    %v1460 = vrcp.pop %v1459
    %v1461 = vmul.f32 1.0, %v1460
    %v1462 = vtanh.pop %v1455
    %v1463 = vmul.f32 %v1461, %v1128
    %1465 = vrot.lane.b32.xlu0 %v1462, 64
    %v1466 = vpop.permute.xlu0 %1465
    %v1468 = vmul.f32 %v1461, %v1466
    %1470 = vrot.lane.b32.xlu0 %v1468, 32
    %v1471 = vpop.permute.xlu0 %1470
    %v1473 = vadd.f32 %v1463, %v1471
    %v1474 = vtanh.pop %v1473
    %1476 = vrot.lane.b32.xlu0 %v1474, 64
    %v1477 = vpop.permute.xlu0 %1476
    %v1479 = vmul.f32 %v1461, %v1477
    %s1480 = scalar_lea.vmem %s0, 8
    %v1481 = vld [vmem:[%s1480] sm:$0x3]
    %1482 = vmatprep.subr.mxu0 0.0
    %1483 = vmatpush1.msra.mxu0 %v79
    %1484 = vmatprep.subr.mxu0 0.0
    %1485 = vmatpush1.msra.mxu0 %v80
    %1486 = vmatprep.subr.mxu0 0.0
    %1487 = vmatpush1.msra.mxu0 %v81
    %1488 = vmatprep.subr.mxu0 0.0
    %1489 = vmatpush1.msra.mxu0 %v82
    %1490 = vmatprep.subr.mxu0 0.0
    %1491 = vmatpush1.msra.mxu0 0.0
    %1492 = vmatprep.subr.mxu0 0.0
    %1493 = vmatpush1.msra.mxu0 0.0
    %1494 = vmatprep.subr.mxu0 0.0
    %1495 = vmatpush1.msra.mxu0 0.0
    %1496 = vmatprep.subr.mxu0 0.0
    %1497 = vmatpush1.msra.mxu0 0.0
    %1498 = vmatprep.subr.mxu0 0.0
    %1499 = vmatpush1.msra.mxu0 0.0
    %1500 = vmatprep.subr.mxu0 0.0
    %1501 = vmatpush1.msra.mxu0 0.0
    %1502 = vmatprep.subr.mxu0 0.0
    %1503 = vmatpush1.msra.mxu0 0.0
    %1504 = vmatprep.subr.mxu0 0.0
    %1505 = vmatpush1.msra.mxu0 0.0
    %1506 = vmatprep.subr.mxu0 0.0
    %1507 = vmatpush1.msra.mxu0 0.0
    %1508 = vmatprep.subr.mxu0 0.0
    %1509 = vmatpush1.msra.mxu0 0.0
    %1510 = vmatprep.subr.mxu0 0.0
    %1511 = vmatpush1.msra.mxu0 0.0
    %1512 = vmatprep.subr.mxu0 0.0
    %1513 = vmatpush1.msra.mxu0 0.0
    %1514 = vmatprep.subr.mxu0 0.0
    %1515 = vmatpush1.msra.mxu0 0.0
    %1516 = vmatprep.subr.mxu0 0.0
    %1517 = vmatpush1.msra.mxu0 0.0
    %1518 = vmatprep.subr.mxu0 0.0
    %1519 = vmatpush1.msra.mxu0 0.0
    %1520 = vmatprep.subr.mxu0 0.0
    %1521 = vmatpush1.msra.mxu0 0.0
    %1522 = vmatprep.subr.mxu0 0.0
    %1523 = vmatpush1.msra.mxu0 0.0
    %1524 = vmatprep.subr.mxu0 0.0
    %1525 = vmatpush1.msra.mxu0 0.0
    %1526 = vmatprep.subr.mxu0 0.0
    %1527 = vmatpush1.msra.mxu0 0.0
    %1528 = vmatprep.subr.mxu0 0.0
    %1529 = vmatpush1.msra.mxu0 0.0
    %1530 = vmatprep.subr.mxu0 0.0
    %1531 = vmatpush1.msra.mxu0 0.0
    %1532 = vmatprep.subr.mxu0 0.0
    %1533 = vmatpush1.msra.mxu0 0.0
    %1534 = vmatprep.subr.mxu0 0.0
    %1535 = vmatpush1.msra.mxu0 0.0
    %1536 = vmatprep.subr.mxu0 0.0
    %1537 = vmatpush1.msra.mxu0 0.0
    %1538 = vmatprep.subr.mxu0 0.0
    %1539 = vmatpush1.msra.mxu0 0.0
    %1540 = vmatprep.subr.mxu0 0.0
    %1541 = vmatpush1.msra.mxu0 0.0
    %1542 = vmatprep.subr.mxu0 0.0
    %1543 = vmatpush1.msra.mxu0 0.0
    %1544 = vmatprep.subr.mxu0 0.0
    %1545 = vmatpush1.msra.mxu0 0.0
    %1546 = vmatprep.mubr.f32.mxu0 0.0
    %1547 = vmatmul.mubr.f32.gmra.mrb[0].mxu0 %v1383
    %v1548 = vpop.f32.mrb[0].mxu0
    %v1549 = vadd.f32 0.0, %v1548
    %v1550 = vpop.f32.mrb[0].mxu0
    %1551 = vdwg.mxu0
    %v1553 = vsel %vm176, %v1481, 0
    %1555 = vmatprep.subr.mxu0 0.0
    %1556 = vmatpush1.msra.mxu0 %v74
    %1557 = vmatprep.subr.mxu0 0.0
    %1558 = vmatpush1.msra.mxu0 0.0
    %1559 = vmatprep.subr.mxu0 0.0
    %1560 = vmatpush1.msra.mxu0 0.0
    %1561 = vmatprep.subr.mxu0 0.0
    %1562 = vmatpush1.msra.mxu0 0.0
    %1563 = vmatprep.subr.mxu0 0.0
    %1564 = vmatpush1.msra.mxu0 0.0
    %1565 = vmatprep.subr.mxu0 0.0
    %1566 = vmatpush1.msra.mxu0 0.0
    %1567 = vmatprep.subr.mxu0 0.0
    %1568 = vmatpush1.msra.mxu0 0.0
    %1569 = vmatprep.subr.mxu0 0.0
    %1570 = vmatpush1.msra.mxu0 0.0
    %1571 = vmatprep.subr.mxu0 0.0
    %1572 = vmatpush1.msra.mxu0 0.0
    %1573 = vmatprep.subr.mxu0 0.0
    %1574 = vmatpush1.msra.mxu0 0.0
    %1575 = vmatprep.subr.mxu0 0.0
    %1576 = vmatpush1.msra.mxu0 0.0
    %1577 = vmatprep.subr.mxu0 0.0
    %1578 = vmatpush1.msra.mxu0 0.0
    %1579 = vmatprep.subr.mxu0 0.0
    %1580 = vmatpush1.msra.mxu0 0.0
    %1581 = vmatprep.subr.mxu0 0.0
    %1582 = vmatpush1.msra.mxu0 0.0
    %1583 = vmatprep.subr.mxu0 0.0
    %1584 = vmatpush1.msra.mxu0 0.0
    %1585 = vmatprep.subr.mxu0 0.0
    %1586 = vmatpush1.msra.mxu0 0.0
    %1587 = vmatprep.subr.mxu0 0.0
    %1588 = vmatpush1.msra.mxu0 0.0
    %1589 = vmatprep.subr.mxu0 0.0
    %1590 = vmatpush1.msra.mxu0 0.0
    %1591 = vmatprep.subr.mxu0 0.0
    %1592 = vmatpush1.msra.mxu0 0.0
    %1593 = vmatprep.subr.mxu0 0.0
    %1594 = vmatpush1.msra.mxu0 0.0
    %1595 = vmatprep.subr.mxu0 0.0
    %1596 = vmatpush1.msra.mxu0 0.0
    %1597 = vmatprep.subr.mxu0 0.0
    %1598 = vmatpush1.msra.mxu0 0.0
    %1599 = vmatprep.subr.mxu0 0.0
    %1600 = vmatpush1.msra.mxu0 0.0
    %1601 = vmatprep.subr.mxu0 0.0
    %1602 = vmatpush1.msra.mxu0 0.0
    %1603 = vmatprep.subr.mxu0 0.0
    %1604 = vmatpush1.msra.mxu0 0.0
    %1605 = vmatprep.subr.mxu0 0.0
    %1606 = vmatpush1.msra.mxu0 0.0
    %1607 = vmatprep.subr.mxu0 0.0
    %1608 = vmatpush1.msra.mxu0 0.0
    %1609 = vmatprep.subr.mxu0 0.0
    %1610 = vmatpush1.msra.mxu0 0.0
    %1611 = vmatprep.subr.mxu0 0.0
    %1612 = vmatpush1.msra.mxu0 0.0
    %1613 = vmatprep.subr.mxu0 0.0
    %1614 = vmatpush1.msra.mxu0 0.0
    %1615 = vmatprep.subr.mxu0 0.0
    %1616 = vmatpush1.msra.mxu0 0.0
    %1617 = vmatprep.subr.mxu0 0.0
    %1618 = vmatpush1.msra.mxu0 0.0
    %1619 = vmatprep.mubr.f32.mxu0 0.0
    %1620 = vmatmul.mubr.f32.gmra.mrb[0].mxu0 %v1553
    %v1621 = vpop.f32.mrb[0].mxu0
    %v1622 = vadd.f32 %v1549, %v1621
    %v1623 = vpop.f32.mrb[0].mxu0
    %1624 = vdwg.mxu0
    %v1625 = vadd.f32 %v1622, %v92
    %v1626 = vxor.u32 %v1625, 2147483648
    %v1627 = vmul.f32 %v1626, 1.442695
    %v1628 = vpow.pop %v1627
    %v1629 = vadd.f32 %v1628, 1.0
    %v1630 = vrcp.pop %v1629
    %v1631 = vmul.f32 1.0, %v1630
    %v1632 = vtanh.pop %v1625
    %v1633 = vmul.f32 %v1631, %v1298
    %1635 = vrot.lane.b32.xlu0 %v1632, 64
    %v1636 = vpop.permute.xlu0 %1635
    %v1638 = vmul.f32 %v1631, %v1636
    %1640 = vrot.lane.b32.xlu0 %v1638, 32
    %v1641 = vpop.permute.xlu0 %1640
    %v1643 = vadd.f32 %v1633, %v1641
    %v1644 = vtanh.pop %v1643
    %1646 = vrot.lane.b32.xlu0 %v1644, 64
    %v1647 = vpop.permute.xlu0 %1646
    %v1649 = vmul.f32 %v1631, %v1647
    %1651 = vrot.lane.b32.xlu0 %v1479, 32
    %v1652 = vpop.permute.xlu0 %1651
    %v1653 = vsel %vm102, %v1652, 0
    %1655 = vmatprep.subr.mxu0 0.0
    %1656 = vmatpush1.msra.mxu0 %v83
    %1657 = vmatprep.subr.mxu0 0.0
    %1658 = vmatpush1.msra.mxu0 %v84
    %1659 = vmatprep.subr.mxu0 0.0
    %1660 = vmatpush1.msra.mxu0 %v85
    %1661 = vmatprep.subr.mxu0 0.0
    %1662 = vmatpush1.msra.mxu0 %v86
    %1663 = vmatprep.subr.mxu0 0.0
    %1664 = vmatpush1.msra.mxu0 0.0
    %1665 = vmatprep.subr.mxu0 0.0
    %1666 = vmatpush1.msra.mxu0 0.0
    %1667 = vmatprep.subr.mxu0 0.0
    %1668 = vmatpush1.msra.mxu0 0.0
    %1669 = vmatprep.subr.mxu0 0.0
    %1670 = vmatpush1.msra.mxu0 0.0
    %1671 = vmatprep.subr.mxu0 0.0
    %1672 = vmatpush1.msra.mxu0 0.0
    %1673 = vmatprep.subr.mxu0 0.0
    %1674 = vmatpush1.msra.mxu0 0.0
    %1675 = vmatprep.subr.mxu0 0.0
    %1676 = vmatpush1.msra.mxu0 0.0
    %1677 = vmatprep.subr.mxu0 0.0
    %1678 = vmatpush1.msra.mxu0 0.0
    %1679 = vmatprep.subr.mxu0 0.0
    %1680 = vmatpush1.msra.mxu0 0.0
    %1681 = vmatprep.subr.mxu0 0.0
    %1682 = vmatpush1.msra.mxu0 0.0
    %1683 = vmatprep.subr.mxu0 0.0
    %1684 = vmatpush1.msra.mxu0 0.0
    %1685 = vmatprep.subr.mxu0 0.0
    %1686 = vmatpush1.msra.mxu0 0.0
    %1687 = vmatprep.subr.mxu0 0.0
    %1688 = vmatpush1.msra.mxu0 0.0
    %1689 = vmatprep.subr.mxu0 0.0
    %1690 = vmatpush1.msra.mxu0 0.0
    %1691 = vmatprep.subr.mxu0 0.0
    %1692 = vmatpush1.msra.mxu0 0.0
    %1693 = vmatprep.subr.mxu0 0.0
    %1694 = vmatpush1.msra.mxu0 0.0
    %1695 = vmatprep.subr.mxu0 0.0
    %1696 = vmatpush1.msra.mxu0 0.0
    %1697 = vmatprep.subr.mxu0 0.0
    %1698 = vmatpush1.msra.mxu0 0.0
    %1699 = vmatprep.subr.mxu0 0.0
    %1700 = vmatpush1.msra.mxu0 0.0
    %1701 = vmatprep.subr.mxu0 0.0
    %1702 = vmatpush1.msra.mxu0 0.0
    %1703 = vmatprep.subr.mxu0 0.0
    %1704 = vmatpush1.msra.mxu0 0.0
    %1705 = vmatprep.subr.mxu0 0.0
    %1706 = vmatpush1.msra.mxu0 0.0
    %1707 = vmatprep.subr.mxu0 0.0
    %1708 = vmatpush1.msra.mxu0 0.0
    %1709 = vmatprep.subr.mxu0 0.0
    %1710 = vmatpush1.msra.mxu0 0.0
    %1711 = vmatprep.subr.mxu0 0.0
    %1712 = vmatpush1.msra.mxu0 0.0
    %1713 = vmatprep.subr.mxu0 0.0
    %1714 = vmatpush1.msra.mxu0 0.0
    %1715 = vmatprep.subr.mxu0 0.0
    %1716 = vmatpush1.msra.mxu0 0.0
    %1717 = vmatprep.subr.mxu0 0.0
    %1718 = vmatpush1.msra.mxu0 0.0
    %1719 = vmatprep.mubr.f32.mxu0 0.0
    %1720 = vmatmul.mubr.f32.gmra.mrb[0].mxu0 %v1653
    %v1721 = vpop.f32.mrb[0].mxu0
    %v1722 = vadd.f32 0.0, %v1721
    %v1723 = vpop.f32.mrb[0].mxu0
    %1724 = vdwg.mxu0
    %1726 = vrot.lane.b32.xlu0 %v1649, 32
    %v1727 = vpop.permute.xlu0 %1726
    %v1728 = vsel %vm102, %v1727, 0
    %1730 = vmatprep.subr.mxu0 0.0
    %1731 = vmatpush1.msra.mxu0 %v75
    %1732 = vmatprep.subr.mxu0 0.0
    %1733 = vmatpush1.msra.mxu0 %v76
    %1734 = vmatprep.subr.mxu0 0.0
    %1735 = vmatpush1.msra.mxu0 %v77
    %1736 = vmatprep.subr.mxu0 0.0
    %1737 = vmatpush1.msra.mxu0 %v78
    %1738 = vmatprep.subr.mxu0 0.0
    %1739 = vmatpush1.msra.mxu0 0.0
    %1740 = vmatprep.subr.mxu0 0.0
    %1741 = vmatpush1.msra.mxu0 0.0
    %1742 = vmatprep.subr.mxu0 0.0
    %1743 = vmatpush1.msra.mxu0 0.0
    %1744 = vmatprep.subr.mxu0 0.0
    %1745 = vmatpush1.msra.mxu0 0.0
    %1746 = vmatprep.subr.mxu0 0.0
    %1747 = vmatpush1.msra.mxu0 0.0
    %1748 = vmatprep.subr.mxu0 0.0
    %1749 = vmatpush1.msra.mxu0 0.0
    %1750 = vmatprep.subr.mxu0 0.0
    %1751 = vmatpush1.msra.mxu0 0.0
    %1752 = vmatprep.subr.mxu0 0.0
    %1753 = vmatpush1.msra.mxu0 0.0
    %1754 = vmatprep.subr.mxu0 0.0
    %1755 = vmatpush1.msra.mxu0 0.0
    %1756 = vmatprep.subr.mxu0 0.0
    %1757 = vmatpush1.msra.mxu0 0.0
    %1758 = vmatprep.subr.mxu0 0.0
    %1759 = vmatpush1.msra.mxu0 0.0
    %1760 = vmatprep.subr.mxu0 0.0
    %1761 = vmatpush1.msra.mxu0 0.0
    %1762 = vmatprep.subr.mxu0 0.0
    %1763 = vmatpush1.msra.mxu0 0.0
    %1764 = vmatprep.subr.mxu0 0.0
    %1765 = vmatpush1.msra.mxu0 0.0
    %1766 = vmatprep.subr.mxu0 0.0
    %1767 = vmatpush1.msra.mxu0 0.0
    %1768 = vmatprep.subr.mxu0 0.0
    %1769 = vmatpush1.msra.mxu0 0.0
    %1770 = vmatprep.subr.mxu0 0.0
    %1771 = vmatpush1.msra.mxu0 0.0
    %1772 = vmatprep.subr.mxu0 0.0
    %1773 = vmatpush1.msra.mxu0 0.0
    %1774 = vmatprep.subr.mxu0 0.0
    %1775 = vmatpush1.msra.mxu0 0.0
    %1776 = vmatprep.subr.mxu0 0.0
    %1777 = vmatpush1.msra.mxu0 0.0
    %1778 = vmatprep.subr.mxu0 0.0
    %1779 = vmatpush1.msra.mxu0 0.0
    %1780 = vmatprep.subr.mxu0 0.0
    %1781 = vmatpush1.msra.mxu0 0.0
    %1782 = vmatprep.subr.mxu0 0.0
    %1783 = vmatpush1.msra.mxu0 0.0
    %1784 = vmatprep.subr.mxu0 0.0
    %1785 = vmatpush1.msra.mxu0 0.0
    %1786 = vmatprep.subr.mxu0 0.0
    %1787 = vmatpush1.msra.mxu0 0.0
    %1788 = vmatprep.subr.mxu0 0.0
    %1789 = vmatpush1.msra.mxu0 0.0
    %1790 = vmatprep.subr.mxu0 0.0
    %1791 = vmatpush1.msra.mxu0 0.0
    %1792 = vmatprep.subr.mxu0 0.0
    %1793 = vmatpush1.msra.mxu0 0.0
    %1794 = vmatprep.mubr.f32.mxu0 0.0
    %1795 = vmatmul.mubr.f32.gmra.mrb[0].mxu0 %v1728
    %v1796 = vpop.f32.mrb[0].mxu0
    %v1797 = vadd.f32 %v1722, %v1796
    %v1798 = vpop.f32.mrb[0].mxu0
    %1799 = vdwg.mxu0
    %v1800 = vadd.f32 %v1797, %v99
    %v1801 = vxor.u32 %v1800, 2147483648
    %v1802 = vmul.f32 %v1801, 1.442695
    %v1803 = vpow.pop %v1802
    %v1804 = vadd.f32 %v1803, 1.0
    %v1805 = vrcp.pop %v1804
    %v1806 = vmul.f32 1.0, %v1805
    %v1807 = vtanh.pop %v1800
    %v1808 = vmul.f32 %v1806, %v1473
    %1810 = vrot.lane.b32.xlu0 %v1807, 64
    %v1811 = vpop.permute.xlu0 %1810
    %v1813 = vmul.f32 %v1806, %v1811
    %1815 = vrot.lane.b32.xlu0 %v1813, 32
    %v1816 = vpop.permute.xlu0 %1815
    %v1818 = vadd.f32 %v1808, %v1816
    %v1819 = vtanh.pop %v1818
    %1821 = vrot.lane.b32.xlu0 %v1819, 64
    %v1822 = vpop.permute.xlu0 %1821
    %v1824 = vmul.f32 %v1806, %v1822
    %s1825 = scalar_lea.vmem %s0, 10
    %v1826 = vld [vmem:[%s1825] sm:$0x3]
    %1827 = vmatprep.subr.mxu0 0.0
    %1828 = vmatpush1.msra.mxu0 %v79
    %1829 = vmatprep.subr.mxu0 0.0
    %1830 = vmatpush1.msra.mxu0 %v80
    %1831 = vmatprep.subr.mxu0 0.0
    %1832 = vmatpush1.msra.mxu0 %v81
    %1833 = vmatprep.subr.mxu0 0.0
    %1834 = vmatpush1.msra.mxu0 %v82
    %1835 = vmatprep.subr.mxu0 0.0
    %1836 = vmatpush1.msra.mxu0 0.0
    %1837 = vmatprep.subr.mxu0 0.0
    %1838 = vmatpush1.msra.mxu0 0.0
    %1839 = vmatprep.subr.mxu0 0.0
    %1840 = vmatpush1.msra.mxu0 0.0
    %1841 = vmatprep.subr.mxu0 0.0
    %1842 = vmatpush1.msra.mxu0 0.0
    %1843 = vmatprep.subr.mxu0 0.0
    %1844 = vmatpush1.msra.mxu0 0.0
    %1845 = vmatprep.subr.mxu0 0.0
    %1846 = vmatpush1.msra.mxu0 0.0
    %1847 = vmatprep.subr.mxu0 0.0
    %1848 = vmatpush1.msra.mxu0 0.0
    %1849 = vmatprep.subr.mxu0 0.0
    %1850 = vmatpush1.msra.mxu0 0.0
    %1851 = vmatprep.subr.mxu0 0.0
    %1852 = vmatpush1.msra.mxu0 0.0
    %1853 = vmatprep.subr.mxu0 0.0
    %1854 = vmatpush1.msra.mxu0 0.0
    %1855 = vmatprep.subr.mxu0 0.0
    %1856 = vmatpush1.msra.mxu0 0.0
    %1857 = vmatprep.subr.mxu0 0.0
    %1858 = vmatpush1.msra.mxu0 0.0
    %1859 = vmatprep.subr.mxu0 0.0
    %1860 = vmatpush1.msra.mxu0 0.0
    %1861 = vmatprep.subr.mxu0 0.0
    %1862 = vmatpush1.msra.mxu0 0.0
    %1863 = vmatprep.subr.mxu0 0.0
    %1864 = vmatpush1.msra.mxu0 0.0
    %1865 = vmatprep.subr.mxu0 0.0
    %1866 = vmatpush1.msra.mxu0 0.0
    %1867 = vmatprep.subr.mxu0 0.0
    %1868 = vmatpush1.msra.mxu0 0.0
    %1869 = vmatprep.subr.mxu0 0.0
    %1870 = vmatpush1.msra.mxu0 0.0
    %1871 = vmatprep.subr.mxu0 0.0
    %1872 = vmatpush1.msra.mxu0 0.0
    %1873 = vmatprep.subr.mxu0 0.0
    %1874 = vmatpush1.msra.mxu0 0.0
    %1875 = vmatprep.subr.mxu0 0.0
    %1876 = vmatpush1.msra.mxu0 0.0
    %1877 = vmatprep.subr.mxu0 0.0
    %1878 = vmatpush1.msra.mxu0 0.0
    %1879 = vmatprep.subr.mxu0 0.0
    %1880 = vmatpush1.msra.mxu0 0.0
    %1881 = vmatprep.subr.mxu0 0.0
    %1882 = vmatpush1.msra.mxu0 0.0
    %1883 = vmatprep.subr.mxu0 0.0
    %1884 = vmatpush1.msra.mxu0 0.0
    %1885 = vmatprep.subr.mxu0 0.0
    %1886 = vmatpush1.msra.mxu0 0.0
    %1887 = vmatprep.subr.mxu0 0.0
    %1888 = vmatpush1.msra.mxu0 0.0
    %1889 = vmatprep.subr.mxu0 0.0
    %1890 = vmatpush1.msra.mxu0 0.0
    %1891 = vmatprep.mubr.f32.mxu0 0.0
    %1892 = vmatmul.mubr.f32.gmra.mrb[0].mxu0 %v1728
    %v1893 = vpop.f32.mrb[0].mxu0
    %v1894 = vadd.f32 0.0, %v1893
    %v1895 = vpop.f32.mrb[0].mxu0
    %1896 = vdwg.mxu0
    %v1898 = vsel %vm176, %v1826, 0
    %1900 = vmatprep.subr.mxu0 0.0
    %1901 = vmatpush1.msra.mxu0 %v74
    %1902 = vmatprep.subr.mxu0 0.0
    %1903 = vmatpush1.msra.mxu0 0.0
    %1904 = vmatprep.subr.mxu0 0.0
    %1905 = vmatpush1.msra.mxu0 0.0
    %1906 = vmatprep.subr.mxu0 0.0
    %1907 = vmatpush1.msra.mxu0 0.0
    %1908 = vmatprep.subr.mxu0 0.0
    %1909 = vmatpush1.msra.mxu0 0.0
    %1910 = vmatprep.subr.mxu0 0.0
    %1911 = vmatpush1.msra.mxu0 0.0
    %1912 = vmatprep.subr.mxu0 0.0
    %1913 = vmatpush1.msra.mxu0 0.0
    %1914 = vmatprep.subr.mxu0 0.0
    %1915 = vmatpush1.msra.mxu0 0.0
    %1916 = vmatprep.subr.mxu0 0.0
    %1917 = vmatpush1.msra.mxu0 0.0
    %1918 = vmatprep.subr.mxu0 0.0
    %1919 = vmatpush1.msra.mxu0 0.0
    %1920 = vmatprep.subr.mxu0 0.0
    %1921 = vmatpush1.msra.mxu0 0.0
    %1922 = vmatprep.subr.mxu0 0.0
    %1923 = vmatpush1.msra.mxu0 0.0
    %1924 = vmatprep.subr.mxu0 0.0
    %1925 = vmatpush1.msra.mxu0 0.0
    %1926 = vmatprep.subr.mxu0 0.0
    %1927 = vmatpush1.msra.mxu0 0.0
    %1928 = vmatprep.subr.mxu0 0.0
    %1929 = vmatpush1.msra.mxu0 0.0
    %1930 = vmatprep.subr.mxu0 0.0
    %1931 = vmatpush1.msra.mxu0 0.0
    %1932 = vmatprep.subr.mxu0 0.0
    %1933 = vmatpush1.msra.mxu0 0.0
    %1934 = vmatprep.subr.mxu0 0.0
    %1935 = vmatpush1.msra.mxu0 0.0
    %1936 = vmatprep.subr.mxu0 0.0
    %1937 = vmatpush1.msra.mxu0 0.0
    %1938 = vmatprep.subr.mxu0 0.0
    %1939 = vmatpush1.msra.mxu0 0.0
    %1940 = vmatprep.subr.mxu0 0.0
    %1941 = vmatpush1.msra.mxu0 0.0
    %1942 = vmatprep.subr.mxu0 0.0
    %1943 = vmatpush1.msra.mxu0 0.0
    %1944 = vmatprep.subr.mxu0 0.0
    %1945 = vmatpush1.msra.mxu0 0.0
    %1946 = vmatprep.subr.mxu0 0.0
    %1947 = vmatpush1.msra.mxu0 0.0
    %1948 = vmatprep.subr.mxu0 0.0
    %1949 = vmatpush1.msra.mxu0 0.0
    %1950 = vmatprep.subr.mxu0 0.0
    %1951 = vmatpush1.msra.mxu0 0.0
    %1952 = vmatprep.subr.mxu0 0.0
    %1953 = vmatpush1.msra.mxu0 0.0
    %1954 = vmatprep.subr.mxu0 0.0
    %1955 = vmatpush1.msra.mxu0 0.0
    %1956 = vmatprep.subr.mxu0 0.0
    %1957 = vmatpush1.msra.mxu0 0.0
    %1958 = vmatprep.subr.mxu0 0.0
    %1959 = vmatpush1.msra.mxu0 0.0
    %1960 = vmatprep.subr.mxu0 0.0
    %1961 = vmatpush1.msra.mxu0 0.0
    %1962 = vmatprep.subr.mxu0 0.0
    %1963 = vmatpush1.msra.mxu0 0.0
    %1964 = vmatprep.mubr.f32.mxu0 0.0
    %1965 = vmatmul.mubr.f32.gmra.mrb[0].mxu0 %v1898
    %v1966 = vpop.f32.mrb[0].mxu0
    %v1967 = vadd.f32 %v1894, %v1966
    %v1968 = vpop.f32.mrb[0].mxu0
    %1969 = vdwg.mxu0
    %v1970 = vadd.f32 %v1967, %v92
    %v1971 = vxor.u32 %v1970, 2147483648
    %v1972 = vmul.f32 %v1971, 1.442695
    %v1973 = vpow.pop %v1972
    %v1974 = vadd.f32 %v1973, 1.0
    %v1975 = vrcp.pop %v1974
    %v1976 = vmul.f32 1.0, %v1975
    %v1977 = vtanh.pop %v1970
    %v1978 = vmul.f32 %v1976, %v1643
    %1980 = vrot.lane.b32.xlu0 %v1977, 64
    %v1981 = vpop.permute.xlu0 %1980
    %v1983 = vmul.f32 %v1976, %v1981
    %1985 = vrot.lane.b32.xlu0 %v1983, 32
    %v1986 = vpop.permute.xlu0 %1985
    %v1988 = vadd.f32 %v1978, %v1986
    %v1989 = vtanh.pop %v1988
    %1991 = vrot.lane.b32.xlu0 %v1989, 64
    %v1992 = vpop.permute.xlu0 %1991
    %v1994 = vmul.f32 %v1976, %v1992
    %1996 = vrot.lane.b32.xlu0 %v1824, 32
    %v1997 = vpop.permute.xlu0 %1996
    %v1998 = vsel %vm102, %v1997, 0
    %2000 = vmatprep.subr.mxu0 0.0
    %2001 = vmatpush1.msra.mxu0 %v83
    %2002 = vmatprep.subr.mxu0 0.0
    %2003 = vmatpush1.msra.mxu0 %v84
    %2004 = vmatprep.subr.mxu0 0.0
    %2005 = vmatpush1.msra.mxu0 %v85
    %2006 = vmatprep.subr.mxu0 0.0
    %2007 = vmatpush1.msra.mxu0 %v86
    %2008 = vmatprep.subr.mxu0 0.0
    %2009 = vmatpush1.msra.mxu0 0.0
    %2010 = vmatprep.subr.mxu0 0.0
    %2011 = vmatpush1.msra.mxu0 0.0
    %2012 = vmatprep.subr.mxu0 0.0
    %2013 = vmatpush1.msra.mxu0 0.0
    %2014 = vmatprep.subr.mxu0 0.0
    %2015 = vmatpush1.msra.mxu0 0.0
    %2016 = vmatprep.subr.mxu0 0.0
    %2017 = vmatpush1.msra.mxu0 0.0
    %2018 = vmatprep.subr.mxu0 0.0
    %2019 = vmatpush1.msra.mxu0 0.0
    %2020 = vmatprep.subr.mxu0 0.0
    %2021 = vmatpush1.msra.mxu0 0.0
    %2022 = vmatprep.subr.mxu0 0.0
    %2023 = vmatpush1.msra.mxu0 0.0
    %2024 = vmatprep.subr.mxu0 0.0
    %2025 = vmatpush1.msra.mxu0 0.0
    %2026 = vmatprep.subr.mxu0 0.0
    %2027 = vmatpush1.msra.mxu0 0.0
    %2028 = vmatprep.subr.mxu0 0.0
    %2029 = vmatpush1.msra.mxu0 0.0
    %2030 = vmatprep.subr.mxu0 0.0
    %2031 = vmatpush1.msra.mxu0 0.0
    %2032 = vmatprep.subr.mxu0 0.0
    %2033 = vmatpush1.msra.mxu0 0.0
    %2034 = vmatprep.subr.mxu0 0.0
    %2035 = vmatpush1.msra.mxu0 0.0
    %2036 = vmatprep.subr.mxu0 0.0
    %2037 = vmatpush1.msra.mxu0 0.0
    %2038 = vmatprep.subr.mxu0 0.0
    %2039 = vmatpush1.msra.mxu0 0.0
    %2040 = vmatprep.subr.mxu0 0.0
    %2041 = vmatpush1.msra.mxu0 0.0
    %2042 = vmatprep.subr.mxu0 0.0
    %2043 = vmatpush1.msra.mxu0 0.0
    %2044 = vmatprep.subr.mxu0 0.0
    %2045 = vmatpush1.msra.mxu0 0.0
    %2046 = vmatprep.subr.mxu0 0.0
    %2047 = vmatpush1.msra.mxu0 0.0
    %2048 = vmatprep.subr.mxu0 0.0
    %2049 = vmatpush1.msra.mxu0 0.0
    %2050 = vmatprep.subr.mxu0 0.0
    %2051 = vmatpush1.msra.mxu0 0.0
    %2052 = vmatprep.subr.mxu0 0.0
    %2053 = vmatpush1.msra.mxu0 0.0
    %2054 = vmatprep.subr.mxu0 0.0
    %2055 = vmatpush1.msra.mxu0 0.0
    %2056 = vmatprep.subr.mxu0 0.0
    %2057 = vmatpush1.msra.mxu0 0.0
    %2058 = vmatprep.subr.mxu0 0.0
    %2059 = vmatpush1.msra.mxu0 0.0
    %2060 = vmatprep.subr.mxu0 0.0
    %2061 = vmatpush1.msra.mxu0 0.0
    %2062 = vmatprep.subr.mxu0 0.0
    %2063 = vmatpush1.msra.mxu0 0.0
    %2064 = vmatprep.mubr.f32.mxu0 0.0
    %2065 = vmatmul.mubr.f32.gmra.mrb[0].mxu0 %v1998
    %v2066 = vpop.f32.mrb[0].mxu0
    %v2067 = vadd.f32 0.0, %v2066
    %v2068 = vpop.f32.mrb[0].mxu0
    %2069 = vdwg.mxu0
    %2071 = vrot.lane.b32.xlu0 %v1994, 32
    %v2072 = vpop.permute.xlu0 %2071
    %v2073 = vsel %vm102, %v2072, 0
    %2075 = vmatprep.subr.mxu0 0.0
    %2076 = vmatpush1.msra.mxu0 %v75
    %2077 = vmatprep.subr.mxu0 0.0
    %2078 = vmatpush1.msra.mxu0 %v76
    %2079 = vmatprep.subr.mxu0 0.0
    %2080 = vmatpush1.msra.mxu0 %v77
    %2081 = vmatprep.subr.mxu0 0.0
    %2082 = vmatpush1.msra.mxu0 %v78
    %2083 = vmatprep.subr.mxu0 0.0
    %2084 = vmatpush1.msra.mxu0 0.0
    %2085 = vmatprep.subr.mxu0 0.0
    %2086 = vmatpush1.msra.mxu0 0.0
    %2087 = vmatprep.subr.mxu0 0.0
    %2088 = vmatpush1.msra.mxu0 0.0
    %2089 = vmatprep.subr.mxu0 0.0
    %2090 = vmatpush1.msra.mxu0 0.0
    %2091 = vmatprep.subr.mxu0 0.0
    %2092 = vmatpush1.msra.mxu0 0.0
    %2093 = vmatprep.subr.mxu0 0.0
    %2094 = vmatpush1.msra.mxu0 0.0
    %2095 = vmatprep.subr.mxu0 0.0
    %2096 = vmatpush1.msra.mxu0 0.0
    %2097 = vmatprep.subr.mxu0 0.0
    %2098 = vmatpush1.msra.mxu0 0.0
    %2099 = vmatprep.subr.mxu0 0.0
    %2100 = vmatpush1.msra.mxu0 0.0
    %2101 = vmatprep.subr.mxu0 0.0
    %2102 = vmatpush1.msra.mxu0 0.0
    %2103 = vmatprep.subr.mxu0 0.0
    %2104 = vmatpush1.msra.mxu0 0.0
    %2105 = vmatprep.subr.mxu0 0.0
    %2106 = vmatpush1.msra.mxu0 0.0
    %2107 = vmatprep.subr.mxu0 0.0
    %2108 = vmatpush1.msra.mxu0 0.0
    %2109 = vmatprep.subr.mxu0 0.0
    %2110 = vmatpush1.msra.mxu0 0.0
    %2111 = vmatprep.subr.mxu0 0.0
    %2112 = vmatpush1.msra.mxu0 0.0
    %2113 = vmatprep.subr.mxu0 0.0
    %2114 = vmatpush1.msra.mxu0 0.0
    %2115 = vmatprep.subr.mxu0 0.0
    %2116 = vmatpush1.msra.mxu0 0.0
    %2117 = vmatprep.subr.mxu0 0.0
    %2118 = vmatpush1.msra.mxu0 0.0
    %2119 = vmatprep.subr.mxu0 0.0
    %2120 = vmatpush1.msra.mxu0 0.0
    %2121 = vmatprep.subr.mxu0 0.0
    %2122 = vmatpush1.msra.mxu0 0.0
    %2123 = vmatprep.subr.mxu0 0.0
    %2124 = vmatpush1.msra.mxu0 0.0
    %2125 = vmatprep.subr.mxu0 0.0
    %2126 = vmatpush1.msra.mxu0 0.0
    %2127 = vmatprep.subr.mxu0 0.0
    %2128 = vmatpush1.msra.mxu0 0.0
    %2129 = vmatprep.subr.mxu0 0.0
    %2130 = vmatpush1.msra.mxu0 0.0
    %2131 = vmatprep.subr.mxu0 0.0
    %2132 = vmatpush1.msra.mxu0 0.0
    %2133 = vmatprep.subr.mxu0 0.0
    %2134 = vmatpush1.msra.mxu0 0.0
    %2135 = vmatprep.subr.mxu0 0.0
    %2136 = vmatpush1.msra.mxu0 0.0
    %2137 = vmatprep.subr.mxu0 0.0
    %2138 = vmatpush1.msra.mxu0 0.0
    %2139 = vmatprep.mubr.f32.mxu0 0.0
    %2140 = vmatmul.mubr.f32.gmra.mrb[0].mxu0 %v2073
    %v2141 = vpop.f32.mrb[0].mxu0
    %v2142 = vadd.f32 %v2067, %v2141
    %v2143 = vpop.f32.mrb[0].mxu0
    %2144 = vdwg.mxu0
    %v2145 = vadd.f32 %v2142, %v99
    %v2146 = vxor.u32 %v2145, 2147483648
    %v2147 = vmul.f32 %v2146, 1.442695
    %v2148 = vpow.pop %v2147
    %v2149 = vadd.f32 %v2148, 1.0
    %v2150 = vrcp.pop %v2149
    %v2151 = vmul.f32 1.0, %v2150
    %v2152 = vtanh.pop %v2145
    %v2153 = vmul.f32 %v2151, %v1818
    %2155 = vrot.lane.b32.xlu0 %v2152, 64
    %v2156 = vpop.permute.xlu0 %2155
    %v2158 = vmul.f32 %v2151, %v2156
    %2160 = vrot.lane.b32.xlu0 %v2158, 32
    %v2161 = vpop.permute.xlu0 %2160
    %v2163 = vadd.f32 %v2153, %v2161
    %v2164 = vtanh.pop %v2163
    %2166 = vrot.lane.b32.xlu0 %v2164, 64
    %v2167 = vpop.permute.xlu0 %2166
    %v2169 = vmul.f32 %v2151, %v2167
    %s2170 = scalar_lea.vmem %s0, 12
    %v2171 = vld [vmem:[%s2170] sm:$0x3]
    %2172 = vmatprep.subr.mxu0 0.0
    %2173 = vmatpush1.msra.mxu0 %v79
    %2174 = vmatprep.subr.mxu0 0.0
    %2175 = vmatpush1.msra.mxu0 %v80
    %2176 = vmatprep.subr.mxu0 0.0
    %2177 = vmatpush1.msra.mxu0 %v81
    %2178 = vmatprep.subr.mxu0 0.0
    %2179 = vmatpush1.msra.mxu0 %v82
    %2180 = vmatprep.subr.mxu0 0.0
    %2181 = vmatpush1.msra.mxu0 0.0
    %2182 = vmatprep.subr.mxu0 0.0
    %2183 = vmatpush1.msra.mxu0 0.0
    %2184 = vmatprep.subr.mxu0 0.0
    %2185 = vmatpush1.msra.mxu0 0.0
    %2186 = vmatprep.subr.mxu0 0.0
    %2187 = vmatpush1.msra.mxu0 0.0
    %2188 = vmatprep.subr.mxu0 0.0
    %2189 = vmatpush1.msra.mxu0 0.0
    %2190 = vmatprep.subr.mxu0 0.0
    %2191 = vmatpush1.msra.mxu0 0.0
    %2192 = vmatprep.subr.mxu0 0.0
    %2193 = vmatpush1.msra.mxu0 0.0
    %2194 = vmatprep.subr.mxu0 0.0
    %2195 = vmatpush1.msra.mxu0 0.0
    %2196 = vmatprep.subr.mxu0 0.0
    %2197 = vmatpush1.msra.mxu0 0.0
    %2198 = vmatprep.subr.mxu0 0.0
    %2199 = vmatpush1.msra.mxu0 0.0
    %2200 = vmatprep.subr.mxu0 0.0
    %2201 = vmatpush1.msra.mxu0 0.0
    %2202 = vmatprep.subr.mxu0 0.0
    %2203 = vmatpush1.msra.mxu0 0.0
    %2204 = vmatprep.subr.mxu0 0.0
    %2205 = vmatpush1.msra.mxu0 0.0
    %2206 = vmatprep.subr.mxu0 0.0
    %2207 = vmatpush1.msra.mxu0 0.0
    %2208 = vmatprep.subr.mxu0 0.0
    %2209 = vmatpush1.msra.mxu0 0.0
    %2210 = vmatprep.subr.mxu0 0.0
    %2211 = vmatpush1.msra.mxu0 0.0
    %2212 = vmatprep.subr.mxu0 0.0
    %2213 = vmatpush1.msra.mxu0 0.0
    %2214 = vmatprep.subr.mxu0 0.0
    %2215 = vmatpush1.msra.mxu0 0.0
    %2216 = vmatprep.subr.mxu0 0.0
    %2217 = vmatpush1.msra.mxu0 0.0
    %2218 = vmatprep.subr.mxu0 0.0
    %2219 = vmatpush1.msra.mxu0 0.0
    %2220 = vmatprep.subr.mxu0 0.0
    %2221 = vmatpush1.msra.mxu0 0.0
    %2222 = vmatprep.subr.mxu0 0.0
    %2223 = vmatpush1.msra.mxu0 0.0
    %2224 = vmatprep.subr.mxu0 0.0
    %2225 = vmatpush1.msra.mxu0 0.0
    %2226 = vmatprep.subr.mxu0 0.0
    %2227 = vmatpush1.msra.mxu0 0.0
    %2228 = vmatprep.subr.mxu0 0.0
    %2229 = vmatpush1.msra.mxu0 0.0
    %2230 = vmatprep.subr.mxu0 0.0
    %2231 = vmatpush1.msra.mxu0 0.0
    %2232 = vmatprep.subr.mxu0 0.0
    %2233 = vmatpush1.msra.mxu0 0.0
    %2234 = vmatprep.subr.mxu0 0.0
    %2235 = vmatpush1.msra.mxu0 0.0
    %2236 = vmatprep.mubr.f32.mxu0 0.0
    %2237 = vmatmul.mubr.f32.gmra.mrb[0].mxu0 %v2073
    %v2238 = vpop.f32.mrb[0].mxu0
    %v2239 = vadd.f32 0.0, %v2238
    %v2240 = vpop.f32.mrb[0].mxu0
    %2241 = vdwg.mxu0
    %v2243 = vsel %vm176, %v2171, 0
    %2245 = vmatprep.subr.mxu0 0.0
    %2246 = vmatpush1.msra.mxu0 %v74
    %2247 = vmatprep.subr.mxu0 0.0
    %2248 = vmatpush1.msra.mxu0 0.0
    %2249 = vmatprep.subr.mxu0 0.0
    %2250 = vmatpush1.msra.mxu0 0.0
    %2251 = vmatprep.subr.mxu0 0.0
    %2252 = vmatpush1.msra.mxu0 0.0
    %2253 = vmatprep.subr.mxu0 0.0
    %2254 = vmatpush1.msra.mxu0 0.0
    %2255 = vmatprep.subr.mxu0 0.0
    %2256 = vmatpush1.msra.mxu0 0.0
    %2257 = vmatprep.subr.mxu0 0.0
    %2258 = vmatpush1.msra.mxu0 0.0
    %2259 = vmatprep.subr.mxu0 0.0
    %2260 = vmatpush1.msra.mxu0 0.0
    %2261 = vmatprep.subr.mxu0 0.0
    %2262 = vmatpush1.msra.mxu0 0.0
    %2263 = vmatprep.subr.mxu0 0.0
    %2264 = vmatpush1.msra.mxu0 0.0
    %2265 = vmatprep.subr.mxu0 0.0
    %2266 = vmatpush1.msra.mxu0 0.0
    %2267 = vmatprep.subr.mxu0 0.0
    %2268 = vmatpush1.msra.mxu0 0.0
    %2269 = vmatprep.subr.mxu0 0.0
    %2270 = vmatpush1.msra.mxu0 0.0
    %2271 = vmatprep.subr.mxu0 0.0
    %2272 = vmatpush1.msra.mxu0 0.0
    %2273 = vmatprep.subr.mxu0 0.0
    %2274 = vmatpush1.msra.mxu0 0.0
    %2275 = vmatprep.subr.mxu0 0.0
    %2276 = vmatpush1.msra.mxu0 0.0
    %2277 = vmatprep.subr.mxu0 0.0
    %2278 = vmatpush1.msra.mxu0 0.0
    %2279 = vmatprep.subr.mxu0 0.0
    %2280 = vmatpush1.msra.mxu0 0.0
    %2281 = vmatprep.subr.mxu0 0.0
    %2282 = vmatpush1.msra.mxu0 0.0
    %2283 = vmatprep.subr.mxu0 0.0
    %2284 = vmatpush1.msra.mxu0 0.0
    %2285 = vmatprep.subr.mxu0 0.0
    %2286 = vmatpush1.msra.mxu0 0.0
    %2287 = vmatprep.subr.mxu0 0.0
    %2288 = vmatpush1.msra.mxu0 0.0
    %2289 = vmatprep.subr.mxu0 0.0
    %2290 = vmatpush1.msra.mxu0 0.0
    %2291 = vmatprep.subr.mxu0 0.0
    %2292 = vmatpush1.msra.mxu0 0.0
    %2293 = vmatprep.subr.mxu0 0.0
    %2294 = vmatpush1.msra.mxu0 0.0
    %2295 = vmatprep.subr.mxu0 0.0
    %2296 = vmatpush1.msra.mxu0 0.0
    %2297 = vmatprep.subr.mxu0 0.0
    %2298 = vmatpush1.msra.mxu0 0.0
    %2299 = vmatprep.subr.mxu0 0.0
    %2300 = vmatpush1.msra.mxu0 0.0
    %2301 = vmatprep.subr.mxu0 0.0
    %2302 = vmatpush1.msra.mxu0 0.0
    %2303 = vmatprep.subr.mxu0 0.0
    %2304 = vmatpush1.msra.mxu0 0.0
    %2305 = vmatprep.subr.mxu0 0.0
    %2306 = vmatpush1.msra.mxu0 0.0
    %2307 = vmatprep.subr.mxu0 0.0
    %2308 = vmatpush1.msra.mxu0 0.0
    %2309 = vmatprep.mubr.f32.mxu0 0.0
    %2310 = vmatmul.mubr.f32.gmra.mrb[0].mxu0 %v2243
    %v2311 = vpop.f32.mrb[0].mxu0
    %v2312 = vadd.f32 %v2239, %v2311
    %v2313 = vpop.f32.mrb[0].mxu0
    %2314 = vdwg.mxu0
    %v2315 = vadd.f32 %v2312, %v92
    %v2316 = vxor.u32 %v2315, 2147483648
    %v2317 = vmul.f32 %v2316, 1.442695
    %v2318 = vpow.pop %v2317
    %v2319 = vadd.f32 %v2318, 1.0
    %v2320 = vrcp.pop %v2319
    %v2321 = vmul.f32 1.0, %v2320
    %v2322 = vtanh.pop %v2315
    %v2323 = vmul.f32 %v2321, %v1988
    %2325 = vrot.lane.b32.xlu0 %v2322, 64
    %v2326 = vpop.permute.xlu0 %2325
    %v2328 = vmul.f32 %v2321, %v2326
    %2330 = vrot.lane.b32.xlu0 %v2328, 32
    %v2331 = vpop.permute.xlu0 %2330
    %v2333 = vadd.f32 %v2323, %v2331
    %v2334 = vtanh.pop %v2333
    %2336 = vrot.lane.b32.xlu0 %v2334, 64
    %v2337 = vpop.permute.xlu0 %2336
    %v2339 = vmul.f32 %v2321, %v2337
    %2341 = vrot.lane.b32.xlu0 %v2169, 32
    %v2342 = vpop.permute.xlu0 %2341
    %v2343 = vsel %vm102, %v2342, 0
    %2345 = vmatprep.subr.mxu0 0.0
    %2346 = vmatpush1.msra.mxu0 %v83
    %2347 = vmatprep.subr.mxu0 0.0
    %2348 = vmatpush1.msra.mxu0 %v84
    %2349 = vmatprep.subr.mxu0 0.0
    %2350 = vmatpush1.msra.mxu0 %v85
    %2351 = vmatprep.subr.mxu0 0.0
    %2352 = vmatpush1.msra.mxu0 %v86
    %2353 = vmatprep.subr.mxu0 0.0
    %2354 = vmatpush1.msra.mxu0 0.0
    %2355 = vmatprep.subr.mxu0 0.0
    %2356 = vmatpush1.msra.mxu0 0.0
    %2357 = vmatprep.subr.mxu0 0.0
    %2358 = vmatpush1.msra.mxu0 0.0
    %2359 = vmatprep.subr.mxu0 0.0
    %2360 = vmatpush1.msra.mxu0 0.0
    %2361 = vmatprep.subr.mxu0 0.0
    %2362 = vmatpush1.msra.mxu0 0.0
    %2363 = vmatprep.subr.mxu0 0.0
    %2364 = vmatpush1.msra.mxu0 0.0
    %2365 = vmatprep.subr.mxu0 0.0
    %2366 = vmatpush1.msra.mxu0 0.0
    %2367 = vmatprep.subr.mxu0 0.0
    %2368 = vmatpush1.msra.mxu0 0.0
    %2369 = vmatprep.subr.mxu0 0.0
    %2370 = vmatpush1.msra.mxu0 0.0
    %2371 = vmatprep.subr.mxu0 0.0
    %2372 = vmatpush1.msra.mxu0 0.0
    %2373 = vmatprep.subr.mxu0 0.0
    %2374 = vmatpush1.msra.mxu0 0.0
    %2375 = vmatprep.subr.mxu0 0.0
    %2376 = vmatpush1.msra.mxu0 0.0
    %2377 = vmatprep.subr.mxu0 0.0
    %2378 = vmatpush1.msra.mxu0 0.0
    %2379 = vmatprep.subr.mxu0 0.0
    %2380 = vmatpush1.msra.mxu0 0.0
    %2381 = vmatprep.subr.mxu0 0.0
    %2382 = vmatpush1.msra.mxu0 0.0
    %2383 = vmatprep.subr.mxu0 0.0
    %2384 = vmatpush1.msra.mxu0 0.0
    %2385 = vmatprep.subr.mxu0 0.0
    %2386 = vmatpush1.msra.mxu0 0.0
    %2387 = vmatprep.subr.mxu0 0.0
    %2388 = vmatpush1.msra.mxu0 0.0
    %2389 = vmatprep.subr.mxu0 0.0
    %2390 = vmatpush1.msra.mxu0 0.0
    %2391 = vmatprep.subr.mxu0 0.0
    %2392 = vmatpush1.msra.mxu0 0.0
    %2393 = vmatprep.subr.mxu0 0.0
    %2394 = vmatpush1.msra.mxu0 0.0
    %2395 = vmatprep.subr.mxu0 0.0
    %2396 = vmatpush1.msra.mxu0 0.0
    %2397 = vmatprep.subr.mxu0 0.0
    %2398 = vmatpush1.msra.mxu0 0.0
    %2399 = vmatprep.subr.mxu0 0.0
    %2400 = vmatpush1.msra.mxu0 0.0
    %2401 = vmatprep.subr.mxu0 0.0
    %2402 = vmatpush1.msra.mxu0 0.0
    %2403 = vmatprep.subr.mxu0 0.0
    %2404 = vmatpush1.msra.mxu0 0.0
    %2405 = vmatprep.subr.mxu0 0.0
    %2406 = vmatpush1.msra.mxu0 0.0
    %2407 = vmatprep.subr.mxu0 0.0
    %2408 = vmatpush1.msra.mxu0 0.0
    %2409 = vmatprep.mubr.f32.mxu0 0.0
    %2410 = vmatmul.mubr.f32.gmra.mrb[0].mxu0 %v2343
    %v2411 = vpop.f32.mrb[0].mxu0
    %v2412 = vadd.f32 0.0, %v2411
    %v2413 = vpop.f32.mrb[0].mxu0
    %2414 = vdwg.mxu0
    %2416 = vrot.lane.b32.xlu0 %v2339, 32
    %v2417 = vpop.permute.xlu0 %2416
    %v2418 = vsel %vm102, %v2417, 0
    %2420 = vmatprep.subr.mxu0 0.0
    %2421 = vmatpush1.msra.mxu0 %v75
    %2422 = vmatprep.subr.mxu0 0.0
    %2423 = vmatpush1.msra.mxu0 %v76
    %2424 = vmatprep.subr.mxu0 0.0
    %2425 = vmatpush1.msra.mxu0 %v77
    %2426 = vmatprep.subr.mxu0 0.0
    %2427 = vmatpush1.msra.mxu0 %v78
    %2428 = vmatprep.subr.mxu0 0.0
    %2429 = vmatpush1.msra.mxu0 0.0
    %2430 = vmatprep.subr.mxu0 0.0
    %2431 = vmatpush1.msra.mxu0 0.0
    %2432 = vmatprep.subr.mxu0 0.0
    %2433 = vmatpush1.msra.mxu0 0.0
    %2434 = vmatprep.subr.mxu0 0.0
    %2435 = vmatpush1.msra.mxu0 0.0
    %2436 = vmatprep.subr.mxu0 0.0
    %2437 = vmatpush1.msra.mxu0 0.0
    %2438 = vmatprep.subr.mxu0 0.0
    %2439 = vmatpush1.msra.mxu0 0.0
    %2440 = vmatprep.subr.mxu0 0.0
    %2441 = vmatpush1.msra.mxu0 0.0
    %2442 = vmatprep.subr.mxu0 0.0
    %2443 = vmatpush1.msra.mxu0 0.0
    %2444 = vmatprep.subr.mxu0 0.0
    %2445 = vmatpush1.msra.mxu0 0.0
    %2446 = vmatprep.subr.mxu0 0.0
    %2447 = vmatpush1.msra.mxu0 0.0
    %2448 = vmatprep.subr.mxu0 0.0
    %2449 = vmatpush1.msra.mxu0 0.0
    %2450 = vmatprep.subr.mxu0 0.0
    %2451 = vmatpush1.msra.mxu0 0.0
    %2452 = vmatprep.subr.mxu0 0.0
    %2453 = vmatpush1.msra.mxu0 0.0
    %2454 = vmatprep.subr.mxu0 0.0
    %2455 = vmatpush1.msra.mxu0 0.0
    %2456 = vmatprep.subr.mxu0 0.0
    %2457 = vmatpush1.msra.mxu0 0.0
    %2458 = vmatprep.subr.mxu0 0.0
    %2459 = vmatpush1.msra.mxu0 0.0
    %2460 = vmatprep.subr.mxu0 0.0
    %2461 = vmatpush1.msra.mxu0 0.0
    %2462 = vmatprep.subr.mxu0 0.0
    %2463 = vmatpush1.msra.mxu0 0.0
    %2464 = vmatprep.subr.mxu0 0.0
    %2465 = vmatpush1.msra.mxu0 0.0
    %2466 = vmatprep.subr.mxu0 0.0
    %2467 = vmatpush1.msra.mxu0 0.0
    %2468 = vmatprep.subr.mxu0 0.0
    %2469 = vmatpush1.msra.mxu0 0.0
    %2470 = vmatprep.subr.mxu0 0.0
    %2471 = vmatpush1.msra.mxu0 0.0
    %2472 = vmatprep.subr.mxu0 0.0
    %2473 = vmatpush1.msra.mxu0 0.0
    %2474 = vmatprep.subr.mxu0 0.0
    %2475 = vmatpush1.msra.mxu0 0.0
    %2476 = vmatprep.subr.mxu0 0.0
    %2477 = vmatpush1.msra.mxu0 0.0
    %2478 = vmatprep.subr.mxu0 0.0
    %2479 = vmatpush1.msra.mxu0 0.0
    %2480 = vmatprep.subr.mxu0 0.0
    %2481 = vmatpush1.msra.mxu0 0.0
    %2482 = vmatprep.subr.mxu0 0.0
    %2483 = vmatpush1.msra.mxu0 0.0
    %2484 = vmatprep.mubr.f32.mxu0 0.0
    %2485 = vmatmul.mubr.f32.gmra.mrb[0].mxu0 %v2418
    %v2486 = vpop.f32.mrb[0].mxu0
    %v2487 = vadd.f32 %v2412, %v2486
    %v2488 = vpop.f32.mrb[0].mxu0
    %2489 = vdwg.mxu0
    %v2490 = vadd.f32 %v2487, %v99
    %v2491 = vxor.u32 %v2490, 2147483648
    %v2492 = vmul.f32 %v2491, 1.442695
    %v2493 = vpow.pop %v2492
    %v2494 = vadd.f32 %v2493, 1.0
    %v2495 = vrcp.pop %v2494
    %v2496 = vmul.f32 1.0, %v2495
    %v2497 = vtanh.pop %v2490
    %v2498 = vmul.f32 %v2496, %v2163
    %2500 = vrot.lane.b32.xlu0 %v2497, 64
    %v2501 = vpop.permute.xlu0 %2500
    %v2503 = vmul.f32 %v2496, %v2501
    %2505 = vrot.lane.b32.xlu0 %v2503, 32
    %v2506 = vpop.permute.xlu0 %2505
    %v2508 = vadd.f32 %v2498, %v2506
    %v2509 = vtanh.pop %v2508
    %2511 = vrot.lane.b32.xlu0 %v2509, 64
    %v2512 = vpop.permute.xlu0 %2511
    %v2514 = vmul.f32 %v2496, %v2512
    %s2515 = scalar_lea.vmem %s0, 14
    %v2516 = vld [vmem:[%s2515] sm:$0x3]
    %2517 = vmatprep.subr.mxu0 0.0
    %2518 = vmatpush1.msra.mxu0 %v79
    %2519 = vmatprep.subr.mxu0 0.0
    %2520 = vmatpush1.msra.mxu0 %v80
    %2521 = vmatprep.subr.mxu0 0.0
    %2522 = vmatpush1.msra.mxu0 %v81
    %2523 = vmatprep.subr.mxu0 0.0
    %2524 = vmatpush1.msra.mxu0 %v82
    %2525 = vmatprep.subr.mxu0 0.0
    %2526 = vmatpush1.msra.mxu0 0.0
    %2527 = vmatprep.subr.mxu0 0.0
    %2528 = vmatpush1.msra.mxu0 0.0
    %2529 = vmatprep.subr.mxu0 0.0
    %2530 = vmatpush1.msra.mxu0 0.0
    %2531 = vmatprep.subr.mxu0 0.0
    %2532 = vmatpush1.msra.mxu0 0.0
    %2533 = vmatprep.subr.mxu0 0.0
    %2534 = vmatpush1.msra.mxu0 0.0
    %2535 = vmatprep.subr.mxu0 0.0
    %2536 = vmatpush1.msra.mxu0 0.0
    %2537 = vmatprep.subr.mxu0 0.0
    %2538 = vmatpush1.msra.mxu0 0.0
    %2539 = vmatprep.subr.mxu0 0.0
    %2540 = vmatpush1.msra.mxu0 0.0
    %2541 = vmatprep.subr.mxu0 0.0
    %2542 = vmatpush1.msra.mxu0 0.0
    %2543 = vmatprep.subr.mxu0 0.0
    %2544 = vmatpush1.msra.mxu0 0.0
    %2545 = vmatprep.subr.mxu0 0.0
    %2546 = vmatpush1.msra.mxu0 0.0
    %2547 = vmatprep.subr.mxu0 0.0
    %2548 = vmatpush1.msra.mxu0 0.0
    %2549 = vmatprep.subr.mxu0 0.0
    %2550 = vmatpush1.msra.mxu0 0.0
    %2551 = vmatprep.subr.mxu0 0.0
    %2552 = vmatpush1.msra.mxu0 0.0
    %2553 = vmatprep.subr.mxu0 0.0
    %2554 = vmatpush1.msra.mxu0 0.0
    %2555 = vmatprep.subr.mxu0 0.0
    %2556 = vmatpush1.msra.mxu0 0.0
    %2557 = vmatprep.subr.mxu0 0.0
    %2558 = vmatpush1.msra.mxu0 0.0
    %2559 = vmatprep.subr.mxu0 0.0
    %2560 = vmatpush1.msra.mxu0 0.0
    %2561 = vmatprep.subr.mxu0 0.0
    %2562 = vmatpush1.msra.mxu0 0.0
    %2563 = vmatprep.subr.mxu0 0.0
    %2564 = vmatpush1.msra.mxu0 0.0
    %2565 = vmatprep.subr.mxu0 0.0
    %2566 = vmatpush1.msra.mxu0 0.0
    %2567 = vmatprep.subr.mxu0 0.0
    %2568 = vmatpush1.msra.mxu0 0.0
    %2569 = vmatprep.subr.mxu0 0.0
    %2570 = vmatpush1.msra.mxu0 0.0
    %2571 = vmatprep.subr.mxu0 0.0
    %2572 = vmatpush1.msra.mxu0 0.0
    %2573 = vmatprep.subr.mxu0 0.0
    %2574 = vmatpush1.msra.mxu0 0.0
    %2575 = vmatprep.subr.mxu0 0.0
    %2576 = vmatpush1.msra.mxu0 0.0
    %2577 = vmatprep.subr.mxu0 0.0
    %2578 = vmatpush1.msra.mxu0 0.0
    %2579 = vmatprep.subr.mxu0 0.0
    %2580 = vmatpush1.msra.mxu0 0.0
    %2581 = vmatprep.mubr.f32.mxu0 0.0
    %2582 = vmatmul.mubr.f32.gmra.mrb[0].mxu0 %v2418
    %v2583 = vpop.f32.mrb[0].mxu0
    %v2584 = vadd.f32 0.0, %v2583
    %v2585 = vpop.f32.mrb[0].mxu0
    %2586 = vdwg.mxu0
    %v2588 = vsel %vm176, %v2516, 0
    %2590 = vmatprep.subr.mxu0 0.0
    %2591 = vmatpush1.msra.mxu0 %v74
    %2592 = vmatprep.subr.mxu0 0.0
    %2593 = vmatpush1.msra.mxu0 0.0
    %2594 = vmatprep.subr.mxu0 0.0
    %2595 = vmatpush1.msra.mxu0 0.0
    %2596 = vmatprep.subr.mxu0 0.0
    %2597 = vmatpush1.msra.mxu0 0.0
    %2598 = vmatprep.subr.mxu0 0.0
    %2599 = vmatpush1.msra.mxu0 0.0
    %2600 = vmatprep.subr.mxu0 0.0
    %2601 = vmatpush1.msra.mxu0 0.0
    %2602 = vmatprep.subr.mxu0 0.0
    %2603 = vmatpush1.msra.mxu0 0.0
    %2604 = vmatprep.subr.mxu0 0.0
    %2605 = vmatpush1.msra.mxu0 0.0
    %2606 = vmatprep.subr.mxu0 0.0
    %2607 = vmatpush1.msra.mxu0 0.0
    %2608 = vmatprep.subr.mxu0 0.0
    %2609 = vmatpush1.msra.mxu0 0.0
    %2610 = vmatprep.subr.mxu0 0.0
    %2611 = vmatpush1.msra.mxu0 0.0
    %2612 = vmatprep.subr.mxu0 0.0
    %2613 = vmatpush1.msra.mxu0 0.0
    %2614 = vmatprep.subr.mxu0 0.0
    %2615 = vmatpush1.msra.mxu0 0.0
    %2616 = vmatprep.subr.mxu0 0.0
    %2617 = vmatpush1.msra.mxu0 0.0
    %2618 = vmatprep.subr.mxu0 0.0
    %2619 = vmatpush1.msra.mxu0 0.0
    %2620 = vmatprep.subr.mxu0 0.0
    %2621 = vmatpush1.msra.mxu0 0.0
    %2622 = vmatprep.subr.mxu0 0.0
    %2623 = vmatpush1.msra.mxu0 0.0
    %2624 = vmatprep.subr.mxu0 0.0
    %2625 = vmatpush1.msra.mxu0 0.0
    %2626 = vmatprep.subr.mxu0 0.0
    %2627 = vmatpush1.msra.mxu0 0.0
    %2628 = vmatprep.subr.mxu0 0.0
    %2629 = vmatpush1.msra.mxu0 0.0
    %2630 = vmatprep.subr.mxu0 0.0
    %2631 = vmatpush1.msra.mxu0 0.0
    %2632 = vmatprep.subr.mxu0 0.0
    %2633 = vmatpush1.msra.mxu0 0.0
    %2634 = vmatprep.subr.mxu0 0.0
    %2635 = vmatpush1.msra.mxu0 0.0
    %2636 = vmatprep.subr.mxu0 0.0
    %2637 = vmatpush1.msra.mxu0 0.0
    %2638 = vmatprep.subr.mxu0 0.0
    %2639 = vmatpush1.msra.mxu0 0.0
    %2640 = vmatprep.subr.mxu0 0.0
    %2641 = vmatpush1.msra.mxu0 0.0
    %2642 = vmatprep.subr.mxu0 0.0
    %2643 = vmatpush1.msra.mxu0 0.0
    %2644 = vmatprep.subr.mxu0 0.0
    %2645 = vmatpush1.msra.mxu0 0.0
    %2646 = vmatprep.subr.mxu0 0.0
    %2647 = vmatpush1.msra.mxu0 0.0
    %2648 = vmatprep.subr.mxu0 0.0
    %2649 = vmatpush1.msra.mxu0 0.0
    %2650 = vmatprep.subr.mxu0 0.0
    %2651 = vmatpush1.msra.mxu0 0.0
    %2652 = vmatprep.subr.mxu0 0.0
    %2653 = vmatpush1.msra.mxu0 0.0
    %2654 = vmatprep.mubr.f32.mxu0 0.0
    %2655 = vmatmul.mubr.f32.gmra.mrb[0].mxu0 %v2588
    %v2656 = vpop.f32.mrb[0].mxu0
    %v2657 = vadd.f32 %v2584, %v2656
    %v2658 = vpop.f32.mrb[0].mxu0
    %2659 = vdwg.mxu0
    %v2660 = vadd.f32 %v2657, %v92
    %v2661 = vxor.u32 %v2660, 2147483648
    %v2662 = vmul.f32 %v2661, 1.442695
    %v2663 = vpow.pop %v2662
    %v2664 = vadd.f32 %v2663, 1.0
    %v2665 = vrcp.pop %v2664
    %v2666 = vmul.f32 1.0, %v2665
    %v2667 = vtanh.pop %v2660
    %v2668 = vmul.f32 %v2666, %v2333
    %2670 = vrot.lane.b32.xlu0 %v2667, 64
    %v2671 = vpop.permute.xlu0 %2670
    %v2673 = vmul.f32 %v2666, %v2671
    %2675 = vrot.lane.b32.xlu0 %v2673, 32
    %v2676 = vpop.permute.xlu0 %2675
    %v2678 = vadd.f32 %v2668, %v2676
    %v2679 = vtanh.pop %v2678
    %2681 = vrot.lane.b32.xlu0 %v2679, 64
    %v2682 = vpop.permute.xlu0 %2681
    %v2684 = vmul.f32 %v2666, %v2682
    %2686 = vrot.lane.b32.xlu0 %v2514, 32
    %v2687 = vpop.permute.xlu0 %2686
    %v2688 = vsel %vm102, %v2687, 0
    %2690 = vmatprep.subr.mxu0 0.0
    %2691 = vmatpush1.msra.mxu0 %v83
    %2692 = vmatprep.subr.mxu0 0.0
    %2693 = vmatpush1.msra.mxu0 %v84
    %2694 = vmatprep.subr.mxu0 0.0
    %2695 = vmatpush1.msra.mxu0 %v85
    %2696 = vmatprep.subr.mxu0 0.0
    %2697 = vmatpush1.msra.mxu0 %v86
    %2698 = vmatprep.subr.mxu0 0.0
    %2699 = vmatpush1.msra.mxu0 0.0
    %2700 = vmatprep.subr.mxu0 0.0
    %2701 = vmatpush1.msra.mxu0 0.0
    %2702 = vmatprep.subr.mxu0 0.0
    %2703 = vmatpush1.msra.mxu0 0.0
    %2704 = vmatprep.subr.mxu0 0.0
    %2705 = vmatpush1.msra.mxu0 0.0
    %2706 = vmatprep.subr.mxu0 0.0
    %2707 = vmatpush1.msra.mxu0 0.0
    %2708 = vmatprep.subr.mxu0 0.0
    %2709 = vmatpush1.msra.mxu0 0.0
    %2710 = vmatprep.subr.mxu0 0.0
    %2711 = vmatpush1.msra.mxu0 0.0
    %2712 = vmatprep.subr.mxu0 0.0
    %2713 = vmatpush1.msra.mxu0 0.0
    %2714 = vmatprep.subr.mxu0 0.0
    %2715 = vmatpush1.msra.mxu0 0.0
    %2716 = vmatprep.subr.mxu0 0.0
    %2717 = vmatpush1.msra.mxu0 0.0
    %2718 = vmatprep.subr.mxu0 0.0
    %2719 = vmatpush1.msra.mxu0 0.0
    %2720 = vmatprep.subr.mxu0 0.0
    %2721 = vmatpush1.msra.mxu0 0.0
    %2722 = vmatprep.subr.mxu0 0.0
    %2723 = vmatpush1.msra.mxu0 0.0
    %2724 = vmatprep.subr.mxu0 0.0
    %2725 = vmatpush1.msra.mxu0 0.0
    %2726 = vmatprep.subr.mxu0 0.0
    %2727 = vmatpush1.msra.mxu0 0.0
    %2728 = vmatprep.subr.mxu0 0.0
    %2729 = vmatpush1.msra.mxu0 0.0
    %2730 = vmatprep.subr.mxu0 0.0
    %2731 = vmatpush1.msra.mxu0 0.0
    %2732 = vmatprep.subr.mxu0 0.0
    %2733 = vmatpush1.msra.mxu0 0.0
    %2734 = vmatprep.subr.mxu0 0.0
    %2735 = vmatpush1.msra.mxu0 0.0
    %2736 = vmatprep.subr.mxu0 0.0
    %2737 = vmatpush1.msra.mxu0 0.0
    %2738 = vmatprep.subr.mxu0 0.0
    %2739 = vmatpush1.msra.mxu0 0.0
    %2740 = vmatprep.subr.mxu0 0.0
    %2741 = vmatpush1.msra.mxu0 0.0
    %2742 = vmatprep.subr.mxu0 0.0
    %2743 = vmatpush1.msra.mxu0 0.0
    %2744 = vmatprep.subr.mxu0 0.0
    %2745 = vmatpush1.msra.mxu0 0.0
    %2746 = vmatprep.subr.mxu0 0.0
    %2747 = vmatpush1.msra.mxu0 0.0
    %2748 = vmatprep.subr.mxu0 0.0
    %2749 = vmatpush1.msra.mxu0 0.0
    %2750 = vmatprep.subr.mxu0 0.0
    %2751 = vmatpush1.msra.mxu0 0.0
    %2752 = vmatprep.subr.mxu0 0.0
    %2753 = vmatpush1.msra.mxu0 0.0
    %2754 = vmatprep.mubr.f32.mxu0 0.0
    %2755 = vmatmul.mubr.f32.gmra.mrb[0].mxu0 %v2688
    %v2756 = vpop.f32.mrb[0].mxu0
    %v2757 = vadd.f32 0.0, %v2756
    %v2758 = vpop.f32.mrb[0].mxu0
    %2759 = vdwg.mxu0
    %2761 = vrot.lane.b32.xlu0 %v2684, 32
    %v2762 = vpop.permute.xlu0 %2761
    %v2763 = vsel %vm102, %v2762, 0
    %2765 = vmatprep.subr.mxu0 0.0
    %2766 = vmatpush1.msra.mxu0 %v75
    %2767 = vmatprep.subr.mxu0 0.0
    %2768 = vmatpush1.msra.mxu0 %v76
    %2769 = vmatprep.subr.mxu0 0.0
    %2770 = vmatpush1.msra.mxu0 %v77
    %2771 = vmatprep.subr.mxu0 0.0
    %2772 = vmatpush1.msra.mxu0 %v78
    %2773 = vmatprep.subr.mxu0 0.0
    %2774 = vmatpush1.msra.mxu0 0.0
    %2775 = vmatprep.subr.mxu0 0.0
    %2776 = vmatpush1.msra.mxu0 0.0
    %2777 = vmatprep.subr.mxu0 0.0
    %2778 = vmatpush1.msra.mxu0 0.0
    %2779 = vmatprep.subr.mxu0 0.0
    %2780 = vmatpush1.msra.mxu0 0.0
    %2781 = vmatprep.subr.mxu0 0.0
    %2782 = vmatpush1.msra.mxu0 0.0
    %2783 = vmatprep.subr.mxu0 0.0
    %2784 = vmatpush1.msra.mxu0 0.0
    %2785 = vmatprep.subr.mxu0 0.0
    %2786 = vmatpush1.msra.mxu0 0.0
    %2787 = vmatprep.subr.mxu0 0.0
    %2788 = vmatpush1.msra.mxu0 0.0
    %2789 = vmatprep.subr.mxu0 0.0
    %2790 = vmatpush1.msra.mxu0 0.0
    %2791 = vmatprep.subr.mxu0 0.0
    %2792 = vmatpush1.msra.mxu0 0.0
    %2793 = vmatprep.subr.mxu0 0.0
    %2794 = vmatpush1.msra.mxu0 0.0
    %2795 = vmatprep.subr.mxu0 0.0
    %2796 = vmatpush1.msra.mxu0 0.0
    %2797 = vmatprep.subr.mxu0 0.0
    %2798 = vmatpush1.msra.mxu0 0.0
    %2799 = vmatprep.subr.mxu0 0.0
    %2800 = vmatpush1.msra.mxu0 0.0
    %2801 = vmatprep.subr.mxu0 0.0
    %2802 = vmatpush1.msra.mxu0 0.0
    %2803 = vmatprep.subr.mxu0 0.0
    %2804 = vmatpush1.msra.mxu0 0.0
    %2805 = vmatprep.subr.mxu0 0.0
    %2806 = vmatpush1.msra.mxu0 0.0
    %2807 = vmatprep.subr.mxu0 0.0
    %2808 = vmatpush1.msra.mxu0 0.0
    %2809 = vmatprep.subr.mxu0 0.0
    %2810 = vmatpush1.msra.mxu0 0.0
    %2811 = vmatprep.subr.mxu0 0.0
    %2812 = vmatpush1.msra.mxu0 0.0
    %2813 = vmatprep.subr.mxu0 0.0
    %2814 = vmatpush1.msra.mxu0 0.0
    %2815 = vmatprep.subr.mxu0 0.0
    %2816 = vmatpush1.msra.mxu0 0.0
    %2817 = vmatprep.subr.mxu0 0.0
    %2818 = vmatpush1.msra.mxu0 0.0
    %2819 = vmatprep.subr.mxu0 0.0
    %2820 = vmatpush1.msra.mxu0 0.0
    %2821 = vmatprep.subr.mxu0 0.0
    %2822 = vmatpush1.msra.mxu0 0.0
    %2823 = vmatprep.subr.mxu0 0.0
    %2824 = vmatpush1.msra.mxu0 0.0
    %2825 = vmatprep.subr.mxu0 0.0
    %2826 = vmatpush1.msra.mxu0 0.0
    %2827 = vmatprep.subr.mxu0 0.0
    %2828 = vmatpush1.msra.mxu0 0.0
    %2829 = vmatprep.mubr.f32.mxu0 0.0
    %2830 = vmatmul.mubr.f32.gmra.mrb[0].mxu0 %v2763
    %v2831 = vpop.f32.mrb[0].mxu0
    %v2832 = vadd.f32 %v2757, %v2831
    %v2833 = vpop.f32.mrb[0].mxu0
    %2834 = vdwg.mxu0
    %v2835 = vadd.f32 %v2832, %v99
    %v2836 = vxor.u32 %v2835, 2147483648
    %v2837 = vmul.f32 %v2836, 1.442695
    %v2838 = vpow.pop %v2837
    %v2839 = vadd.f32 %v2838, 1.0
    %v2840 = vrcp.pop %v2839
    %v2841 = vmul.f32 1.0, %v2840
    %v2842 = vtanh.pop %v2835
    %v2843 = vmul.f32 %v2841, %v2508
    %2845 = vrot.lane.b32.xlu0 %v2842, 64
    %v2846 = vpop.permute.xlu0 %2845
    %v2848 = vmul.f32 %v2841, %v2846
    %2850 = vrot.lane.b32.xlu0 %v2848, 32
    %v2851 = vpop.permute.xlu0 %2850
    %v2853 = vadd.f32 %v2843, %v2851
    %v2854 = vtanh.pop %v2853
    %2856 = vrot.lane.b32.xlu0 %v2854, 64
    %v2857 = vpop.permute.xlu0 %2856
    %v2859 = vmul.f32 %v2841, %v2857
    %v2860 = vld [vmem:[#allocation7] sm:$0xff]
    %v2861 = vld [vmem:[#allocation7 + $0x8] sm:$0xff]
    %v2862 = vld [vmem:[#allocation7 + $0x10] sm:$0xff]
    %v2863 = vld [vmem:[#allocation7 + $0x18] sm:$0xff]
    %v2864 = vld [vmem:[%s8] sm:$0x1]
    %v2866 = vlaneseq
    %v2867 = vshrl.u32 %v2866, 7
    %v2868 = vsub.s32 0, %v2867
    %v2869 = vrot.slane %v2864, %v2868
    %2872 = vrot.lane.b32.xlu0 %v2859, 32
    %v2873 = vpop.permute.xlu0 %2872
    %v2874 = vsel %vm102, %v2873, 0
    %2876 = vmatprep.subr.mxu0 0.0
    %2877 = vmatpush1.msra.mxu0 %v2860
    %2878 = vmatprep.subr.mxu0 0.0
    %2879 = vmatpush1.msra.mxu0 %v2861
    %2880 = vmatprep.subr.mxu0 0.0
    %2881 = vmatpush1.msra.mxu0 %v2862
    %2882 = vmatprep.subr.mxu0 0.0
    %2883 = vmatpush1.msra.mxu0 %v2863
    %2884 = vmatprep.subr.mxu0 0.0
    %2885 = vmatpush1.msra.mxu0 0.0
    %2886 = vmatprep.subr.mxu0 0.0
    %2887 = vmatpush1.msra.mxu0 0.0
    %2888 = vmatprep.subr.mxu0 0.0
    %2889 = vmatpush1.msra.mxu0 0.0
    %2890 = vmatprep.subr.mxu0 0.0
    %2891 = vmatpush1.msra.mxu0 0.0
    %2892 = vmatprep.subr.mxu0 0.0
    %2893 = vmatpush1.msra.mxu0 0.0
    %2894 = vmatprep.subr.mxu0 0.0
    %2895 = vmatpush1.msra.mxu0 0.0
    %2896 = vmatprep.subr.mxu0 0.0
    %2897 = vmatpush1.msra.mxu0 0.0
    %2898 = vmatprep.subr.mxu0 0.0
    %2899 = vmatpush1.msra.mxu0 0.0
    %2900 = vmatprep.subr.mxu0 0.0
    %2901 = vmatpush1.msra.mxu0 0.0
    %2902 = vmatprep.subr.mxu0 0.0
    %2903 = vmatpush1.msra.mxu0 0.0
    %2904 = vmatprep.subr.mxu0 0.0
    %2905 = vmatpush1.msra.mxu0 0.0
    %2906 = vmatprep.subr.mxu0 0.0
    %2907 = vmatpush1.msra.mxu0 0.0
    %2908 = vmatprep.subr.mxu0 0.0
    %2909 = vmatpush1.msra.mxu0 0.0
    %2910 = vmatprep.subr.mxu0 0.0
    %2911 = vmatpush1.msra.mxu0 0.0
    %2912 = vmatprep.subr.mxu0 0.0
    %2913 = vmatpush1.msra.mxu0 0.0
    %2914 = vmatprep.subr.mxu0 0.0
    %2915 = vmatpush1.msra.mxu0 0.0
    %2916 = vmatprep.subr.mxu0 0.0
    %2917 = vmatpush1.msra.mxu0 0.0
    %2918 = vmatprep.subr.mxu0 0.0
    %2919 = vmatpush1.msra.mxu0 0.0
    %2920 = vmatprep.subr.mxu0 0.0
    %2921 = vmatpush1.msra.mxu0 0.0
    %2922 = vmatprep.subr.mxu0 0.0
    %2923 = vmatpush1.msra.mxu0 0.0
    %2924 = vmatprep.subr.mxu0 0.0
    %2925 = vmatpush1.msra.mxu0 0.0
    %2926 = vmatprep.subr.mxu0 0.0
    %2927 = vmatpush1.msra.mxu0 0.0
    %2928 = vmatprep.subr.mxu0 0.0
    %2929 = vmatpush1.msra.mxu0 0.0
    %2930 = vmatprep.subr.mxu0 0.0
    %2931 = vmatpush1.msra.mxu0 0.0
    %2932 = vmatprep.subr.mxu0 0.0
    %2933 = vmatpush1.msra.mxu0 0.0
    %2934 = vmatprep.subr.mxu0 0.0
    %2935 = vmatpush1.msra.mxu0 0.0
    %2936 = vmatprep.subr.mxu0 0.0
    %2937 = vmatpush1.msra.mxu0 0.0
    %2938 = vmatprep.subr.mxu0 0.0
    %2939 = vmatpush1.msra.mxu0 0.0
    %2940 = vmatprep.mubr.f32.mxu0 0.0
    %2941 = vmatmul.mubr.f32.gmra.mrb[0].mxu0 %v2874
    %v2942 = vpop.f32.mrb[0].mxu0
    %v2943 = vadd.f32 %v2869, %v2942
    %v2944 = vpop.f32.mrb[0].mxu0
    %2945 = vdwg.mxu0
    %2946 = vst [vmem:[#allocation8] sm:$0x3] %v2943
    // Predicated region
    $region50: #{multilayer_lstm_forward.1} parent=1 // pred_check
      _
    $region51: #{multilayer_lstm_forward.1} parent=1 // pred_check_branch
      %2948 = sbr.rel (0) target = $region53
    $region52: #{multilayer_lstm_forward.1} parent=1 // pred_region
      %s2950 = ssub.s32 32, 32
      %2951 = vsyncadd [#allocation4], %s2950
      %s2953 = sshll.u32 [#allocation8], 4
      %s2954 = int_to_ptr.vmem [resolvable:$true] %s2953
      %2956 = dma.vmem_to_hbm [thread:$0]  %s2954, 32, %s9, [#allocation4]
    $region53: #{multilayer_lstm_forward.1} parent=1 // pred_fallthru
      _
    // Predicated region
    $region54: #{multilayer_lstm_forward.1} parent=1 // pred_check
      _
    $region55: #{multilayer_lstm_forward.1} parent=1 // pred_check_branch
      %2958 = sbr.rel (0) target = $region57
    $region56: #{multilayer_lstm_forward.1} parent=1 // pred_region
      %2959 = dma.done [#allocation4], 32
    $region57: #{multilayer_lstm_forward.1} parent=1 // pred_fallthru
      _
    %2960 = vsyncpa [#allocation3], 1
    %2961 = vsyncpa [#allocation6], 1
    %2962 = vsyncpa [#allocation4], 1

</llo_original>
